<compile_context>
chip_gen: v7x
topology: tpu7x:2x2x1
jax: 0.10.0
libtpu: 0.0.40
codegen_flags: <defaults>
</compile_context>

<pallas_src>
import functools

import jax
import jax.numpy as jnp
from jax.experimental import pallas as pl
from jax.experimental.pallas import tpu as pltpu

LEAKY_SLOPE = 0.2


def _lrelu(v):
    return jnp.where(v > 0, v, LEAKY_SLOPE * v)


def _lin(v, w, b):
    # bf16 MXU inputs, f32 accumulation, f32 bias add (elementwise stays f32).
    return jnp.dot(v.astype(w.dtype), w, preferred_element_type=jnp.float32) + b


# -----------------------------------------------------------------------------
# Kernel: one grid step computes the full forward for one batch element.
# -----------------------------------------------------------------------------
def modulated_stack_kernel(
    pos_ref, lat_ref,
    w0_ref, b0_ref, wi_ref, bi_ref,          # initial stack
    fw_ref, fb_ref,                          # per-layer forward branches [L,3,...]
    cw0_ref, cw_ref, cb_ref,                 # fused conditioning (dense first layer)
    hw0_ref, hw_ref, hb_ref, how_ref, hob_ref,   # fused mag/phase heads
    out_ref,                                 # [1, T, 2F]  (mag | phase)
):
    C = lat_ref.shape[-1]
    L = fw_ref.shape[0]

    # ---- initial = LinearOutputStack(C, 1, in_channels=33) -----------------
    x = _lrelu(_lin(pos_ref[...], w0_ref[...], b0_ref[...]))    # Linear(33,C)+act
    x = _lrelu(_lin(x, wi_ref[0], bi_ref[0]))                   # Linear(C,C)+act
    x = _lin(x, wi_ref[1], bi_ref[1])                           # Linear(C,C)   [T,C]

    # ---- all 2L conditioning branches fused (dense first layer) ------------
    lat = lat_ref[0]                                             # [1, C]
    cond = _lrelu(_lin(lat, cw0_ref[...], cb_ref[0]))            # [1, 2L*C]
    cond = _lrelu(_lin(cond, cw_ref[0], cb_ref[1]))
    cond = _lin(cond, cw_ref[1], cb_ref[2])                      # [1, 2L*C]

    # ---- ModulatedLayer x L :  x = f(x) * sigmoid(w(cond)) + b(cond) --------
    for l in range(L):
        h = _lrelu(_lin(x, fw_ref[l, 0], fb_ref[l, 0]))
        h = _lrelu(_lin(h, fw_ref[l, 1], fb_ref[l, 1]))
        h = _lin(h, fw_ref[l, 2], fb_ref[l, 2])                  # [T, C]

        w_l = cond[:, (2 * l) * C:(2 * l + 1) * C]               # [1, C] weight branch
        b_l = cond[:, (2 * l + 1) * C:(2 * l + 2) * C]           # [1, C] bias branch
        x = h * jax.nn.sigmoid(w_l) + b_l                        # broadcast -> [T, C]

    # ---- fused mag/phase heads (lane-dense 2F output) -----------------------
    h = _lrelu(_lin(x, hw0_ref[...], hb_ref[0]))                 # dense [C,2C]
    h = _lrelu(_lin(h, hw_ref[0], hb_ref[1]))                    # block-diag [2C,2C]
    h = _lrelu(_lin(h, hw_ref[1], hb_ref[2]))
    out = _lin(h, how_ref[...], hob_ref[...])                    # [T, 2F]

    out_ref[0] = out.astype(out_ref.dtype)


# -----------------------------------------------------------------------------
# Parameter construction / fusion (plain JAX, hoisted out of the hot path).
# -----------------------------------------------------------------------------
def pos_encoded(time, n_freqs):
    pos = jnp.linspace(-1.0, 1.0, time, dtype=jnp.float32)[:, None]
    freqs = (2.0 ** jnp.arange(n_freqs, dtype=jnp.float32))[None, :] * jnp.pi
    return jnp.concatenate([pos, jnp.sin(pos * freqs), jnp.cos(pos * freqs)], -1)


def init_params(key, channels, layers, freq_bins, in_feats=33):
    n_linear = 3 + 9 * layers + 8
    keys = list(jax.random.split(key, 2 * n_linear))
    it = iter(keys)

    def linear(in_dim, out_dim):
        k1, k2 = next(it), next(it)
        bound = 1.0 / jnp.sqrt(jnp.float32(in_dim))
        w = jax.random.uniform(k1, (in_dim, out_dim), jnp.float32, -bound, bound)
        b = jax.random.uniform(k2, (out_dim,), jnp.float32, -bound, bound)
        return w, b[None, :]                            # bias kept 2-D [1, out]

    C, F = channels, freq_bins

    w0, b0 = linear(in_feats, C)
    wi, bi = zip(*[linear(C, C) for _ in range(2)])
    wi, bi = jnp.stack(wi), jnp.stack(bi)               # [2,C,C], [2,1,C]

    def branch():                                       # 3 C->C linears
        ws, bs = zip(*[linear(C, C) for _ in range(3)])
        return jnp.stack(ws), jnp.stack(bs)             # [3,C,C], [3,1,C]

    fw, fb, ww, wwb, bw, bwb = [], [], [], [], [], []
    for _ in range(layers):
        a, b_ = branch(); fw.append(a); fb.append(b_)
        a, b_ = branch(); ww.append(a); wwb.append(b_)
        a, b_ = branch(); bw.append(a); bwb.append(b_)
    fw, fb = jnp.stack(fw), jnp.stack(fb)               # [L,3,C,C], [L,3,1,C]
    ww, wwb = jnp.stack(ww), jnp.stack(wwb)
    bw, bwb = jnp.stack(bw), jnp.stack(bwb)

    mw, mb = branch()
    mwo, mbo = linear(C, F)
    pw, pb = branch()
    pwo, pbo = linear(C, F)

    return (w0, b0, wi, bi, fw, fb, ww, wwb, bw, bwb,
            mw, mb, mwo, mbo, pw, pb, pwo, pbo)


def _block_diag(blocks):
    # blocks: [G, Ci, Co] -> [G*Ci, G*Co] with blocks on the diagonal.
    G, Ci, Co = blocks.shape
    out = jnp.zeros((G * Ci, G * Co), blocks.dtype)
    for g in range(G):
        out = out.at[g * Ci:(g + 1) * Ci, g * Co:(g + 1) * Co].set(blocks[g])
    return out


def fuse_params(params, mxu_dtype=jnp.bfloat16):
    (w0, b0, wi, bi, fw, fb, ww, wwb, bw, bwb,
     mw, mb, mwo, mbo, pw, pb, pwo, pbo) = params
    L, _, C, _ = fw.shape
    F = mwo.shape[1]
    G = 2 * L

    # conditioning: branch order g = 2l (weight), 2l+1 (bias)
    cond_w = jnp.stack([ww, bw], axis=1).reshape(G, 3, C, C)
    cond_b = jnp.stack([wwb, bwb], axis=1).reshape(G, 3, 1, C)
    # dense first layer: lat @ hstack_g(W0_g) == concat_g(lat @ W0_g)
    cw0 = jnp.transpose(cond_w[:, 0], (1, 0, 2)).reshape(C, G * C)        # [C, G*C]
    cw = jnp.stack([_block_diag(cond_w[:, k]) for k in (1, 2)])           # [2,GC,GC]
    cb = jnp.stack([cond_b[:, k].reshape(1, G * C) for k in range(3)])    # [3,1,GC]

    # heads: block 0 = mag, block 1 = phase
    hw0 = jnp.concatenate([mw[0], pw[0]], axis=-1)                        # [C, 2C]
    hw = jnp.stack([_block_diag(jnp.stack([mw[k], pw[k]])) for k in (1, 2)])
    hb = jnp.stack([jnp.concatenate([mb[k], pb[k]], axis=-1) for k in range(3)])
    how = jnp.zeros((2 * C, 2 * F), jnp.float32)
    how = how.at[:C, :F].set(mwo).at[C:, F:].set(pwo)                     # [2C,2F]
    hob = jnp.concatenate([mbo, pbo], axis=-1)                            # [1,2F]

    cast = lambda a: a.astype(mxu_dtype)
    # weights -> bf16 (MXU operands); biases stay f32 (elementwise path).
    return (cast(w0), b0, cast(wi), bi, cast(fw), fb,
            cast(cw0), cast(cw), cb, cast(hw0), cast(hw), hb, cast(how), hob)


def prepare(params, *, time=128, n_freqs=16):
    """Hoisted prologue: run once, reuse for every forward call."""
    return pos_encoded(time, n_freqs), fuse_params(params)


# -----------------------------------------------------------------------------
# Wrapper
# -----------------------------------------------------------------------------
@jax.jit
def modulated_stack(latent, pos, fused):
    B, C = latent.shape
    T = pos.shape[0]
    F2 = fused[-2].shape[1]                              # how: [2C, 2F]
    lat3 = latent.astype(jnp.float32)[:, None, :]        # [B, 1, C]

    def full_spec(a):
        return pl.BlockSpec(a.shape, lambda b, _n=a.ndim: (0,) * _n)

    in_specs = ([full_spec(pos),
                 pl.BlockSpec((1, 1, C), lambda b: (b, 0, 0))]
                + [full_spec(a) for a in fused])
    out_spec = pl.BlockSpec((1, T, F2), lambda b: (b, 0, 0))

    out_flat = pl.pallas_call(
        modulated_stack_kernel,
        out_shape=jax.ShapeDtypeStruct((B, T, F2), jnp.float32),
        grid_spec=pltpu.PrefetchScalarGridSpec(
            num_scalar_prefetch=0,
            grid=(B,),
            in_specs=in_specs,
            out_specs=out_spec,
        ),
        compiler_params=pltpu.CompilerParams(
            dimension_semantics=("parallel",)),
    )(pos, lat3, *fused)

    # [B, T, 2F] -> [B, T, 2, F] -> [B, T, F, 2]  (mag, phase in last dim),
    # exactly torch.cat([mag[..., None], phase[..., None]], dim=-1).
    F = F2 // 2
    return jnp.swapaxes(out_flat.reshape(B, T, 2, F), -1, -2)


if __name__ == "__main__":
    B, C, LAYERS, FREQ_BINS = 2, 32, 2, 64
    TIME, N_FREQS = 128, 16   # hard-coded in ModulatedStack.forward (128, 16)

    key = jax.random.PRNGKey(0)
    pkey, lkey = jax.random.split(key)
    params = init_params(pkey, C, LAYERS, FREQ_BINS)
    latent = jax.random.normal(lkey, (B, C), jnp.float32)

    # Prologue (pos encoding + weight fusion) hoisted out of the hot path.
    pos, fused = prepare(params, time=TIME, n_freqs=N_FREQS)
    pos, fused = jax.block_until_ready((pos, fused))

    out = modulated_stack(latent, pos, fused)
    out = jax.block_until_ready(out)
    assert out.shape == (B, TIME, FREQ_BINS, 2), out.shape
    assert out.dtype == jnp.float32
    print("KERNEL_OK")
</pallas_src>

<mosaic_0001>
module attributes {stable_mosaic.version = 11 : i64} {
  func.func @modulated_stack_kernel(%arg0: i32, %arg1: memref<128x33xf32, #tpu.memory_space<vmem>>, %arg2: memref<1x1x32xf32, #tpu.memory_space<vmem>>, %arg3: memref<33x32xbf16, #tpu.memory_space<vmem>>, %arg4: memref<1x32xf32, #tpu.memory_space<vmem>>, %arg5: memref<2x32x32xbf16, #tpu.memory_space<vmem>>, %arg6: memref<2x1x32xf32, #tpu.memory_space<vmem>>, %arg7: memref<2x3x32x32xbf16, #tpu.memory_space<vmem>>, %arg8: memref<2x3x1x32xf32, #tpu.memory_space<vmem>>, %arg9: memref<32x128xbf16, #tpu.memory_space<vmem>>, %arg10: memref<2x128x128xbf16, #tpu.memory_space<vmem>>, %arg11: memref<3x1x128xf32, #tpu.memory_space<vmem>>, %arg12: memref<32x64xbf16, #tpu.memory_space<vmem>>, %arg13: memref<2x64x64xbf16, #tpu.memory_space<vmem>>, %arg14: memref<3x1x64xf32, #tpu.memory_space<vmem>>, %arg15: memref<64x128xbf16, #tpu.memory_space<vmem>>, %arg16: memref<1x128xf32, #tpu.memory_space<vmem>>, %arg17: memref<1x128x128xf32, #tpu.memory_space<vmem>>) attributes {dimension_semantics = [#tpu.dimension_semantics<parallel>], iteration_bounds = array<i64: 2>, scalar_prefetch = 0 : i64, scratch_operands = 0 : i64, tpu.core_type = #tpu.core_type<tc>, window_params = [{pipeline_mode = #tpu.pipeline_mode<synchronous>, transform_indices = @transform_0, window_bounds = array<i64: 128, 33>}, {transform_indices = @transform_1, window_bounds = array<i64: 1, 1, 32>}, {pipeline_mode = #tpu.pipeline_mode<synchronous>, transform_indices = @transform_2, window_bounds = array<i64: 33, 32>}, {pipeline_mode = #tpu.pipeline_mode<synchronous>, transform_indices = @transform_3, window_bounds = array<i64: 1, 32>}, {pipeline_mode = #tpu.pipeline_mode<synchronous>, transform_indices = @transform_4, window_bounds = array<i64: 2, 32, 32>}, {pipeline_mode = #tpu.pipeline_mode<synchronous>, transform_indices = @transform_5, window_bounds = array<i64: 2, 1, 32>}, {pipeline_mode = #tpu.pipeline_mode<synchronous>, transform_indices = @transform_6, window_bounds = array<i64: 2, 3, 32, 32>}, {pipeline_mode = #tpu.pipeline_mode<synchronous>, transform_indices = @transform_7, window_bounds = array<i64: 2, 3, 1, 32>}, {pipeline_mode = #tpu.pipeline_mode<synchronous>, transform_indices = @transform_8, window_bounds = array<i64: 32, 128>}, {pipeline_mode = #tpu.pipeline_mode<synchronous>, transform_indices = @transform_9, window_bounds = array<i64: 2, 128, 128>}, {pipeline_mode = #tpu.pipeline_mode<synchronous>, transform_indices = @transform_10, window_bounds = array<i64: 3, 1, 128>}, {pipeline_mode = #tpu.pipeline_mode<synchronous>, transform_indices = @transform_11, window_bounds = array<i64: 32, 64>}, {pipeline_mode = #tpu.pipeline_mode<synchronous>, transform_indices = @transform_12, window_bounds = array<i64: 2, 64, 64>}, {pipeline_mode = #tpu.pipeline_mode<synchronous>, transform_indices = @transform_13, window_bounds = array<i64: 3, 1, 64>}, {pipeline_mode = #tpu.pipeline_mode<synchronous>, transform_indices = @transform_14, window_bounds = array<i64: 64, 128>}, {pipeline_mode = #tpu.pipeline_mode<synchronous>, transform_indices = @transform_15, window_bounds = array<i64: 1, 128>}, {transform_indices = @transform_16, window_bounds = array<i64: 1, 128, 128>}]} {
    %c0 = arith.constant 0 : index
    %c0_0 = arith.constant 0 : index
    %0 = vector.load %arg1[%c0, %c0_0] : memref<128x33xf32, #tpu.memory_space<vmem>>, vector<128x33xf32>
    %c0_1 = arith.constant 0 : index
    %c0_2 = arith.constant 0 : index
    %1 = vector.load %arg3[%c0_1, %c0_2] : memref<33x32xbf16, #tpu.memory_space<vmem>>, vector<33x32xbf16>
    %c0_3 = arith.constant 0 : index
    %c0_4 = arith.constant 0 : index
    %2 = vector.load %arg4[%c0_3, %c0_4] : memref<1x32xf32, #tpu.memory_space<vmem>>, vector<1x32xf32>
    %3 = arith.truncf %0 : vector<128x33xf32> to vector<128x33xbf16>
    %cst = arith.constant dense<0.000000e+00> : vector<128x32xf32>
    %4 = tpu.matmul %3, %1, %cst {dimension_numbers = #tpu.dot_dimension_numbers<[1], [0], [0], [1], [0, 0, 1, 1], [], []>} : vector<128x33xbf16>, vector<33x32xbf16>, vector<128x32xf32> -> vector<128x32xf32>
    %5 = vector.broadcast %2 : vector<1x32xf32> to vector<128x32xf32>
    %6 = arith.addf %4, %5 : vector<128x32xf32>
    %cst_5 = arith.constant 0.000000e+00 : f32
    %7 = vector.broadcast %cst_5 : f32 to vector<128x32xf32>
    %8 = arith.cmpf ogt, %6, %7 : vector<128x32xf32>
    %cst_6 = arith.constant 2.000000e-01 : f32
    %9 = vector.broadcast %cst_6 : f32 to vector<128x32xf32>
    %10 = arith.mulf %9, %6 : vector<128x32xf32>
    %11 = arith.select %8, %6, %10 : vector<128x32xi1>, vector<128x32xf32>
    %c0_7 = arith.constant 0 : index
    %c0_8 = arith.constant 0 : index
    %c0_9 = arith.constant 0 : index
    %12 = vector.load %arg5[%c0_7, %c0_8, %c0_9] : memref<2x32x32xbf16, #tpu.memory_space<vmem>>, vector<1x32x32xbf16>
    %13 = vector.shape_cast %12 : vector<1x32x32xbf16> to vector<32x32xbf16>
    %c0_10 = arith.constant 0 : index
    %c0_11 = arith.constant 0 : index
    %c0_12 = arith.constant 0 : index
    %14 = vector.load %arg6[%c0_10, %c0_11, %c0_12] : memref<2x1x32xf32, #tpu.memory_space<vmem>>, vector<1x1x32xf32>
    %15 = vector.shape_cast %14 : vector<1x1x32xf32> to vector<1x32xf32>
    %16 = arith.truncf %11 : vector<128x32xf32> to vector<128x32xbf16>
    %cst_13 = arith.constant dense<0.000000e+00> : vector<128x32xf32>
    %17 = tpu.matmul %16, %13, %cst_13 {dimension_numbers = #tpu.dot_dimension_numbers<[1], [0], [0], [1], [0, 0, 1, 1], [], []>} : vector<128x32xbf16>, vector<32x32xbf16>, vector<128x32xf32> -> vector<128x32xf32>
    %18 = vector.broadcast %15 : vector<1x32xf32> to vector<128x32xf32>
    %19 = arith.addf %17, %18 : vector<128x32xf32>
    %cst_14 = arith.constant 0.000000e+00 : f32
    %20 = vector.broadcast %cst_14 : f32 to vector<128x32xf32>
    %21 = arith.cmpf ogt, %19, %20 : vector<128x32xf32>
    %cst_15 = arith.constant 2.000000e-01 : f32
    %22 = vector.broadcast %cst_15 : f32 to vector<128x32xf32>
    %23 = arith.mulf %22, %19 : vector<128x32xf32>
    %24 = arith.select %21, %19, %23 : vector<128x32xi1>, vector<128x32xf32>
    %c1 = arith.constant 1 : index
    %c0_16 = arith.constant 0 : index
    %c0_17 = arith.constant 0 : index
    %25 = vector.load %arg5[%c1, %c0_16, %c0_17] : memref<2x32x32xbf16, #tpu.memory_space<vmem>>, vector<1x32x32xbf16>
    %26 = vector.shape_cast %25 : vector<1x32x32xbf16> to vector<32x32xbf16>
    %c1_18 = arith.constant 1 : index
    %c0_19 = arith.constant 0 : index
    %c0_20 = arith.constant 0 : index
    %27 = vector.load %arg6[%c1_18, %c0_19, %c0_20] : memref<2x1x32xf32, #tpu.memory_space<vmem>>, vector<1x1x32xf32>
    %28 = vector.shape_cast %27 : vector<1x1x32xf32> to vector<1x32xf32>
    %29 = arith.truncf %24 : vector<128x32xf32> to vector<128x32xbf16>
    %cst_21 = arith.constant dense<0.000000e+00> : vector<128x32xf32>
    %30 = tpu.matmul %29, %26, %cst_21 {dimension_numbers = #tpu.dot_dimension_numbers<[1], [0], [0], [1], [0, 0, 1, 1], [], []>} : vector<128x32xbf16>, vector<32x32xbf16>, vector<128x32xf32> -> vector<128x32xf32>
    %31 = vector.broadcast %28 : vector<1x32xf32> to vector<128x32xf32>
    %32 = arith.addf %30, %31 : vector<128x32xf32>
    %c0_22 = arith.constant 0 : index
    %c0_23 = arith.constant 0 : index
    %c0_24 = arith.constant 0 : index
    %33 = vector.load %arg2[%c0_22, %c0_23, %c0_24] : memref<1x1x32xf32, #tpu.memory_space<vmem>>, vector<1x1x32xf32>
    %34 = vector.shape_cast %33 : vector<1x1x32xf32> to vector<1x32xf32>
    %c0_25 = arith.constant 0 : index
    %c0_26 = arith.constant 0 : index
    %35 = vector.load %arg9[%c0_25, %c0_26] : memref<32x128xbf16, #tpu.memory_space<vmem>>, vector<32x128xbf16>
    %c0_27 = arith.constant 0 : index
    %c0_28 = arith.constant 0 : index
    %c0_29 = arith.constant 0 : index
    %36 = vector.load %arg11[%c0_27, %c0_28, %c0_29] : memref<3x1x128xf32, #tpu.memory_space<vmem>>, vector<1x1x128xf32>
    %37 = vector.shape_cast %36 : vector<1x1x128xf32> to vector<1x128xf32>
    %38 = arith.truncf %34 : vector<1x32xf32> to vector<1x32xbf16>
    %cst_30 = arith.constant dense<0.000000e+00> : vector<1x128xf32>
    %39 = tpu.matmul %38, %35, %cst_30 {dimension_numbers = #tpu.dot_dimension_numbers<[1], [0], [0], [1], [0, 0, 1, 1], [], []>} : vector<1x32xbf16>, vector<32x128xbf16>, vector<1x128xf32> -> vector<1x128xf32>
    %40 = arith.addf %39, %37 : vector<1x128xf32>
    %cst_31 = arith.constant 0.000000e+00 : f32
    %41 = vector.broadcast %cst_31 : f32 to vector<1x128xf32>
    %42 = arith.cmpf ogt, %40, %41 : vector<1x128xf32>
    %cst_32 = arith.constant 2.000000e-01 : f32
    %43 = vector.broadcast %cst_32 : f32 to vector<1x128xf32>
    %44 = arith.mulf %43, %40 : vector<1x128xf32>
    %45 = arith.select %42, %40, %44 : vector<1x128xi1>, vector<1x128xf32>
    %c0_33 = arith.constant 0 : index
    %c0_34 = arith.constant 0 : index
    %c0_35 = arith.constant 0 : index
    %46 = vector.load %arg10[%c0_33, %c0_34, %c0_35] : memref<2x128x128xbf16, #tpu.memory_space<vmem>>, vector<1x128x128xbf16>
    %47 = vector.shape_cast %46 : vector<1x128x128xbf16> to vector<128x128xbf16>
    %c1_36 = arith.constant 1 : index
    %c0_37 = arith.constant 0 : index
    %c0_38 = arith.constant 0 : index
    %48 = vector.load %arg11[%c1_36, %c0_37, %c0_38] : memref<3x1x128xf32, #tpu.memory_space<vmem>>, vector<1x1x128xf32>
    %49 = vector.shape_cast %48 : vector<1x1x128xf32> to vector<1x128xf32>
    %50 = arith.truncf %45 : vector<1x128xf32> to vector<1x128xbf16>
    %cst_39 = arith.constant dense<0.000000e+00> : vector<1x128xf32>
    %51 = tpu.matmul %50, %47, %cst_39 {dimension_numbers = #tpu.dot_dimension_numbers<[1], [0], [0], [1], [0, 0, 1, 1], [], []>} : vector<1x128xbf16>, vector<128x128xbf16>, vector<1x128xf32> -> vector<1x128xf32>
    %52 = arith.addf %51, %49 : vector<1x128xf32>
    %cst_40 = arith.constant 0.000000e+00 : f32
    %53 = vector.broadcast %cst_40 : f32 to vector<1x128xf32>
    %54 = arith.cmpf ogt, %52, %53 : vector<1x128xf32>
    %cst_41 = arith.constant 2.000000e-01 : f32
    %55 = vector.broadcast %cst_41 : f32 to vector<1x128xf32>
    %56 = arith.mulf %55, %52 : vector<1x128xf32>
    %57 = arith.select %54, %52, %56 : vector<1x128xi1>, vector<1x128xf32>
    %c1_42 = arith.constant 1 : index
    %c0_43 = arith.constant 0 : index
    %c0_44 = arith.constant 0 : index
    %58 = vector.load %arg10[%c1_42, %c0_43, %c0_44] : memref<2x128x128xbf16, #tpu.memory_space<vmem>>, vector<1x128x128xbf16>
    %59 = vector.shape_cast %58 : vector<1x128x128xbf16> to vector<128x128xbf16>
    %c2 = arith.constant 2 : index
    %c0_45 = arith.constant 0 : index
    %c0_46 = arith.constant 0 : index
    %60 = vector.load %arg11[%c2, %c0_45, %c0_46] : memref<3x1x128xf32, #tpu.memory_space<vmem>>, vector<1x1x128xf32>
    %61 = vector.shape_cast %60 : vector<1x1x128xf32> to vector<1x128xf32>
    %62 = arith.truncf %57 : vector<1x128xf32> to vector<1x128xbf16>
    %cst_47 = arith.constant dense<0.000000e+00> : vector<1x128xf32>
    %63 = tpu.matmul %62, %59, %cst_47 {dimension_numbers = #tpu.dot_dimension_numbers<[1], [0], [0], [1], [0, 0, 1, 1], [], []>} : vector<1x128xbf16>, vector<128x128xbf16>, vector<1x128xf32> -> vector<1x128xf32>
    %64 = arith.addf %63, %61 : vector<1x128xf32>
    %c0_48 = arith.constant 0 : index
    %c0_49 = arith.constant 0 : index
    %c0_50 = arith.constant 0 : index
    %c0_51 = arith.constant 0 : index
    %65 = vector.load %arg7[%c0_48, %c0_49, %c0_50, %c0_51] : memref<2x3x32x32xbf16, #tpu.memory_space<vmem>>, vector<1x1x32x32xbf16>
    %66 = vector.shape_cast %65 : vector<1x1x32x32xbf16> to vector<32x32xbf16>
    %c0_52 = arith.constant 0 : index
    %c0_53 = arith.constant 0 : index
    %c0_54 = arith.constant 0 : index
    %c0_55 = arith.constant 0 : index
    %67 = vector.load %arg8[%c0_52, %c0_53, %c0_54, %c0_55] : memref<2x3x1x32xf32, #tpu.memory_space<vmem>>, vector<1x1x1x32xf32>
    %68 = vector.shape_cast %67 : vector<1x1x1x32xf32> to vector<1x32xf32>
    %69 = arith.truncf %32 : vector<128x32xf32> to vector<128x32xbf16>
    %cst_56 = arith.constant dense<0.000000e+00> : vector<128x32xf32>
    %70 = tpu.matmul %69, %66, %cst_56 {dimension_numbers = #tpu.dot_dimension_numbers<[1], [0], [0], [1], [0, 0, 1, 1], [], []>} : vector<128x32xbf16>, vector<32x32xbf16>, vector<128x32xf32> -> vector<128x32xf32>
    %71 = vector.broadcast %68 : vector<1x32xf32> to vector<128x32xf32>
    %72 = arith.addf %70, %71 : vector<128x32xf32>
    %cst_57 = arith.constant 0.000000e+00 : f32
    %73 = vector.broadcast %cst_57 : f32 to vector<128x32xf32>
    %74 = arith.cmpf ogt, %72, %73 : vector<128x32xf32>
    %cst_58 = arith.constant 2.000000e-01 : f32
    %75 = vector.broadcast %cst_58 : f32 to vector<128x32xf32>
    %76 = arith.mulf %75, %72 : vector<128x32xf32>
    %77 = arith.select %74, %72, %76 : vector<128x32xi1>, vector<128x32xf32>
    %c0_59 = arith.constant 0 : index
    %c1_60 = arith.constant 1 : index
    %c0_61 = arith.constant 0 : index
    %c0_62 = arith.constant 0 : index
    %78 = vector.load %arg7[%c0_59, %c1_60, %c0_61, %c0_62] : memref<2x3x32x32xbf16, #tpu.memory_space<vmem>>, vector<1x1x32x32xbf16>
    %79 = vector.shape_cast %78 : vector<1x1x32x32xbf16> to vector<32x32xbf16>
    %c0_63 = arith.constant 0 : index
    %c1_64 = arith.constant 1 : index
    %c0_65 = arith.constant 0 : index
    %c0_66 = arith.constant 0 : index
    %80 = vector.load %arg8[%c0_63, %c1_64, %c0_65, %c0_66] : memref<2x3x1x32xf32, #tpu.memory_space<vmem>>, vector<1x1x1x32xf32>
    %81 = vector.shape_cast %80 : vector<1x1x1x32xf32> to vector<1x32xf32>
    %82 = arith.truncf %77 : vector<128x32xf32> to vector<128x32xbf16>
    %cst_67 = arith.constant dense<0.000000e+00> : vector<128x32xf32>
    %83 = tpu.matmul %82, %79, %cst_67 {dimension_numbers = #tpu.dot_dimension_numbers<[1], [0], [0], [1], [0, 0, 1, 1], [], []>} : vector<128x32xbf16>, vector<32x32xbf16>, vector<128x32xf32> -> vector<128x32xf32>
    %84 = vector.broadcast %81 : vector<1x32xf32> to vector<128x32xf32>
    %85 = arith.addf %83, %84 : vector<128x32xf32>
    %cst_68 = arith.constant 0.000000e+00 : f32
    %86 = vector.broadcast %cst_68 : f32 to vector<128x32xf32>
    %87 = arith.cmpf ogt, %85, %86 : vector<128x32xf32>
    %cst_69 = arith.constant 2.000000e-01 : f32
    %88 = vector.broadcast %cst_69 : f32 to vector<128x32xf32>
    %89 = arith.mulf %88, %85 : vector<128x32xf32>
    %90 = arith.select %87, %85, %89 : vector<128x32xi1>, vector<128x32xf32>
    %c0_70 = arith.constant 0 : index
    %c2_71 = arith.constant 2 : index
    %c0_72 = arith.constant 0 : index
    %c0_73 = arith.constant 0 : index
    %91 = vector.load %arg7[%c0_70, %c2_71, %c0_72, %c0_73] : memref<2x3x32x32xbf16, #tpu.memory_space<vmem>>, vector<1x1x32x32xbf16>
    %92 = vector.shape_cast %91 : vector<1x1x32x32xbf16> to vector<32x32xbf16>
    %c0_74 = arith.constant 0 : index
    %c2_75 = arith.constant 2 : index
    %c0_76 = arith.constant 0 : index
    %c0_77 = arith.constant 0 : index
    %93 = vector.load %arg8[%c0_74, %c2_75, %c0_76, %c0_77] : memref<2x3x1x32xf32, #tpu.memory_space<vmem>>, vector<1x1x1x32xf32>
    %94 = vector.shape_cast %93 : vector<1x1x1x32xf32> to vector<1x32xf32>
    %95 = arith.truncf %90 : vector<128x32xf32> to vector<128x32xbf16>
    %cst_78 = arith.constant dense<0.000000e+00> : vector<128x32xf32>
    %96 = tpu.matmul %95, %92, %cst_78 {dimension_numbers = #tpu.dot_dimension_numbers<[1], [0], [0], [1], [0, 0, 1, 1], [], []>} : vector<128x32xbf16>, vector<32x32xbf16>, vector<128x32xf32> -> vector<128x32xf32>
    %97 = vector.broadcast %94 : vector<1x32xf32> to vector<128x32xf32>
    %98 = arith.addf %96, %97 : vector<128x32xf32>
    %99 = vector.extract_strided_slice %64 {offsets = [0, 0], sizes = [1, 32], strides = [1, 1]} : vector<1x128xf32> to vector<1x32xf32>
    %100 = vector.extract_strided_slice %64 {offsets = [0, 32], sizes = [1, 32], strides = [1, 1]} : vector<1x128xf32> to vector<1x32xf32>
    %101 = arith.negf %99 : vector<1x32xf32>
    %102 = math.exp %101 : vector<1x32xf32>
    %cst_79 = arith.constant 1.000000e+00 : f32
    %103 = vector.broadcast %cst_79 : f32 to vector<1x32xf32>
    %104 = arith.addf %103, %102 : vector<1x32xf32>
    %105 = arith.divf %103, %104 : vector<1x32xf32>
    %106 = vector.broadcast %105 : vector<1x32xf32> to vector<128x32xf32>
    %107 = arith.mulf %98, %106 : vector<128x32xf32>
    %108 = vector.broadcast %100 : vector<1x32xf32> to vector<128x32xf32>
    %109 = arith.addf %107, %108 : vector<128x32xf32>
    %c1_80 = arith.constant 1 : index
    %c0_81 = arith.constant 0 : index
    %c0_82 = arith.constant 0 : index
    %c0_83 = arith.constant 0 : index
    %110 = vector.load %arg7[%c1_80, %c0_81, %c0_82, %c0_83] : memref<2x3x32x32xbf16, #tpu.memory_space<vmem>>, vector<1x1x32x32xbf16>
    %111 = vector.shape_cast %110 : vector<1x1x32x32xbf16> to vector<32x32xbf16>
    %c1_84 = arith.constant 1 : index
    %c0_85 = arith.constant 0 : index
    %c0_86 = arith.constant 0 : index
    %c0_87 = arith.constant 0 : index
    %112 = vector.load %arg8[%c1_84, %c0_85, %c0_86, %c0_87] : memref<2x3x1x32xf32, #tpu.memory_space<vmem>>, vector<1x1x1x32xf32>
    %113 = vector.shape_cast %112 : vector<1x1x1x32xf32> to vector<1x32xf32>
    %114 = arith.truncf %109 : vector<128x32xf32> to vector<128x32xbf16>
    %cst_88 = arith.constant dense<0.000000e+00> : vector<128x32xf32>
    %115 = tpu.matmul %114, %111, %cst_88 {dimension_numbers = #tpu.dot_dimension_numbers<[1], [0], [0], [1], [0, 0, 1, 1], [], []>} : vector<128x32xbf16>, vector<32x32xbf16>, vector<128x32xf32> -> vector<128x32xf32>
    %116 = vector.broadcast %113 : vector<1x32xf32> to vector<128x32xf32>
    %117 = arith.addf %115, %116 : vector<128x32xf32>
    %cst_89 = arith.constant 0.000000e+00 : f32
    %118 = vector.broadcast %cst_89 : f32 to vector<128x32xf32>
    %119 = arith.cmpf ogt, %117, %118 : vector<128x32xf32>
    %cst_90 = arith.constant 2.000000e-01 : f32
    %120 = vector.broadcast %cst_90 : f32 to vector<128x32xf32>
    %121 = arith.mulf %120, %117 : vector<128x32xf32>
    %122 = arith.select %119, %117, %121 : vector<128x32xi1>, vector<128x32xf32>
    %c1_91 = arith.constant 1 : index
    %c1_92 = arith.constant 1 : index
    %c0_93 = arith.constant 0 : index
    %c0_94 = arith.constant 0 : index
    %123 = vector.load %arg7[%c1_91, %c1_92, %c0_93, %c0_94] : memref<2x3x32x32xbf16, #tpu.memory_space<vmem>>, vector<1x1x32x32xbf16>
    %124 = vector.shape_cast %123 : vector<1x1x32x32xbf16> to vector<32x32xbf16>
    %c1_95 = arith.constant 1 : index
    %c1_96 = arith.constant 1 : index
    %c0_97 = arith.constant 0 : index
    %c0_98 = arith.constant 0 : index
    %125 = vector.load %arg8[%c1_95, %c1_96, %c0_97, %c0_98] : memref<2x3x1x32xf32, #tpu.memory_space<vmem>>, vector<1x1x1x32xf32>
    %126 = vector.shape_cast %125 : vector<1x1x1x32xf32> to vector<1x32xf32>
    %127 = arith.truncf %122 : vector<128x32xf32> to vector<128x32xbf16>
    %cst_99 = arith.constant dense<0.000000e+00> : vector<128x32xf32>
    %128 = tpu.matmul %127, %124, %cst_99 {dimension_numbers = #tpu.dot_dimension_numbers<[1], [0], [0], [1], [0, 0, 1, 1], [], []>} : vector<128x32xbf16>, vector<32x32xbf16>, vector<128x32xf32> -> vector<128x32xf32>
    %129 = vector.broadcast %126 : vector<1x32xf32> to vector<128x32xf32>
    %130 = arith.addf %128, %129 : vector<128x32xf32>
    %cst_100 = arith.constant 0.000000e+00 : f32
    %131 = vector.broadcast %cst_100 : f32 to vector<128x32xf32>
    %132 = arith.cmpf ogt, %130, %131 : vector<128x32xf32>
    %cst_101 = arith.constant 2.000000e-01 : f32
    %133 = vector.broadcast %cst_101 : f32 to vector<128x32xf32>
    %134 = arith.mulf %133, %130 : vector<128x32xf32>
    %135 = arith.select %132, %130, %134 : vector<128x32xi1>, vector<128x32xf32>
    %c1_102 = arith.constant 1 : index
    %c2_103 = arith.constant 2 : index
    %c0_104 = arith.constant 0 : index
    %c0_105 = arith.constant 0 : index
    %136 = vector.load %arg7[%c1_102, %c2_103, %c0_104, %c0_105] : memref<2x3x32x32xbf16, #tpu.memory_space<vmem>>, vector<1x1x32x32xbf16>
    %137 = vector.shape_cast %136 : vector<1x1x32x32xbf16> to vector<32x32xbf16>
    %c1_106 = arith.constant 1 : index
    %c2_107 = arith.constant 2 : index
    %c0_108 = arith.constant 0 : index
    %c0_109 = arith.constant 0 : index
    %138 = vector.load %arg8[%c1_106, %c2_107, %c0_108, %c0_109] : memref<2x3x1x32xf32, #tpu.memory_space<vmem>>, vector<1x1x1x32xf32>
    %139 = vector.shape_cast %138 : vector<1x1x1x32xf32> to vector<1x32xf32>
    %140 = arith.truncf %135 : vector<128x32xf32> to vector<128x32xbf16>
    %cst_110 = arith.constant dense<0.000000e+00> : vector<128x32xf32>
    %141 = tpu.matmul %140, %137, %cst_110 {dimension_numbers = #tpu.dot_dimension_numbers<[1], [0], [0], [1], [0, 0, 1, 1], [], []>} : vector<128x32xbf16>, vector<32x32xbf16>, vector<128x32xf32> -> vector<128x32xf32>
    %142 = vector.broadcast %139 : vector<1x32xf32> to vector<128x32xf32>
    %143 = arith.addf %141, %142 : vector<128x32xf32>
    %144 = vector.extract_strided_slice %64 {offsets = [0, 64], sizes = [1, 32], strides = [1, 1]} : vector<1x128xf32> to vector<1x32xf32>
    %145 = vector.extract_strided_slice %64 {offsets = [0, 96], sizes = [1, 32], strides = [1, 1]} : vector<1x128xf32> to vector<1x32xf32>
    %146 = arith.negf %144 : vector<1x32xf32>
    %147 = math.exp %146 : vector<1x32xf32>
    %cst_111 = arith.constant 1.000000e+00 : f32
    %148 = vector.broadcast %cst_111 : f32 to vector<1x32xf32>
    %149 = arith.addf %148, %147 : vector<1x32xf32>
    %150 = arith.divf %148, %149 : vector<1x32xf32>
    %151 = vector.broadcast %150 : vector<1x32xf32> to vector<128x32xf32>
    %152 = arith.mulf %143, %151 : vector<128x32xf32>
    %153 = vector.broadcast %145 : vector<1x32xf32> to vector<128x32xf32>
    %154 = arith.addf %152, %153 : vector<128x32xf32>
    %c0_112 = arith.constant 0 : index
    %c0_113 = arith.constant 0 : index
    %155 = vector.load %arg12[%c0_112, %c0_113] : memref<32x64xbf16, #tpu.memory_space<vmem>>, vector<32x64xbf16>
    %c0_114 = arith.constant 0 : index
    %c0_115 = arith.constant 0 : index
    %c0_116 = arith.constant 0 : index
    %156 = vector.load %arg14[%c0_114, %c0_115, %c0_116] : memref<3x1x64xf32, #tpu.memory_space<vmem>>, vector<1x1x64xf32>
    %157 = vector.shape_cast %156 : vector<1x1x64xf32> to vector<1x64xf32>
    %158 = arith.truncf %154 : vector<128x32xf32> to vector<128x32xbf16>
    %cst_117 = arith.constant dense<0.000000e+00> : vector<128x64xf32>
    %159 = tpu.matmul %158, %155, %cst_117 {dimension_numbers = #tpu.dot_dimension_numbers<[1], [0], [0], [1], [0, 0, 1, 1], [], []>} : vector<128x32xbf16>, vector<32x64xbf16>, vector<128x64xf32> -> vector<128x64xf32>
    %160 = vector.broadcast %157 : vector<1x64xf32> to vector<128x64xf32>
    %161 = arith.addf %159, %160 : vector<128x64xf32>
    %cst_118 = arith.constant 0.000000e+00 : f32
    %162 = vector.broadcast %cst_118 : f32 to vector<128x64xf32>
    %163 = arith.cmpf ogt, %161, %162 : vector<128x64xf32>
    %cst_119 = arith.constant 2.000000e-01 : f32
    %164 = vector.broadcast %cst_119 : f32 to vector<128x64xf32>
    %165 = arith.mulf %164, %161 : vector<128x64xf32>
    %166 = arith.select %163, %161, %165 : vector<128x64xi1>, vector<128x64xf32>
    %c0_120 = arith.constant 0 : index
    %c0_121 = arith.constant 0 : index
    %c0_122 = arith.constant 0 : index
    %167 = vector.load %arg13[%c0_120, %c0_121, %c0_122] : memref<2x64x64xbf16, #tpu.memory_space<vmem>>, vector<1x64x64xbf16>
    %168 = vector.shape_cast %167 : vector<1x64x64xbf16> to vector<64x64xbf16>
    %c1_123 = arith.constant 1 : index
    %c0_124 = arith.constant 0 : index
    %c0_125 = arith.constant 0 : index
    %169 = vector.load %arg14[%c1_123, %c0_124, %c0_125] : memref<3x1x64xf32, #tpu.memory_space<vmem>>, vector<1x1x64xf32>
    %170 = vector.shape_cast %169 : vector<1x1x64xf32> to vector<1x64xf32>
    %171 = arith.truncf %166 : vector<128x64xf32> to vector<128x64xbf16>
    %cst_126 = arith.constant dense<0.000000e+00> : vector<128x64xf32>
    %172 = tpu.matmul %171, %168, %cst_126 {dimension_numbers = #tpu.dot_dimension_numbers<[1], [0], [0], [1], [0, 0, 1, 1], [], []>} : vector<128x64xbf16>, vector<64x64xbf16>, vector<128x64xf32> -> vector<128x64xf32>
    %173 = vector.broadcast %170 : vector<1x64xf32> to vector<128x64xf32>
    %174 = arith.addf %172, %173 : vector<128x64xf32>
    %cst_127 = arith.constant 0.000000e+00 : f32
    %175 = vector.broadcast %cst_127 : f32 to vector<128x64xf32>
    %176 = arith.cmpf ogt, %174, %175 : vector<128x64xf32>
    %cst_128 = arith.constant 2.000000e-01 : f32
    %177 = vector.broadcast %cst_128 : f32 to vector<128x64xf32>
    %178 = arith.mulf %177, %174 : vector<128x64xf32>
    %179 = arith.select %176, %174, %178 : vector<128x64xi1>, vector<128x64xf32>
    %c1_129 = arith.constant 1 : index
    %c0_130 = arith.constant 0 : index
    %c0_131 = arith.constant 0 : index
    %180 = vector.load %arg13[%c1_129, %c0_130, %c0_131] : memref<2x64x64xbf16, #tpu.memory_space<vmem>>, vector<1x64x64xbf16>
    %181 = vector.shape_cast %180 : vector<1x64x64xbf16> to vector<64x64xbf16>
    %c2_132 = arith.constant 2 : index
    %c0_133 = arith.constant 0 : index
    %c0_134 = arith.constant 0 : index
    %182 = vector.load %arg14[%c2_132, %c0_133, %c0_134] : memref<3x1x64xf32, #tpu.memory_space<vmem>>, vector<1x1x64xf32>
    %183 = vector.shape_cast %182 : vector<1x1x64xf32> to vector<1x64xf32>
    %184 = arith.truncf %179 : vector<128x64xf32> to vector<128x64xbf16>
    %cst_135 = arith.constant dense<0.000000e+00> : vector<128x64xf32>
    %185 = tpu.matmul %184, %181, %cst_135 {dimension_numbers = #tpu.dot_dimension_numbers<[1], [0], [0], [1], [0, 0, 1, 1], [], []>} : vector<128x64xbf16>, vector<64x64xbf16>, vector<128x64xf32> -> vector<128x64xf32>
    %186 = vector.broadcast %183 : vector<1x64xf32> to vector<128x64xf32>
    %187 = arith.addf %185, %186 : vector<128x64xf32>
    %cst_136 = arith.constant 0.000000e+00 : f32
    %188 = vector.broadcast %cst_136 : f32 to vector<128x64xf32>
    %189 = arith.cmpf ogt, %187, %188 : vector<128x64xf32>
    %cst_137 = arith.constant 2.000000e-01 : f32
    %190 = vector.broadcast %cst_137 : f32 to vector<128x64xf32>
    %191 = arith.mulf %190, %187 : vector<128x64xf32>
    %192 = arith.select %189, %187, %191 : vector<128x64xi1>, vector<128x64xf32>
    %c0_138 = arith.constant 0 : index
    %c0_139 = arith.constant 0 : index
    %193 = vector.load %arg15[%c0_138, %c0_139] : memref<64x128xbf16, #tpu.memory_space<vmem>>, vector<64x128xbf16>
    %c0_140 = arith.constant 0 : index
    %c0_141 = arith.constant 0 : index
    %194 = vector.load %arg16[%c0_140, %c0_141] : memref<1x128xf32, #tpu.memory_space<vmem>>, vector<1x128xf32>
    %195 = arith.truncf %192 : vector<128x64xf32> to vector<128x64xbf16>
    %cst_142 = arith.constant dense<0.000000e+00> : vector<128x128xf32>
    %196 = tpu.matmul %195, %193, %cst_142 {dimension_numbers = #tpu.dot_dimension_numbers<[1], [0], [0], [1], [0, 0, 1, 1], [], []>} : vector<128x64xbf16>, vector<64x128xbf16>, vector<128x128xf32> -> vector<128x128xf32>
    %197 = vector.broadcast %194 : vector<1x128xf32> to vector<128x128xf32>
    %198 = arith.addf %196, %197 : vector<128x128xf32>
    %c0_143 = arith.constant 0 : index
    %c0_144 = arith.constant 0 : index
    %c0_145 = arith.constant 0 : index
    %199 = vector.load %arg17[%c0_143, %c0_144, %c0_145] : memref<1x128x128xf32, #tpu.memory_space<vmem>>, vector<1x128x128xf32>
    %200 = vector.shape_cast %199 : vector<1x128x128xf32> to vector<128x128xf32>
    %201 = vector.shape_cast %198 : vector<128x128xf32> to vector<1x128x128xf32>
    tpu.vector_store %arg17[%c0_143, %c0_144, %c0_145], %201 {strides = array<i32>} : memref<1x128x128xf32, #tpu.memory_space<vmem>>, vector<1x128x128xf32>,
    return
  }
  func.func @transform_0(%arg0: i32) -> (i32, i32) {
    %c0_i32 = arith.constant 0 : i32
    %c0_i32_0 = arith.constant 0 : i32
    %c0_i32_1 = arith.constant 0 : i32
    return %c0_i32, %c0_i32_0 : i32, i32
  }
  func.func @transform_1(%arg0: i32) -> (i32, i32, i32) {
    %c0_i32 = arith.constant 0 : i32
    %c0_i32_0 = arith.constant 0 : i32
    %c0_i32_1 = arith.constant 0 : i32
    return %arg0, %c0_i32, %c0_i32_0 : i32, i32, i32
  }
  func.func @transform_2(%arg0: i32) -> (i32, i32) {
    %c0_i32 = arith.constant 0 : i32
    %c0_i32_0 = arith.constant 0 : i32
    %c0_i32_1 = arith.constant 0 : i32
    return %c0_i32, %c0_i32_0 : i32, i32
  }
  func.func @transform_3(%arg0: i32) -> (i32, i32) {
    %c0_i32 = arith.constant 0 : i32
    %c0_i32_0 = arith.constant 0 : i32
    %c0_i32_1 = arith.constant 0 : i32
    return %c0_i32, %c0_i32_0 : i32, i32
  }
  func.func @transform_4(%arg0: i32) -> (i32, i32, i32) {
    %c0_i32 = arith.constant 0 : i32
    %c0_i32_0 = arith.constant 0 : i32
    %c0_i32_1 = arith.constant 0 : i32
    %c0_i32_2 = arith.constant 0 : i32
    return %c0_i32, %c0_i32_0, %c0_i32_1 : i32, i32, i32
  }
  func.func @transform_5(%arg0: i32) -> (i32, i32, i32) {
    %c0_i32 = arith.constant 0 : i32
    %c0_i32_0 = arith.constant 0 : i32
    %c0_i32_1 = arith.constant 0 : i32
    %c0_i32_2 = arith.constant 0 : i32
    return %c0_i32, %c0_i32_0, %c0_i32_1 : i32, i32, i32
  }
  func.func @transform_6(%arg0: i32) -> (i32, i32, i32, i32) {
    %c0_i32 = arith.constant 0 : i32
    %c0_i32_0 = arith.constant 0 : i32
    %c0_i32_1 = arith.constant 0 : i32
    %c0_i32_2 = arith.constant 0 : i32
    %c0_i32_3 = arith.constant 0 : i32
    return %c0_i32, %c0_i32_0, %c0_i32_1, %c0_i32_2 : i32, i32, i32, i32
  }
  func.func @transform_7(%arg0: i32) -> (i32, i32, i32, i32) {
    %c0_i32 = arith.constant 0 : i32
    %c0_i32_0 = arith.constant 0 : i32
    %c0_i32_1 = arith.constant 0 : i32
    %c0_i32_2 = arith.constant 0 : i32
    %c0_i32_3 = arith.constant 0 : i32
    return %c0_i32, %c0_i32_0, %c0_i32_1, %c0_i32_2 : i32, i32, i32, i32
  }
  func.func @transform_8(%arg0: i32) -> (i32, i32) {
    %c0_i32 = arith.constant 0 : i32
    %c0_i32_0 = arith.constant 0 : i32
    %c0_i32_1 = arith.constant 0 : i32
    return %c0_i32, %c0_i32_0 : i32, i32
  }
  func.func @transform_9(%arg0: i32) -> (i32, i32, i32) {
    %c0_i32 = arith.constant 0 : i32
    %c0_i32_0 = arith.constant 0 : i32
    %c0_i32_1 = arith.constant 0 : i32
    %c0_i32_2 = arith.constant 0 : i32
    return %c0_i32, %c0_i32_0, %c0_i32_1 : i32, i32, i32
  }
  func.func @transform_10(%arg0: i32) -> (i32, i32, i32) {
    %c0_i32 = arith.constant 0 : i32
    %c0_i32_0 = arith.constant 0 : i32
    %c0_i32_1 = arith.constant 0 : i32
    %c0_i32_2 = arith.constant 0 : i32
    return %c0_i32, %c0_i32_0, %c0_i32_1 : i32, i32, i32
  }
  func.func @transform_11(%arg0: i32) -> (i32, i32) {
    %c0_i32 = arith.constant 0 : i32
    %c0_i32_0 = arith.constant 0 : i32
    %c0_i32_1 = arith.constant 0 : i32
    return %c0_i32, %c0_i32_0 : i32, i32
  }
  func.func @transform_12(%arg0: i32) -> (i32, i32, i32) {
    %c0_i32 = arith.constant 0 : i32
    %c0_i32_0 = arith.constant 0 : i32
    %c0_i32_1 = arith.constant 0 : i32
    %c0_i32_2 = arith.constant 0 : i32
    return %c0_i32, %c0_i32_0, %c0_i32_1 : i32, i32, i32
  }
  func.func @transform_13(%arg0: i32) -> (i32, i32, i32) {
    %c0_i32 = arith.constant 0 : i32
    %c0_i32_0 = arith.constant 0 : i32
    %c0_i32_1 = arith.constant 0 : i32
    %c0_i32_2 = arith.constant 0 : i32
    return %c0_i32, %c0_i32_0, %c0_i32_1 : i32, i32, i32
  }
  func.func @transform_14(%arg0: i32) -> (i32, i32) {
    %c0_i32 = arith.constant 0 : i32
    %c0_i32_0 = arith.constant 0 : i32
    %c0_i32_1 = arith.constant 0 : i32
    return %c0_i32, %c0_i32_0 : i32, i32
  }
  func.func @transform_15(%arg0: i32) -> (i32, i32) {
    %c0_i32 = arith.constant 0 : i32
    %c0_i32_0 = arith.constant 0 : i32
    %c0_i32_1 = arith.constant 0 : i32
    return %c0_i32, %c0_i32_0 : i32, i32
  }
  func.func @transform_16(%arg0: i32) -> (i32, i32, i32) {
    %c0_i32 = arith.constant 0 : i32
    %c0_i32_0 = arith.constant 0 : i32
    %c0_i32_1 = arith.constant 0 : i32
    return %arg0, %c0_i32, %c0_i32_0 : i32, i32, i32
  }
}

</mosaic_0001>

<llo_original>
// kernel: modulated_stack.1
$region0: #{modulated_stack.1}
  #allocation0 [shape = 'u32[]', space=smem, size = 0x4, offset = 0x4, fixed_abs, tag = 'smem constant byte address 0x4 - core index']
  #allocation1 [shape = 'u32[144,128]{1,0:T(1,128)}', space=vmem, size = 0x12000, scoped, tag = 'internal scratch']
  %s0 = inlined_call_operand.vmem [shape: f32[128,33], index: 0, kind: input, shape index: {}]
  %s1 = inlined_call_operand.hbm [shape: f32[2,1,32], index: 1, kind: input, shape index: {}]
  %s2 = inlined_call_operand.vmem [shape: bf16[33,32], index: 2, kind: input, shape index: {}]
  %s3 = inlined_call_operand.vmem [shape: f32[1,32], index: 3, kind: input, shape index: {}]
  %s4 = inlined_call_operand.hbm [shape: bf16[2,32,32], index: 4, kind: input, shape index: {}]
  %s5 = inlined_call_operand.hbm [shape: f32[2,1,32], index: 5, kind: input, shape index: {}]
  %s6 = inlined_call_operand.vmem [shape: bf16[2,3,32,32], index: 6, kind: input, shape index: {}]
  %s7 = inlined_call_operand.hbm [shape: f32[2,3,1,32], index: 7, kind: input, shape index: {}]
  %s8 = inlined_call_operand.hbm [shape: bf16[32,128], index: 8, kind: input, shape index: {}]
  %s9 = inlined_call_operand.vmem [shape: bf16[2,128,128], index: 9, kind: input, shape index: {}]
  %s10 = inlined_call_operand.hbm [shape: f32[3,1,128], index: 10, kind: input, shape index: {}]
  %s11 = inlined_call_operand.hbm [shape: bf16[32,64], index: 11, kind: input, shape index: {}]
  %s12 = inlined_call_operand.hbm [shape: bf16[2,64,64], index: 12, kind: input, shape index: {}]
  %s13 = inlined_call_operand.hbm [shape: f32[3,1,64], index: 13, kind: input, shape index: {}]
  %s14 = inlined_call_operand.vmem [shape: bf16[64,128], index: 14, kind: input, shape index: {}]
  %s15 = inlined_call_operand.vmem [shape: f32[1,128], index: 15, kind: input, shape index: {}]
  %s16 = inlined_call_operand.vmem [shape: f32[2,128,128], index: 16, kind: output, shape index: {}]
  %s17 = sld [smem:[#allocation0]]
  $region133: #{modulated_stack.1} parent=0
    _
  %s19 = ssub.s32 1, %s17
  %s20 = scalar_select 0, %s19, %s17
  $region1: #{modulated_stack.1} parent=0
    #allocation2 [shape = 'u8[1024]{0}', space=vmem, size = 0x400, scoped, tag = 'input window, operand 1']
    #allocation3 [shape = 's32[2]{0}', space=sflag, size = 0x8, scoped, tag = 'scoped memory for modulated_stack.1']
    #allocation4 [shape = 'u8[16384]{0}', space=vmem, size = 0x4000, scoped, tag = 'input window, operand 4, single buffered']
    #allocation5 [shape = 's32[1]{0}', space=sflag, size = 0x4, scoped, tag = 'scoped memory for modulated_stack.1']
    #allocation6 [shape = 'u8[1024]{0}', space=vmem, size = 0x400, scoped, tag = 'input window, operand 5, single buffered']
    #allocation7 [shape = 'u8[3072]{0}', space=vmem, size = 0xc00, scoped, tag = 'input window, operand 7, single buffered']
    #allocation8 [shape = 's32[1]{0}', space=sflag, size = 0x4, scoped, tag = 'scoped memory for modulated_stack.1']
    #allocation9 [shape = 'u8[8192]{0}', space=vmem, size = 0x2000, scoped, tag = 'input window, operand 8, single buffered']
    #allocation10 [shape = 'u8[1536]{0}', space=vmem, size = 0x800, scoped, tag = 'input window, operand 10, single buffered']
    #allocation11 [shape = 's32[1]{0}', space=sflag, size = 0x4, scoped, tag = 'scoped memory for modulated_stack.1']
    #allocation12 [shape = 'u8[8192]{0}', space=vmem, size = 0x2000, scoped, tag = 'input window, operand 11, single buffered']
    #allocation13 [shape = 'u8[32768]{0}', space=vmem, size = 0x8000, scoped, tag = 'input window, operand 12, single buffered']
    #allocation14 [shape = 's32[1]{0}', space=sflag, size = 0x4, scoped, tag = 'scoped memory for modulated_stack.1']
    #allocation15 [shape = 'u8[1536]{0}', space=vmem, size = 0x800, scoped, tag = 'input window, operand 13, single buffered']
    %21 = vsyncpa [#allocation3], 0
    %s22 = scalar_lea.sflag [#allocation3], 1
    %23 = vsyncpa %s22, 0
    %24 = vsyncpa [#allocation5], 0
    %25 = vsyncpa [#allocation8], 0
    %26 = vsyncpa [#allocation11], 0
    %27 = vsyncpa [#allocation14], 0
    loop: start=0, step=1, limit=4
    $region2: #{modulated_stack.1} parent=1 // loop_pre_header
      _
    $region3: #{modulated_stack.1} parent=1 // loop_header
      %s29 = sphi 0, %s33
      %p30 = scmp.ge.s32.totalorder %s29, 4
      %s37 = sphi 0, %s37
      %s39 = sphi 0, %s37
      %s40 = sphi 0, %s39
      %s54 = sphi 0, %s40
      %s60 = sphi 0, %s62
      %s63 = sphi 0, %s60
      %s64 = sphi 0, %s63
      %s80 = sphi 0, %s64
      %s84 = sphi 0, %s84
      %s86 = sphi 0, %s84
      %s87 = sphi 0, %s86
      %s101 = sphi 0, %s87
      %s105 = sphi 0, %s105
      %s107 = sphi 0, %s105
      %s108 = sphi 0, %s107
      %s122 = sphi 0, %s108
      %s126 = sphi 0, %s126
      %s128 = sphi 0, %s126
      %s129 = sphi 0, %s128
      %s143 = sphi 0, %s129
      %s147 = sphi 0, %s147
      %s149 = sphi 0, %s147
      %s150 = sphi 0, %s149
      %s164 = sphi 0, %s150
      %s168 = sphi 0, %s168
      %s170 = sphi 0, %s168
      %s171 = sphi 0, %s170
      %s185 = sphi 0, %s171
      %s189 = sphi 0, %s189
      %s191 = sphi 0, %s189
      %s192 = sphi 0, %s191
      %s206 = sphi 0, %s192
      %s210 = sphi 0, %s210
      %s212 = sphi 0, %s210
      %s213 = sphi 0, %s212
      %s227 = sphi 0, %s213
      %s231 = sphi 0, %s231
      %s233 = sphi 0, %s231
      %s234 = sphi 0, %s233
      %s248 = sphi 0, %s234
      %s252 = sphi 0, %s252
      %s254 = sphi 0, %s252
      %s255 = sphi 0, %s254
      %s269 = sphi 0, %s255
      %s273 = sphi 0, %s273
      %s275 = sphi 0, %s273
      %s276 = sphi 0, %s275
      %s290 = sphi 0, %s276
      %s294 = sphi 0, %s294
      %s296 = sphi 0, %s294
      %s297 = sphi 0, %s296
      %s311 = sphi 0, %s297
      %s315 = sphi 0, %s315
      %s317 = sphi 0, %s315
      %s318 = sphi 0, %s317
      %s332 = sphi 0, %s318
      %s336 = sphi 0, %s336
      %s338 = sphi 0, %s336
      %s339 = sphi 0, %s338
      %s353 = sphi 0, %s339
      %s357 = sphi 0, %s357
      %s359 = sphi 0, %s357
      %s360 = sphi 0, %s359
      %s374 = sphi 0, %s360
      %s380 = sphi 0, %s382
      %s383 = sphi 0, %s380
      %s384 = sphi 0, %s383
      %s400 = sphi 0, %s384
    $region4: #{modulated_stack.1} parent=1 // loop_header_branch
      %32 = sbr.rel (%p30) target = $region8
    $region5: #{modulated_stack.1} parent=1 // loop_body
      %s34 = ssub.s32 %s29, 1
      %s35 = ssub.s32 %s29, 2
      %s36 = sadd.s32 %s29, 1
      %s38 = sadd.s32 %s37, 1
      %p41 = scmp.eq.s32.totalorder %s29, 1
      %p42 = scmp.ne.s32.totalorder %s37, %s39
      %p43 = scmp.eq.s32.totalorder %s29, 0
      %p44 = por %p42, %p43
      %p45 = scmp.ne.s32.totalorder %s37, %s39
      %p46 = scmp.eq.s32.totalorder %s34, 1
      %p47 = por %p45, %p46
      %p48 = scmp.ne.s32.totalorder %s39, %s40
      %p49 = scmp.eq.s32.totalorder %s34, 0
      %p50 = por %p48, %p49
      %p51 = scmp.ne.s32.totalorder %s39, %s40
      %p52 = scmp.eq.s32.totalorder %s35, 1
      %p53 = por %p51, %p52
      %p55 = scmp.ne.s32.totalorder %s40, %s54
      %p56 = scmp.eq.s32.totalorder %s35, 0
      %p57 = por %p55, %p56
      %s58 = ssub.s32 %s29, %s36
      %p59 = scmp.eq.s32.totalorder %s58, 0
      %s61 = sadd.s32 %s60, 1
      %s62 = scalar_select %p59, %s60, %s61
      %p65 = pneg %p59
      %p66 = scmp.eq.s32.totalorder %s29, 1
      %p67 = por %p65, %p66
      %p68 = scmp.ne.s32.totalorder %s60, %s63
      %p69 = scmp.eq.s32.totalorder %s29, 0
      %p70 = por %p68, %p69
      %p71 = scmp.ne.s32.totalorder %s60, %s63
      %p72 = scmp.eq.s32.totalorder %s34, 1
      %p73 = por %p71, %p72
      %p74 = scmp.ne.s32.totalorder %s63, %s64
      %p75 = scmp.eq.s32.totalorder %s34, 0
      %p76 = por %p74, %p75
      %p77 = scmp.ne.s32.totalorder %s63, %s64
      %p78 = scmp.eq.s32.totalorder %s35, 1
      %p79 = por %p77, %p78
      %p81 = scmp.ne.s32.totalorder %s64, %s80
      %p82 = scmp.eq.s32.totalorder %s35, 0
      %p83 = por %p81, %p82
      %s85 = sadd.s32 %s84, 1
      %p88 = scmp.eq.s32.totalorder %s29, 1
      %p89 = scmp.ne.s32.totalorder %s84, %s86
      %p90 = scmp.eq.s32.totalorder %s29, 0
      %p91 = por %p89, %p90
      %p92 = scmp.ne.s32.totalorder %s84, %s86
      %p93 = scmp.eq.s32.totalorder %s34, 1
      %p94 = por %p92, %p93
      %p95 = scmp.ne.s32.totalorder %s86, %s87
      %p96 = scmp.eq.s32.totalorder %s34, 0
      %p97 = por %p95, %p96
      %p98 = scmp.ne.s32.totalorder %s86, %s87
      %p99 = scmp.eq.s32.totalorder %s35, 1
      %p100 = por %p98, %p99
      %p102 = scmp.ne.s32.totalorder %s87, %s101
      %p103 = scmp.eq.s32.totalorder %s35, 0
      %p104 = por %p102, %p103
      %s106 = sadd.s32 %s105, 1
      %p109 = scmp.eq.s32.totalorder %s29, 1
      %p110 = scmp.ne.s32.totalorder %s105, %s107
      %p111 = scmp.eq.s32.totalorder %s29, 0
      %p112 = por %p110, %p111
      %p113 = scmp.ne.s32.totalorder %s105, %s107
      %p114 = scmp.eq.s32.totalorder %s34, 1
      %p115 = por %p113, %p114
      %p116 = scmp.ne.s32.totalorder %s107, %s108
      %p117 = scmp.eq.s32.totalorder %s34, 0
      %p118 = por %p116, %p117
      %p119 = scmp.ne.s32.totalorder %s107, %s108
      %p120 = scmp.eq.s32.totalorder %s35, 1
      %p121 = por %p119, %p120
      %p123 = scmp.ne.s32.totalorder %s108, %s122
      %p124 = scmp.eq.s32.totalorder %s35, 0
      %p125 = por %p123, %p124
      %s127 = sadd.s32 %s126, 1
      %p130 = scmp.eq.s32.totalorder %s29, 1
      %p131 = scmp.ne.s32.totalorder %s126, %s128
      %p132 = scmp.eq.s32.totalorder %s29, 0
      %p133 = por %p131, %p132
      %p134 = scmp.ne.s32.totalorder %s126, %s128
      %p135 = scmp.eq.s32.totalorder %s34, 1
      %p136 = por %p134, %p135
      %p137 = scmp.ne.s32.totalorder %s128, %s129
      %p138 = scmp.eq.s32.totalorder %s34, 0
      %p139 = por %p137, %p138
      %p140 = scmp.ne.s32.totalorder %s128, %s129
      %p141 = scmp.eq.s32.totalorder %s35, 1
      %p142 = por %p140, %p141
      %p144 = scmp.ne.s32.totalorder %s129, %s143
      %p145 = scmp.eq.s32.totalorder %s35, 0
      %p146 = por %p144, %p145
      %s148 = sadd.s32 %s147, 1
      %p151 = scmp.eq.s32.totalorder %s29, 1
      %p152 = scmp.ne.s32.totalorder %s147, %s149
      %p153 = scmp.eq.s32.totalorder %s29, 0
      %p154 = por %p152, %p153
      %p155 = scmp.ne.s32.totalorder %s147, %s149
      %p156 = scmp.eq.s32.totalorder %s34, 1
      %p157 = por %p155, %p156
      %p158 = scmp.ne.s32.totalorder %s149, %s150
      %p159 = scmp.eq.s32.totalorder %s34, 0
      %p160 = por %p158, %p159
      %p161 = scmp.ne.s32.totalorder %s149, %s150
      %p162 = scmp.eq.s32.totalorder %s35, 1
      %p163 = por %p161, %p162
      %p165 = scmp.ne.s32.totalorder %s150, %s164
      %p166 = scmp.eq.s32.totalorder %s35, 0
      %p167 = por %p165, %p166
      %s169 = sadd.s32 %s168, 1
      %p172 = scmp.eq.s32.totalorder %s29, 1
      %p173 = scmp.ne.s32.totalorder %s168, %s170
      %p174 = scmp.eq.s32.totalorder %s29, 0
      %p175 = por %p173, %p174
      %p176 = scmp.ne.s32.totalorder %s168, %s170
      %p177 = scmp.eq.s32.totalorder %s34, 1
      %p178 = por %p176, %p177
      %p179 = scmp.ne.s32.totalorder %s170, %s171
      %p180 = scmp.eq.s32.totalorder %s34, 0
      %p181 = por %p179, %p180
      %p182 = scmp.ne.s32.totalorder %s170, %s171
      %p183 = scmp.eq.s32.totalorder %s35, 1
      %p184 = por %p182, %p183
      %p186 = scmp.ne.s32.totalorder %s171, %s185
      %p187 = scmp.eq.s32.totalorder %s35, 0
      %p188 = por %p186, %p187
      %s190 = sadd.s32 %s189, 1
      %p193 = scmp.eq.s32.totalorder %s29, 1
      %p194 = scmp.ne.s32.totalorder %s189, %s191
      %p195 = scmp.eq.s32.totalorder %s29, 0
      %p196 = por %p194, %p195
      %p197 = scmp.ne.s32.totalorder %s189, %s191
      %p198 = scmp.eq.s32.totalorder %s34, 1
      %p199 = por %p197, %p198
      %p200 = scmp.ne.s32.totalorder %s191, %s192
      %p201 = scmp.eq.s32.totalorder %s34, 0
      %p202 = por %p200, %p201
      %p203 = scmp.ne.s32.totalorder %s191, %s192
      %p204 = scmp.eq.s32.totalorder %s35, 1
      %p205 = por %p203, %p204
      %p207 = scmp.ne.s32.totalorder %s192, %s206
      %p208 = scmp.eq.s32.totalorder %s35, 0
      %p209 = por %p207, %p208
      %s211 = sadd.s32 %s210, 1
      %p214 = scmp.eq.s32.totalorder %s29, 1
      %p215 = scmp.ne.s32.totalorder %s210, %s212
      %p216 = scmp.eq.s32.totalorder %s29, 0
      %p217 = por %p215, %p216
      %p218 = scmp.ne.s32.totalorder %s210, %s212
      %p219 = scmp.eq.s32.totalorder %s34, 1
      %p220 = por %p218, %p219
      %p221 = scmp.ne.s32.totalorder %s212, %s213
      %p222 = scmp.eq.s32.totalorder %s34, 0
      %p223 = por %p221, %p222
      %p224 = scmp.ne.s32.totalorder %s212, %s213
      %p225 = scmp.eq.s32.totalorder %s35, 1
      %p226 = por %p224, %p225
      %p228 = scmp.ne.s32.totalorder %s213, %s227
      %p229 = scmp.eq.s32.totalorder %s35, 0
      %p230 = por %p228, %p229
      %s232 = sadd.s32 %s231, 1
      %p235 = scmp.eq.s32.totalorder %s29, 1
      %p236 = scmp.ne.s32.totalorder %s231, %s233
      %p237 = scmp.eq.s32.totalorder %s29, 0
      %p238 = por %p236, %p237
      %p239 = scmp.ne.s32.totalorder %s231, %s233
      %p240 = scmp.eq.s32.totalorder %s34, 1
      %p241 = por %p239, %p240
      %p242 = scmp.ne.s32.totalorder %s233, %s234
      %p243 = scmp.eq.s32.totalorder %s34, 0
      %p244 = por %p242, %p243
      %p245 = scmp.ne.s32.totalorder %s233, %s234
      %p246 = scmp.eq.s32.totalorder %s35, 1
      %p247 = por %p245, %p246
      %p249 = scmp.ne.s32.totalorder %s234, %s248
      %p250 = scmp.eq.s32.totalorder %s35, 0
      %p251 = por %p249, %p250
      %s253 = sadd.s32 %s252, 1
      %p256 = scmp.eq.s32.totalorder %s29, 1
      %p257 = scmp.ne.s32.totalorder %s252, %s254
      %p258 = scmp.eq.s32.totalorder %s29, 0
      %p259 = por %p257, %p258
      %p260 = scmp.ne.s32.totalorder %s252, %s254
      %p261 = scmp.eq.s32.totalorder %s34, 1
      %p262 = por %p260, %p261
      %p263 = scmp.ne.s32.totalorder %s254, %s255
      %p264 = scmp.eq.s32.totalorder %s34, 0
      %p265 = por %p263, %p264
      %p266 = scmp.ne.s32.totalorder %s254, %s255
      %p267 = scmp.eq.s32.totalorder %s35, 1
      %p268 = por %p266, %p267
      %p270 = scmp.ne.s32.totalorder %s255, %s269
      %p271 = scmp.eq.s32.totalorder %s35, 0
      %p272 = por %p270, %p271
      %s274 = sadd.s32 %s273, 1
      %p277 = scmp.eq.s32.totalorder %s29, 1
      %p278 = scmp.ne.s32.totalorder %s273, %s275
      %p279 = scmp.eq.s32.totalorder %s29, 0
      %p280 = por %p278, %p279
      %p281 = scmp.ne.s32.totalorder %s273, %s275
      %p282 = scmp.eq.s32.totalorder %s34, 1
      %p283 = por %p281, %p282
      %p284 = scmp.ne.s32.totalorder %s275, %s276
      %p285 = scmp.eq.s32.totalorder %s34, 0
      %p286 = por %p284, %p285
      %p287 = scmp.ne.s32.totalorder %s275, %s276
      %p288 = scmp.eq.s32.totalorder %s35, 1
      %p289 = por %p287, %p288
      %p291 = scmp.ne.s32.totalorder %s276, %s290
      %p292 = scmp.eq.s32.totalorder %s35, 0
      %p293 = por %p291, %p292
      %s295 = sadd.s32 %s294, 1
      %p298 = scmp.eq.s32.totalorder %s29, 1
      %p299 = scmp.ne.s32.totalorder %s294, %s296
      %p300 = scmp.eq.s32.totalorder %s29, 0
      %p301 = por %p299, %p300
      %p302 = scmp.ne.s32.totalorder %s294, %s296
      %p303 = scmp.eq.s32.totalorder %s34, 1
      %p304 = por %p302, %p303
      %p305 = scmp.ne.s32.totalorder %s296, %s297
      %p306 = scmp.eq.s32.totalorder %s34, 0
      %p307 = por %p305, %p306
      %p308 = scmp.ne.s32.totalorder %s296, %s297
      %p309 = scmp.eq.s32.totalorder %s35, 1
      %p310 = por %p308, %p309
      %p312 = scmp.ne.s32.totalorder %s297, %s311
      %p313 = scmp.eq.s32.totalorder %s35, 0
      %p314 = por %p312, %p313
      %s316 = sadd.s32 %s315, 1
      %p319 = scmp.eq.s32.totalorder %s29, 1
      %p320 = scmp.ne.s32.totalorder %s315, %s317
      %p321 = scmp.eq.s32.totalorder %s29, 0
      %p322 = por %p320, %p321
      %p323 = scmp.ne.s32.totalorder %s315, %s317
      %p324 = scmp.eq.s32.totalorder %s34, 1
      %p325 = por %p323, %p324
      %p326 = scmp.ne.s32.totalorder %s317, %s318
      %p327 = scmp.eq.s32.totalorder %s34, 0
      %p328 = por %p326, %p327
      %p329 = scmp.ne.s32.totalorder %s317, %s318
      %p330 = scmp.eq.s32.totalorder %s35, 1
      %p331 = por %p329, %p330
      %p333 = scmp.ne.s32.totalorder %s318, %s332
      %p334 = scmp.eq.s32.totalorder %s35, 0
      %p335 = por %p333, %p334
      %s337 = sadd.s32 %s336, 1
      %p340 = scmp.eq.s32.totalorder %s29, 1
      %p341 = scmp.ne.s32.totalorder %s336, %s338
      %p342 = scmp.eq.s32.totalorder %s29, 0
      %p343 = por %p341, %p342
      %p344 = scmp.ne.s32.totalorder %s336, %s338
      %p345 = scmp.eq.s32.totalorder %s34, 1
      %p346 = por %p344, %p345
      %p347 = scmp.ne.s32.totalorder %s338, %s339
      %p348 = scmp.eq.s32.totalorder %s34, 0
      %p349 = por %p347, %p348
      %p350 = scmp.ne.s32.totalorder %s338, %s339
      %p351 = scmp.eq.s32.totalorder %s35, 1
      %p352 = por %p350, %p351
      %p354 = scmp.ne.s32.totalorder %s339, %s353
      %p355 = scmp.eq.s32.totalorder %s35, 0
      %p356 = por %p354, %p355
      %s358 = sadd.s32 %s357, 1
      %p361 = scmp.eq.s32.totalorder %s29, 1
      %p362 = scmp.ne.s32.totalorder %s357, %s359
      %p363 = scmp.eq.s32.totalorder %s29, 0
      %p364 = por %p362, %p363
      %p365 = scmp.ne.s32.totalorder %s357, %s359
      %p366 = scmp.eq.s32.totalorder %s34, 1
      %p367 = por %p365, %p366
      %p368 = scmp.ne.s32.totalorder %s359, %s360
      %p369 = scmp.eq.s32.totalorder %s34, 0
      %p370 = por %p368, %p369
      %p371 = scmp.ne.s32.totalorder %s359, %s360
      %p372 = scmp.eq.s32.totalorder %s35, 1
      %p373 = por %p371, %p372
      %p375 = scmp.ne.s32.totalorder %s360, %s374
      %p376 = scmp.eq.s32.totalorder %s35, 0
      %p377 = por %p375, %p376
      %s378 = ssub.s32 %s29, %s36
      %p379 = scmp.eq.s32.totalorder %s378, 0
      %s381 = sadd.s32 %s380, 1
      %s382 = scalar_select %p379, %s380, %s381
      %p385 = pneg %p379
      %p386 = scmp.eq.s32.totalorder %s29, 1
      %p387 = por %p385, %p386
      %p388 = scmp.ne.s32.totalorder %s380, %s383
      %p389 = scmp.eq.s32.totalorder %s29, 0
      %p390 = por %p388, %p389
      %p391 = scmp.ne.s32.totalorder %s380, %s383
      %p392 = scmp.eq.s32.totalorder %s34, 1
      %p393 = por %p391, %p392
      %p394 = scmp.ne.s32.totalorder %s383, %s384
      %p395 = scmp.eq.s32.totalorder %s34, 0
      %p396 = por %p394, %p395
      %p397 = scmp.ne.s32.totalorder %s383, %s384
      %p398 = scmp.eq.s32.totalorder %s35, 1
      %p399 = por %p397, %p398
      %p401 = scmp.ne.s32.totalorder %s384, %s400
      %p402 = scmp.eq.s32.totalorder %s35, 0
      %p403 = por %p401, %p402
      %p404 = scmp.le.s32.totalorder 1, %s29
      %p405 = scmp.lt.s32.totalorder %s29, 3
      %p406 = pnand %p404, %p405
      %p407 = pneg %p406
      // Predicated region
      $region9: #{modulated_stack.1} parent=5 // pred_check
        _
      $region10: #{modulated_stack.1} parent=5 // pred_check_branch
        %409 = sbr.rel (%p406) target = $region12
      $region11: #{modulated_stack.1} parent=5 // pred_region
        %s410 = ssub.s32 %s29, 1
        // Predicated region
        $region13: #{modulated_stack.1} parent=11 // pred_check
          %p411 = pneg %p50
        $region14: #{modulated_stack.1} parent=11 // pred_check_branch
          %413 = sbr.rel (%p411) target = $region16
        $region15: #{modulated_stack.1} parent=11 // pred_region
          _
        $region16: #{modulated_stack.1} parent=11 // pred_fallthru
          _
        // Predicated region
        $region17: #{modulated_stack.1} parent=11 // pred_check
          %p414 = pneg %p97
        $region18: #{modulated_stack.1} parent=11 // pred_check_branch
          %416 = sbr.rel (%p414) target = $region20
        $region19: #{modulated_stack.1} parent=11 // pred_region
          _
        $region20: #{modulated_stack.1} parent=11 // pred_fallthru
          _
        // Predicated region
        $region21: #{modulated_stack.1} parent=11 // pred_check
          %p417 = pneg %p118
        $region22: #{modulated_stack.1} parent=11 // pred_check_branch
          %419 = sbr.rel (%p417) target = $region24
        $region23: #{modulated_stack.1} parent=11 // pred_region
          _
        $region24: #{modulated_stack.1} parent=11 // pred_fallthru
          _
        // Predicated region
        $region25: #{modulated_stack.1} parent=11 // pred_check
          %p420 = pneg %p139
        $region26: #{modulated_stack.1} parent=11 // pred_check_branch
          %422 = sbr.rel (%p420) target = $region28
        $region27: #{modulated_stack.1} parent=11 // pred_region
          %s424 = ssub.s32 512, 512
          %425 = vsyncadd [#allocation5], %s424
          %s426 = sshll.u32 [#allocation4], 4
          %s427 = int_to_ptr.vmem [resolvable:$true] %s426
          %432 = dma.hbm_to_vmem [thread:$0]  %s4, 512, %s427, [#allocation5], 64, 64, 4
        $region28: #{modulated_stack.1} parent=11 // pred_fallthru
          _
        // Predicated region
        $region29: #{modulated_stack.1} parent=11 // pred_check
          %p433 = pneg %p160
        $region30: #{modulated_stack.1} parent=11 // pred_check_branch
          %435 = sbr.rel (%p433) target = $region32
        $region31: #{modulated_stack.1} parent=11 // pred_region
          %s437 = ssub.s32 32, 32
          %438 = vsyncadd [#allocation5], %s437
          %s439 = sshll.u32 [#allocation6], 4
          %s440 = int_to_ptr.vmem [resolvable:$true] %s439
          %445 = dma.hbm_to_vmem [thread:$0]  %s5, 32, %s440, [#allocation5], 16, 16, 1
        $region32: #{modulated_stack.1} parent=11 // pred_fallthru
          _
        // Predicated region
        $region33: #{modulated_stack.1} parent=11 // pred_check
          %p446 = pneg %p181
        $region34: #{modulated_stack.1} parent=11 // pred_check_branch
          %448 = sbr.rel (%p446) target = $region36
        $region35: #{modulated_stack.1} parent=11 // pred_region
          _
        $region36: #{modulated_stack.1} parent=11 // pred_fallthru
          _
        // Predicated region
        $region37: #{modulated_stack.1} parent=11 // pred_check
          %p449 = pneg %p202
        $region38: #{modulated_stack.1} parent=11 // pred_check_branch
          %451 = sbr.rel (%p449) target = $region40
        $region39: #{modulated_stack.1} parent=11 // pred_region
          %s453 = ssub.s32 96, 96
          %454 = vsyncadd [#allocation8], %s453
          %s455 = sshll.u32 [#allocation7], 4
          %s456 = int_to_ptr.vmem [resolvable:$true] %s455
          %461 = dma.hbm_to_vmem [thread:$0]  %s7, 96, %s456, [#allocation8], 16, 16, 1
        $region40: #{modulated_stack.1} parent=11 // pred_fallthru
          _
        // Predicated region
        $region41: #{modulated_stack.1} parent=11 // pred_check
          %p462 = pneg %p223
        $region42: #{modulated_stack.1} parent=11 // pred_check_branch
          %464 = sbr.rel (%p462) target = $region44
        $region43: #{modulated_stack.1} parent=11 // pred_region
          %s466 = ssub.s32 256, 256
          %467 = vsyncadd [#allocation8], %s466
          %s468 = sshll.u32 [#allocation9], 4
          %s469 = int_to_ptr.vmem [resolvable:$true] %s468
          %474 = dma.hbm_to_vmem [thread:$0]  %s8, 256, %s469, [#allocation8], 64, 64, 4
        $region44: #{modulated_stack.1} parent=11 // pred_fallthru
          _
        // Predicated region
        $region45: #{modulated_stack.1} parent=11 // pred_check
          %p475 = pneg %p244
        $region46: #{modulated_stack.1} parent=11 // pred_check_branch
          %477 = sbr.rel (%p475) target = $region48
        $region47: #{modulated_stack.1} parent=11 // pred_region
          _
        $region48: #{modulated_stack.1} parent=11 // pred_fallthru
          _
        // Predicated region
        $region49: #{modulated_stack.1} parent=11 // pred_check
          %p478 = pneg %p265
        $region50: #{modulated_stack.1} parent=11 // pred_check_branch
          %480 = sbr.rel (%p478) target = $region52
        $region51: #{modulated_stack.1} parent=11 // pred_region
          %s482 = ssub.s32 48, 48
          %483 = vsyncadd [#allocation11], %s482
          %s484 = sshll.u32 [#allocation10], 4
          %s485 = int_to_ptr.vmem [resolvable:$true] %s484
          %490 = dma.hbm_to_vmem [thread:$0]  %s10, 48, %s485, [#allocation11], 16, 16, 1
        $region52: #{modulated_stack.1} parent=11 // pred_fallthru
          _
        // Predicated region
        $region53: #{modulated_stack.1} parent=11 // pred_check
          %p491 = pneg %p286
        $region54: #{modulated_stack.1} parent=11 // pred_check_branch
          %493 = sbr.rel (%p491) target = $region56
        $region55: #{modulated_stack.1} parent=11 // pred_region
          %s495 = ssub.s32 256, 256
          %496 = vsyncadd [#allocation11], %s495
          %s497 = sshll.u32 [#allocation12], 4
          %s498 = int_to_ptr.vmem [resolvable:$true] %s497
          %503 = dma.hbm_to_vmem [thread:$0]  %s11, 256, %s498, [#allocation11], 64, 64, 4
        $region56: #{modulated_stack.1} parent=11 // pred_fallthru
          _
        // Predicated region
        $region57: #{modulated_stack.1} parent=11 // pred_check
          %p504 = pneg %p307
        $region58: #{modulated_stack.1} parent=11 // pred_check_branch
          %506 = sbr.rel (%p504) target = $region60
        $region59: #{modulated_stack.1} parent=11 // pred_region
          %s508 = ssub.s32 1024, 1024
          %509 = vsyncadd [#allocation14], %s508
          %s510 = sshll.u32 [#allocation13], 4
          %s511 = int_to_ptr.vmem [resolvable:$true] %s510
          %516 = dma.hbm_to_vmem [thread:$0]  %s12, 1024, %s511, [#allocation14], 64, 64, 4
        $region60: #{modulated_stack.1} parent=11 // pred_fallthru
          _
        // Predicated region
        $region61: #{modulated_stack.1} parent=11 // pred_check
          %p517 = pneg %p328
        $region62: #{modulated_stack.1} parent=11 // pred_check_branch
          %519 = sbr.rel (%p517) target = $region64
        $region63: #{modulated_stack.1} parent=11 // pred_region
          %s521 = ssub.s32 48, 48
          %522 = vsyncadd [#allocation14], %s521
          %s523 = sshll.u32 [#allocation15], 4
          %s524 = int_to_ptr.vmem [resolvable:$true] %s523
          %529 = dma.hbm_to_vmem [thread:$0]  %s13, 48, %s524, [#allocation14], 16, 16, 1
        $region64: #{modulated_stack.1} parent=11 // pred_fallthru
          _
        // Predicated region
        $region65: #{modulated_stack.1} parent=11 // pred_check
          %p530 = pneg %p349
        $region66: #{modulated_stack.1} parent=11 // pred_check_branch
          %532 = sbr.rel (%p530) target = $region68
        $region67: #{modulated_stack.1} parent=11 // pred_region
          _
        $region68: #{modulated_stack.1} parent=11 // pred_fallthru
          _
        // Predicated region
        $region69: #{modulated_stack.1} parent=11 // pred_check
          %p533 = pneg %p370
        $region70: #{modulated_stack.1} parent=11 // pred_check_branch
          %535 = sbr.rel (%p533) target = $region72
        $region71: #{modulated_stack.1} parent=11 // pred_region
          _
        $region72: #{modulated_stack.1} parent=11 // pred_fallthru
          _
      $region12: #{modulated_stack.1} parent=5 // pred_fallthru
        _
      %p536 = scmp.lt.s32.totalorder %s29, 2
      // Predicated region
      $region73: #{modulated_stack.1} parent=5 // pred_check
        %p537 = pneg %p536
      $region74: #{modulated_stack.1} parent=5 // pred_check_branch
        %539 = sbr.rel (%p537) target = $region76
      $region75: #{modulated_stack.1} parent=5 // pred_region
        // Predicated region
        $region77: #{modulated_stack.1} parent=75 // pred_check
          %p540 = pneg %p70
        $region78: #{modulated_stack.1} parent=75 // pred_check_branch
          %542 = sbr.rel (%p540) target = $region80
        $region79: #{modulated_stack.1} parent=75 // pred_region
          %s543 = sand.u32 %s60, 1
          %s544 = scalar_lea.sflag [#allocation3], %s543
          %s545 = sand.u32 %s60, 1
          %s546 = scalar_lea.vmem [#allocation2], %s545
          %s548 = ssub.s32 16, 16
          %549 = vsyncadd %s544, %s548
          %s550 = smul.addr %s29, 16
          %s551 = scalar_lea.hbm %s1, %s550
          %s553 = sshll.u32 %s546, 4
          %s554 = int_to_ptr.vmem [resolvable:$true] %s553
          %556 = dma.hbm_to_vmem [thread:$0]  %s551, 16, %s554, %s544
        $region80: #{modulated_stack.1} parent=75 // pred_fallthru
          _
      $region76: #{modulated_stack.1} parent=5 // pred_fallthru
        _
      %p557 = scmp.le.s32.totalorder 1, %s29
      %p558 = scmp.lt.s32.totalorder %s29, 3
      %p559 = pnand %p557, %p558
      %p560 = pneg %p559
      // Predicated region
      $region81: #{modulated_stack.1} parent=5 // pred_check
        _
      $region82: #{modulated_stack.1} parent=5 // pred_check_branch
        %562 = sbr.rel (%p559) target = $region84
      $region83: #{modulated_stack.1} parent=5 // pred_region
        %s563 = ssub.s32 %s29, 1
        %s564 = sand.u32 %s63, 1
        %s565 = scalar_lea.sflag [#allocation3], %s564
        %s566 = sand.u32 %s63, 1
        %s567 = scalar_lea.vmem [#allocation2], %s566
        // Predicated region
        $region85: #{modulated_stack.1} parent=83 // pred_check
          %p568 = pneg %p76
        $region86: #{modulated_stack.1} parent=83 // pred_check_branch
          %570 = sbr.rel (%p568) target = $region88
        $region87: #{modulated_stack.1} parent=83 // pred_region
          %571 = dma.done %s565, 16
        $region88: #{modulated_stack.1} parent=83 // pred_fallthru
          _
        // Predicated region
        $region89: #{modulated_stack.1} parent=83 // pred_check
          %p572 = pneg %p139
        $region90: #{modulated_stack.1} parent=83 // pred_check_branch
          %574 = sbr.rel (%p572) target = $region92
        $region91: #{modulated_stack.1} parent=83 // pred_region
          %575 = dma.done [#allocation5], 512
        $region92: #{modulated_stack.1} parent=83 // pred_fallthru
          _
        // Predicated region
        $region93: #{modulated_stack.1} parent=83 // pred_check
          %p576 = pneg %p160
        $region94: #{modulated_stack.1} parent=83 // pred_check_branch
          %578 = sbr.rel (%p576) target = $region96
        $region95: #{modulated_stack.1} parent=83 // pred_region
          %579 = dma.done [#allocation5], 32
        $region96: #{modulated_stack.1} parent=83 // pred_fallthru
          _
        // Predicated region
        $region97: #{modulated_stack.1} parent=83 // pred_check
          %p580 = pneg %p202
        $region98: #{modulated_stack.1} parent=83 // pred_check_branch
          %582 = sbr.rel (%p580) target = $region100
        $region99: #{modulated_stack.1} parent=83 // pred_region
          %583 = dma.done [#allocation8], 96
        $region100: #{modulated_stack.1} parent=83 // pred_fallthru
          _
        // Predicated region
        $region101: #{modulated_stack.1} parent=83 // pred_check
          %p584 = pneg %p223
        $region102: #{modulated_stack.1} parent=83 // pred_check_branch
          %586 = sbr.rel (%p584) target = $region104
        $region103: #{modulated_stack.1} parent=83 // pred_region
          %587 = dma.done [#allocation8], 256
        $region104: #{modulated_stack.1} parent=83 // pred_fallthru
          _
        // Predicated region
        $region105: #{modulated_stack.1} parent=83 // pred_check
          %p588 = pneg %p265
        $region106: #{modulated_stack.1} parent=83 // pred_check_branch
          %590 = sbr.rel (%p588) target = $region108
        $region107: #{modulated_stack.1} parent=83 // pred_region
          %591 = dma.done [#allocation11], 48
        $region108: #{modulated_stack.1} parent=83 // pred_fallthru
          _
        // Predicated region
        $region109: #{modulated_stack.1} parent=83 // pred_check
          %p592 = pneg %p286
        $region110: #{modulated_stack.1} parent=83 // pred_check_branch
          %594 = sbr.rel (%p592) target = $region112
        $region111: #{modulated_stack.1} parent=83 // pred_region
          %595 = dma.done [#allocation11], 256
        $region112: #{modulated_stack.1} parent=83 // pred_fallthru
          _
        // Predicated region
        $region113: #{modulated_stack.1} parent=83 // pred_check
          %p596 = pneg %p307
        $region114: #{modulated_stack.1} parent=83 // pred_check_branch
          %598 = sbr.rel (%p596) target = $region116
        $region115: #{modulated_stack.1} parent=83 // pred_region
          %599 = dma.done [#allocation14], 1024
        $region116: #{modulated_stack.1} parent=83 // pred_fallthru
          _
        // Predicated region
        $region117: #{modulated_stack.1} parent=83 // pred_check
          %p600 = pneg %p328
        $region118: #{modulated_stack.1} parent=83 // pred_check_branch
          %602 = sbr.rel (%p600) target = $region120
        $region119: #{modulated_stack.1} parent=83 // pred_region
          %603 = dma.done [#allocation14], 48
        $region120: #{modulated_stack.1} parent=83 // pred_fallthru
          _
        %p604 = pneg %p50
        %p605 = pneg %p47
        %s606 = sand.u32 %s63, 1
        %s607 = scalar_lea.sflag [#allocation3], %s606
        %s608 = sand.u32 %s63, 1
        %s609 = scalar_lea.vmem [#allocation2], %s608
        %p610 = pneg %p76
        %p611 = pneg %p73
        %p612 = pneg %p97
        %p613 = pneg %p94
        %p614 = pneg %p118
        %p615 = pneg %p115
        %p616 = pneg %p139
        %p617 = pneg %p136
        %p618 = pneg %p160
        %p619 = pneg %p157
        %p620 = pneg %p181
        %p621 = pneg %p178
        %p622 = pneg %p202
        %p623 = pneg %p199
        %p624 = pneg %p223
        %p625 = pneg %p220
        %p626 = pneg %p244
        %p627 = pneg %p241
        %p628 = pneg %p265
        %p629 = pneg %p262
        %p630 = pneg %p286
        %p631 = pneg %p283
        %p632 = pneg %p307
        %p633 = pneg %p304
        %p634 = pneg %p328
        %p635 = pneg %p325
        %p636 = pneg %p349
        %p637 = pneg %p346
        %p638 = pneg %p370
        %p639 = pneg %p367
        %p640 = pneg %p396
        %p641 = pneg %p393
        %p642 = scmp.lt.s32.totalorder %s34, 1
        %s643 = scalar_select %p642, %s34, 1
        %s644 = smul.addr %s643, 16
        %s645 = smul.addr %s644, 8
        %s646 = scalar_lea.vmem %s16, %s645
        %p647 = scmp.lt.s32.totalorder %s34, 1
        %s648 = scalar_select %p647, %s34, 1
        %s649 = smul.addr %s648, 16
        %s650 = smul.addr %s649, 8
        %s651 = scalar_lea.vmem %s16, %s650
        %v653 = vld [vmem:[%s0] sm:$0xff]
        %v654 = vld [vmem:[%s0 + $0x8] sm:$0xff]
        %v655 = vld [vmem:[%s0 + $0x10] sm:$0xff]
        %v656 = vld [vmem:[%s0 + $0x18] sm:$0xff]
        %v657 = vld [vmem:[%s0 + $0x20] sm:$0xff]
        %v658 = vld [vmem:[%s0 + $0x28] sm:$0xff]
        %v659 = vld [vmem:[%s0 + $0x30] sm:$0xff]
        %v660 = vld [vmem:[%s0 + $0x38] sm:$0xff]
        %v661 = vld [vmem:[%s0 + $0x40] sm:$0xff]
        %v662 = vld [vmem:[%s0 + $0x48] sm:$0xff]
        %v663 = vld [vmem:[%s0 + $0x50] sm:$0xff]
        %v664 = vld [vmem:[%s0 + $0x58] sm:$0xff]
        %v665 = vld [vmem:[%s0 + $0x60] sm:$0xff]
        %v666 = vld [vmem:[%s0 + $0x68] sm:$0xff]
        %v667 = vld [vmem:[%s0 + $0x70] sm:$0xff]
        %v668 = vld [vmem:[%s0 + $0x78] sm:$0xff]
        %v669 = vld [vmem:[%s2] sm:$0xf]
        %v670 = vld [vmem:[%s2 + $0x4] sm:$0xf]
        %v671 = vld [vmem:[%s2 + $0x8] sm:$0xf]
        %v672 = vld [vmem:[%s2 + $0xc] sm:$0xf]
        %v673 = vld [vmem:[%s2 + $0x10] sm:$0x1]
        %v674 = vld [vmem:[%s3] sm:$0x1]
        %v675 = vpack.c.bf16 %v654, %v653
        %v676 = vpack.c.bf16 %v656, %v655
        %v677 = vpack.c.bf16 %v658, %v657
        %v678 = vpack.c.bf16 %v660, %v659
        %v679 = vpack.c.bf16 %v662, %v661
        %v680 = vpack.c.bf16 %v664, %v663
        %v681 = vpack.c.bf16 %v666, %v665
        %v682 = vpack.c.bf16 %v668, %v667
        %v684 = vlaneseq
        %v685 = vshrl.u32 %v684, 7
        %v686 = vsub.s32 0, %v685
        %v687 = vrot.slane %v674, %v686
        %v694 = vunpack.c.l.b16 %v669
        %v695 = vunpack.c.l.b16 %v670
        %v696 = vunpack.c.l.b16 %v671
        %v697 = vunpack.c.l.b16 %v672
        %v698 = vunpack.c.l.b16 %v673
        %v699 = vpack.c.b16 %v695, %v694
        %v700 = vpack.c.b16 %v697, %v696
        %v701 = vpack.c.b16 %v698, %v698
        %vm704 = vcmask 269312
        %v706 = vsel %vm704, %v675, 0
        %v709 = vsel %vm704, %v676, 0
        %v712 = vsel %vm704, %v677, 0
        %v715 = vsel %vm704, %v678, 0
        %v718 = vsel %vm704, %v679, 0
        %v721 = vsel %vm704, %v680, 0
        %v724 = vsel %vm704, %v681, 0
        %v727 = vsel %vm704, %v682, 0
        %vm729 = vcmask 1040384
        %v730 = vsel 0, 4294967295, 65535
        %v731 = vsel %vm729, %v730, 0
        %v733 = vand.u32 %v701, %v731
        %735 = vmatprep.subr.bf16.mxu0 0
        %736 = vmatpush1.bf16.msra.mxu0 %v699
        %737 = vmatprep.subr.bf16.mxu0 0
        %738 = vmatpush1.bf16.msra.mxu0 %v700
        %739 = vmatprep.subr.bf16.mxu0 0
        %740 = vmatpush1.bf16.msra.mxu0 %v733
        %741 = vmatprep.subr.bf16.mxu0 0
        %742 = vmatpush1.bf16.msra.mxu0 0
        %743 = vmatprep.subr.bf16.mxu0 0
        %744 = vmatpush1.bf16.msra.mxu0 0
        %745 = vmatprep.subr.bf16.mxu0 0
        %746 = vmatpush1.bf16.msra.mxu0 0
        %747 = vmatprep.subr.bf16.mxu0 0
        %748 = vmatpush1.bf16.msra.mxu0 0
        %749 = vmatprep.subr.bf16.mxu0 0
        %750 = vmatpush1.bf16.msra.mxu0 0
        %751 = vmatprep.subr.bf16.mxu0 0
        %752 = vmatpush1.bf16.msra.mxu0 0
        %753 = vmatprep.subr.bf16.mxu0 0
        %754 = vmatpush1.bf16.msra.mxu0 0
        %755 = vmatprep.subr.bf16.mxu0 0
        %756 = vmatpush1.bf16.msra.mxu0 0
        %757 = vmatprep.subr.bf16.mxu0 0
        %758 = vmatpush1.bf16.msra.mxu0 0
        %759 = vmatprep.subr.bf16.mxu0 0
        %760 = vmatpush1.bf16.msra.mxu0 0
        %761 = vmatprep.subr.bf16.mxu0 0
        %762 = vmatpush1.bf16.msra.mxu0 0
        %763 = vmatprep.subr.bf16.mxu0 0
        %764 = vmatpush1.bf16.msra.mxu0 0
        %765 = vmatprep.subr.bf16.mxu0 0
        %766 = vmatpush1.bf16.msra.mxu0 0
        %767 = vmatprep.mubr.bf16.mxu0 0
        %768 = vmatmul.mubr.bf16.gmra.mrb[0].mxu0 %v706
        %v769 = vpop.f32.mrb[0].mxu0
        %v770 = vadd.f32 %v687, %v769
        %v771 = vpop.f32.mrb[0].mxu0
        %v772 = vpop.f32.mrb[0].mxu0
        %v773 = vadd.f32 %v687, %v772
        %v774 = vpop.f32.mrb[0].mxu0
        %775 = vmatprep.mubr.bf16.mxu0 0
        %776 = vmatmul.mubr.bf16.gmra.mrb[0].mxu0 %v709
        %v777 = vpop.f32.mrb[0].mxu0
        %v778 = vadd.f32 %v687, %v777
        %v779 = vpop.f32.mrb[0].mxu0
        %v780 = vpop.f32.mrb[0].mxu0
        %v781 = vadd.f32 %v687, %v780
        %v782 = vpop.f32.mrb[0].mxu0
        %783 = vmatprep.mubr.bf16.mxu0 0
        %784 = vmatmul.mubr.bf16.gmra.mrb[0].mxu0 %v712
        %v785 = vpop.f32.mrb[0].mxu0
        %v786 = vadd.f32 %v687, %v785
        %v787 = vpop.f32.mrb[0].mxu0
        %v788 = vpop.f32.mrb[0].mxu0
        %v789 = vadd.f32 %v687, %v788
        %v790 = vpop.f32.mrb[0].mxu0
        %791 = vmatprep.mubr.bf16.mxu0 0
        %792 = vmatmul.mubr.bf16.gmra.mrb[0].mxu0 %v715
        %v793 = vpop.f32.mrb[0].mxu0
        %v794 = vadd.f32 %v687, %v793
        %v795 = vpop.f32.mrb[0].mxu0
        %v796 = vpop.f32.mrb[0].mxu0
        %v797 = vadd.f32 %v687, %v796
        %v798 = vpop.f32.mrb[0].mxu0
        %799 = vmatprep.mubr.bf16.mxu0 0
        %800 = vmatmul.mubr.bf16.gmra.mrb[0].mxu0 %v718
        %v801 = vpop.f32.mrb[0].mxu0
        %v802 = vadd.f32 %v687, %v801
        %v803 = vpop.f32.mrb[0].mxu0
        %v804 = vpop.f32.mrb[0].mxu0
        %v805 = vadd.f32 %v687, %v804
        %v806 = vpop.f32.mrb[0].mxu0
        %807 = vmatprep.mubr.bf16.mxu0 0
        %808 = vmatmul.mubr.bf16.gmra.mrb[0].mxu0 %v721
        %v809 = vpop.f32.mrb[0].mxu0
        %v810 = vadd.f32 %v687, %v809
        %v811 = vpop.f32.mrb[0].mxu0
        %v812 = vpop.f32.mrb[0].mxu0
        %v813 = vadd.f32 %v687, %v812
        %v814 = vpop.f32.mrb[0].mxu0
        %815 = vmatprep.mubr.bf16.mxu0 0
        %816 = vmatmul.mubr.bf16.gmra.mrb[0].mxu0 %v724
        %v817 = vpop.f32.mrb[0].mxu0
        %v818 = vadd.f32 %v687, %v817
        %v819 = vpop.f32.mrb[0].mxu0
        %v820 = vpop.f32.mrb[0].mxu0
        %v821 = vadd.f32 %v687, %v820
        %v822 = vpop.f32.mrb[0].mxu0
        %823 = vmatprep.mubr.bf16.mxu0 0
        %824 = vmatmul.mubr.bf16.gmra.mrb[0].mxu0 %v727
        %v825 = vpop.f32.mrb[0].mxu0
        %v826 = vadd.f32 %v687, %v825
        %v827 = vpop.f32.mrb[0].mxu0
        %v828 = vpop.f32.mrb[0].mxu0
        %v829 = vadd.f32 %v687, %v828
        %v830 = vpop.f32.mrb[0].mxu0
        %831 = vdwg.mxu0
        %vm832 = vcmp.gt.f32.partialorder %v770, 0.0
        %vm833 = vcmp.gt.f32.partialorder %v773, 0.0
        %vm834 = vcmp.gt.f32.partialorder %v778, 0.0
        %vm835 = vcmp.gt.f32.partialorder %v781, 0.0
        %vm836 = vcmp.gt.f32.partialorder %v786, 0.0
        %vm837 = vcmp.gt.f32.partialorder %v789, 0.0
        %vm838 = vcmp.gt.f32.partialorder %v794, 0.0
        %vm839 = vcmp.gt.f32.partialorder %v797, 0.0
        %vm840 = vcmp.gt.f32.partialorder %v802, 0.0
        %vm841 = vcmp.gt.f32.partialorder %v805, 0.0
        %vm842 = vcmp.gt.f32.partialorder %v810, 0.0
        %vm843 = vcmp.gt.f32.partialorder %v813, 0.0
        %vm844 = vcmp.gt.f32.partialorder %v818, 0.0
        %vm845 = vcmp.gt.f32.partialorder %v821, 0.0
        %vm846 = vcmp.gt.f32.partialorder %v826, 0.0
        %vm847 = vcmp.gt.f32.partialorder %v829, 0.0
        %v848 = vmul.f32 %v770, 0.2
        %v849 = vmul.f32 %v773, 0.2
        %v850 = vmul.f32 %v778, 0.2
        %v851 = vmul.f32 %v781, 0.2
        %v852 = vmul.f32 %v786, 0.2
        %v853 = vmul.f32 %v789, 0.2
        %v854 = vmul.f32 %v794, 0.2
        %v855 = vmul.f32 %v797, 0.2
        %v856 = vmul.f32 %v802, 0.2
        %v857 = vmul.f32 %v805, 0.2
        %v858 = vmul.f32 %v810, 0.2
        %v859 = vmul.f32 %v813, 0.2
        %v860 = vmul.f32 %v818, 0.2
        %v861 = vmul.f32 %v821, 0.2
        %v862 = vmul.f32 %v826, 0.2
        %v863 = vmul.f32 %v829, 0.2
        %v864 = vsel %vm832, %v770, %v848
        %v865 = vsel %vm833, %v773, %v849
        %v866 = vsel %vm834, %v778, %v850
        %v867 = vsel %vm835, %v781, %v851
        %v868 = vsel %vm836, %v786, %v852
        %v869 = vsel %vm837, %v789, %v853
        %v870 = vsel %vm838, %v794, %v854
        %v871 = vsel %vm839, %v797, %v855
        %v872 = vsel %vm840, %v802, %v856
        %v873 = vsel %vm841, %v805, %v857
        %v874 = vsel %vm842, %v810, %v858
        %v875 = vsel %vm843, %v813, %v859
        %v876 = vsel %vm844, %v818, %v860
        %v877 = vsel %vm845, %v821, %v861
        %v878 = vsel %vm846, %v826, %v862
        %v879 = vsel %vm847, %v829, %v863
        %v880 = vld [vmem:[#allocation4] sm:$0xf]
        %v881 = vld [vmem:[#allocation4 + $0x4] sm:$0xf]
        %v882 = vld [vmem:[#allocation4 + $0x8] sm:$0xf]
        %v883 = vld [vmem:[#allocation4 + $0xc] sm:$0xf]
        %v884 = vld [vmem:[#allocation6] sm:$0x1]
        %v885 = vpack.c.bf16 %v865, %v864
        %v886 = vpack.c.bf16 %v867, %v866
        %v887 = vpack.c.bf16 %v869, %v868
        %v888 = vpack.c.bf16 %v871, %v870
        %v889 = vpack.c.bf16 %v873, %v872
        %v890 = vpack.c.bf16 %v875, %v874
        %v891 = vpack.c.bf16 %v877, %v876
        %v892 = vpack.c.bf16 %v879, %v878
        %v894 = vlaneseq
        %v895 = vshrl.u32 %v894, 7
        %v896 = vsub.s32 0, %v895
        %v897 = vrot.slane %v884, %v896
        %v903 = vunpack.c.l.b16 %v880
        %v904 = vunpack.c.l.b16 %v881
        %v905 = vunpack.c.l.b16 %v882
        %v906 = vunpack.c.l.b16 %v883
        %v907 = vpack.c.b16 %v904, %v903
        %v908 = vpack.c.b16 %v906, %v905
        %vm911 = vcmask 261120
        %v913 = vsel %vm911, %v885, 0
        %v916 = vsel %vm911, %v886, 0
        %v919 = vsel %vm911, %v887, 0
        %v922 = vsel %vm911, %v888, 0
        %v925 = vsel %vm911, %v889, 0
        %v928 = vsel %vm911, %v890, 0
        %v931 = vsel %vm911, %v891, 0
        %v934 = vsel %vm911, %v892, 0
        %936 = vmatprep.subr.bf16.mxu0 0
        %937 = vmatpush1.bf16.msra.mxu0 %v907
        %938 = vmatprep.subr.bf16.mxu0 0
        %939 = vmatpush1.bf16.msra.mxu0 %v908
        %940 = vmatprep.subr.bf16.mxu0 0
        %941 = vmatpush1.bf16.msra.mxu0 0
        %942 = vmatprep.subr.bf16.mxu0 0
        %943 = vmatpush1.bf16.msra.mxu0 0
        %944 = vmatprep.subr.bf16.mxu0 0
        %945 = vmatpush1.bf16.msra.mxu0 0
        %946 = vmatprep.subr.bf16.mxu0 0
        %947 = vmatpush1.bf16.msra.mxu0 0
        %948 = vmatprep.subr.bf16.mxu0 0
        %949 = vmatpush1.bf16.msra.mxu0 0
        %950 = vmatprep.subr.bf16.mxu0 0
        %951 = vmatpush1.bf16.msra.mxu0 0
        %952 = vmatprep.subr.bf16.mxu0 0
        %953 = vmatpush1.bf16.msra.mxu0 0
        %954 = vmatprep.subr.bf16.mxu0 0
        %955 = vmatpush1.bf16.msra.mxu0 0
        %956 = vmatprep.subr.bf16.mxu0 0
        %957 = vmatpush1.bf16.msra.mxu0 0
        %958 = vmatprep.subr.bf16.mxu0 0
        %959 = vmatpush1.bf16.msra.mxu0 0
        %960 = vmatprep.subr.bf16.mxu0 0
        %961 = vmatpush1.bf16.msra.mxu0 0
        %962 = vmatprep.subr.bf16.mxu0 0
        %963 = vmatpush1.bf16.msra.mxu0 0
        %964 = vmatprep.subr.bf16.mxu0 0
        %965 = vmatpush1.bf16.msra.mxu0 0
        %966 = vmatprep.subr.bf16.mxu0 0
        %967 = vmatpush1.bf16.msra.mxu0 0
        %968 = vmatprep.mubr.bf16.mxu0 0
        %969 = vmatmul.mubr.bf16.gmra.mrb[0].mxu0 %v913
        %v970 = vpop.f32.mrb[0].mxu0
        %v971 = vadd.f32 %v897, %v970
        %v972 = vpop.f32.mrb[0].mxu0
        %v973 = vpop.f32.mrb[0].mxu0
        %v974 = vadd.f32 %v897, %v973
        %v975 = vpop.f32.mrb[0].mxu0
        %976 = vmatprep.mubr.bf16.mxu0 0
        %977 = vmatmul.mubr.bf16.gmra.mrb[0].mxu0 %v916
        %v978 = vpop.f32.mrb[0].mxu0
        %v979 = vadd.f32 %v897, %v978
        %v980 = vpop.f32.mrb[0].mxu0
        %v981 = vpop.f32.mrb[0].mxu0
        %v982 = vadd.f32 %v897, %v981
        %v983 = vpop.f32.mrb[0].mxu0
        %984 = vmatprep.mubr.bf16.mxu0 0
        %985 = vmatmul.mubr.bf16.gmra.mrb[0].mxu0 %v919
        %v986 = vpop.f32.mrb[0].mxu0
        %v987 = vadd.f32 %v897, %v986
        %v988 = vpop.f32.mrb[0].mxu0
        %v989 = vpop.f32.mrb[0].mxu0
        %v990 = vadd.f32 %v897, %v989
        %v991 = vpop.f32.mrb[0].mxu0
        %992 = vmatprep.mubr.bf16.mxu0 0
        %993 = vmatmul.mubr.bf16.gmra.mrb[0].mxu0 %v922
        %v994 = vpop.f32.mrb[0].mxu0
        %v995 = vadd.f32 %v897, %v994
        %v996 = vpop.f32.mrb[0].mxu0
        %v997 = vpop.f32.mrb[0].mxu0
        %v998 = vadd.f32 %v897, %v997
        %v999 = vpop.f32.mrb[0].mxu0
        %1000 = vmatprep.mubr.bf16.mxu0 0
        %1001 = vmatmul.mubr.bf16.gmra.mrb[0].mxu0 %v925
        %v1002 = vpop.f32.mrb[0].mxu0
        %v1003 = vadd.f32 %v897, %v1002
        %v1004 = vpop.f32.mrb[0].mxu0
        %v1005 = vpop.f32.mrb[0].mxu0
        %v1006 = vadd.f32 %v897, %v1005
        %v1007 = vpop.f32.mrb[0].mxu0
        %1008 = vmatprep.mubr.bf16.mxu0 0
        %1009 = vmatmul.mubr.bf16.gmra.mrb[0].mxu0 %v928
        %v1010 = vpop.f32.mrb[0].mxu0
        %v1011 = vadd.f32 %v897, %v1010
        %v1012 = vpop.f32.mrb[0].mxu0
        %v1013 = vpop.f32.mrb[0].mxu0
        %v1014 = vadd.f32 %v897, %v1013
        %v1015 = vpop.f32.mrb[0].mxu0
        %1016 = vmatprep.mubr.bf16.mxu0 0
        %1017 = vmatmul.mubr.bf16.gmra.mrb[0].mxu0 %v931
        %v1018 = vpop.f32.mrb[0].mxu0
        %v1019 = vadd.f32 %v897, %v1018
        %v1020 = vpop.f32.mrb[0].mxu0
        %v1021 = vpop.f32.mrb[0].mxu0
        %v1022 = vadd.f32 %v897, %v1021
        %v1023 = vpop.f32.mrb[0].mxu0
        %1024 = vmatprep.mubr.bf16.mxu0 0
        %1025 = vmatmul.mubr.bf16.gmra.mrb[0].mxu0 %v934
        %v1026 = vpop.f32.mrb[0].mxu0
        %v1027 = vadd.f32 %v897, %v1026
        %v1028 = vpop.f32.mrb[0].mxu0
        %v1029 = vpop.f32.mrb[0].mxu0
        %v1030 = vadd.f32 %v897, %v1029
        %v1031 = vpop.f32.mrb[0].mxu0
        %1032 = vdwg.mxu0
        %vm1033 = vcmp.gt.f32.partialorder %v971, 0.0
        %vm1034 = vcmp.gt.f32.partialorder %v974, 0.0
        %vm1035 = vcmp.gt.f32.partialorder %v979, 0.0
        %vm1036 = vcmp.gt.f32.partialorder %v982, 0.0
        %vm1037 = vcmp.gt.f32.partialorder %v987, 0.0
        %vm1038 = vcmp.gt.f32.partialorder %v990, 0.0
        %vm1039 = vcmp.gt.f32.partialorder %v995, 0.0
        %vm1040 = vcmp.gt.f32.partialorder %v998, 0.0
        %vm1041 = vcmp.gt.f32.partialorder %v1003, 0.0
        %vm1042 = vcmp.gt.f32.partialorder %v1006, 0.0
        %vm1043 = vcmp.gt.f32.partialorder %v1011, 0.0
        %vm1044 = vcmp.gt.f32.partialorder %v1014, 0.0
        %vm1045 = vcmp.gt.f32.partialorder %v1019, 0.0
        %vm1046 = vcmp.gt.f32.partialorder %v1022, 0.0
        %vm1047 = vcmp.gt.f32.partialorder %v1027, 0.0
        %vm1048 = vcmp.gt.f32.partialorder %v1030, 0.0
        %v1049 = vmul.f32 %v971, 0.2
        %v1050 = vmul.f32 %v974, 0.2
        %v1051 = vmul.f32 %v979, 0.2
        %v1052 = vmul.f32 %v982, 0.2
        %v1053 = vmul.f32 %v987, 0.2
        %v1054 = vmul.f32 %v990, 0.2
        %v1055 = vmul.f32 %v995, 0.2
        %v1056 = vmul.f32 %v998, 0.2
        %v1057 = vmul.f32 %v1003, 0.2
        %v1058 = vmul.f32 %v1006, 0.2
        %v1059 = vmul.f32 %v1011, 0.2
        %v1060 = vmul.f32 %v1014, 0.2
        %v1061 = vmul.f32 %v1019, 0.2
        %v1062 = vmul.f32 %v1022, 0.2
        %v1063 = vmul.f32 %v1027, 0.2
        %v1064 = vmul.f32 %v1030, 0.2
        %v1065 = vsel %vm1033, %v971, %v1049
        %v1066 = vsel %vm1034, %v974, %v1050
        %v1067 = vsel %vm1035, %v979, %v1051
        %v1068 = vsel %vm1036, %v982, %v1052
        %v1069 = vsel %vm1037, %v987, %v1053
        %v1070 = vsel %vm1038, %v990, %v1054
        %v1071 = vsel %vm1039, %v995, %v1055
        %v1072 = vsel %vm1040, %v998, %v1056
        %v1073 = vsel %vm1041, %v1003, %v1057
        %v1074 = vsel %vm1042, %v1006, %v1058
        %v1075 = vsel %vm1043, %v1011, %v1059
        %v1076 = vsel %vm1044, %v1014, %v1060
        %v1077 = vsel %vm1045, %v1019, %v1061
        %v1078 = vsel %vm1046, %v1022, %v1062
        %v1079 = vsel %vm1047, %v1027, %v1063
        %v1080 = vsel %vm1048, %v1030, %v1064
        %s1081 = scalar_lea.vmem [#allocation4], 16
        %v1082 = vld [vmem:[%s1081] sm:$0xf]
        %v1083 = vld [vmem:[%s1081 + $0x4] sm:$0xf]
        %v1084 = vld [vmem:[%s1081 + $0x8] sm:$0xf]
        %v1085 = vld [vmem:[%s1081 + $0xc] sm:$0xf]
        %s1086 = scalar_lea.vmem [#allocation6], 1
        %v1087 = vld [vmem:[%s1086] sm:$0x1]
        %v1088 = vpack.c.bf16 %v1066, %v1065
        %v1089 = vpack.c.bf16 %v1068, %v1067
        %v1090 = vpack.c.bf16 %v1070, %v1069
        %v1091 = vpack.c.bf16 %v1072, %v1071
        %v1092 = vpack.c.bf16 %v1074, %v1073
        %v1093 = vpack.c.bf16 %v1076, %v1075
        %v1094 = vpack.c.bf16 %v1078, %v1077
        %v1095 = vpack.c.bf16 %v1080, %v1079
        %v1097 = vlaneseq
        %v1098 = vshrl.u32 %v1097, 7
        %v1099 = vsub.s32 0, %v1098
        %v1100 = vrot.slane %v1087, %v1099
        %v1106 = vunpack.c.l.b16 %v1082
        %v1107 = vunpack.c.l.b16 %v1083
        %v1108 = vunpack.c.l.b16 %v1084
        %v1109 = vunpack.c.l.b16 %v1085
        %v1110 = vpack.c.b16 %v1107, %v1106
        %v1111 = vpack.c.b16 %v1109, %v1108
        %v1115 = vsel %vm911, %v1088, 0
        %v1118 = vsel %vm911, %v1089, 0
        %v1121 = vsel %vm911, %v1090, 0
        %v1124 = vsel %vm911, %v1091, 0
        %v1127 = vsel %vm911, %v1092, 0
        %v1130 = vsel %vm911, %v1093, 0
        %v1133 = vsel %vm911, %v1094, 0
        %v1136 = vsel %vm911, %v1095, 0
        %1138 = vmatprep.subr.bf16.mxu0 0
        %1139 = vmatpush1.bf16.msra.mxu0 %v1110
        %1140 = vmatprep.subr.bf16.mxu0 0
        %1141 = vmatpush1.bf16.msra.mxu0 %v1111
        %1142 = vmatprep.subr.bf16.mxu0 0
        %1143 = vmatpush1.bf16.msra.mxu0 0
        %1144 = vmatprep.subr.bf16.mxu0 0
        %1145 = vmatpush1.bf16.msra.mxu0 0
        %1146 = vmatprep.subr.bf16.mxu0 0
        %1147 = vmatpush1.bf16.msra.mxu0 0
        %1148 = vmatprep.subr.bf16.mxu0 0
        %1149 = vmatpush1.bf16.msra.mxu0 0
        %1150 = vmatprep.subr.bf16.mxu0 0
        %1151 = vmatpush1.bf16.msra.mxu0 0
        %1152 = vmatprep.subr.bf16.mxu0 0
        %1153 = vmatpush1.bf16.msra.mxu0 0
        %1154 = vmatprep.subr.bf16.mxu0 0
        %1155 = vmatpush1.bf16.msra.mxu0 0
        %1156 = vmatprep.subr.bf16.mxu0 0
        %1157 = vmatpush1.bf16.msra.mxu0 0
        %1158 = vmatprep.subr.bf16.mxu0 0
        %1159 = vmatpush1.bf16.msra.mxu0 0
        %1160 = vmatprep.subr.bf16.mxu0 0
        %1161 = vmatpush1.bf16.msra.mxu0 0
        %1162 = vmatprep.subr.bf16.mxu0 0
        %1163 = vmatpush1.bf16.msra.mxu0 0
        %1164 = vmatprep.subr.bf16.mxu0 0
        %1165 = vmatpush1.bf16.msra.mxu0 0
        %1166 = vmatprep.subr.bf16.mxu0 0
        %1167 = vmatpush1.bf16.msra.mxu0 0
        %1168 = vmatprep.subr.bf16.mxu0 0
        %1169 = vmatpush1.bf16.msra.mxu0 0
        %1170 = vmatprep.mubr.bf16.mxu0 0
        %1171 = vmatmul.mubr.bf16.gmra.mrb[0].mxu0 %v1115
        %v1172 = vpop.f32.mrb[0].mxu0
        %v1173 = vadd.f32 %v1100, %v1172
        %v1174 = vpop.f32.mrb[0].mxu0
        %v1175 = vpop.f32.mrb[0].mxu0
        %v1176 = vadd.f32 %v1100, %v1175
        %v1177 = vpop.f32.mrb[0].mxu0
        %1178 = vmatprep.mubr.bf16.mxu0 0
        %1179 = vmatmul.mubr.bf16.gmra.mrb[0].mxu0 %v1118
        %v1180 = vpop.f32.mrb[0].mxu0
        %v1181 = vadd.f32 %v1100, %v1180
        %v1182 = vpop.f32.mrb[0].mxu0
        %v1183 = vpop.f32.mrb[0].mxu0
        %v1184 = vadd.f32 %v1100, %v1183
        %v1185 = vpop.f32.mrb[0].mxu0
        %1186 = vmatprep.mubr.bf16.mxu0 0
        %1187 = vmatmul.mubr.bf16.gmra.mrb[0].mxu0 %v1121
        %v1188 = vpop.f32.mrb[0].mxu0
        %v1189 = vadd.f32 %v1100, %v1188
        %v1190 = vpop.f32.mrb[0].mxu0
        %v1191 = vpop.f32.mrb[0].mxu0
        %v1192 = vadd.f32 %v1100, %v1191
        %v1193 = vpop.f32.mrb[0].mxu0
        %1194 = vmatprep.mubr.bf16.mxu0 0
        %1195 = vmatmul.mubr.bf16.gmra.mrb[0].mxu0 %v1124
        %v1196 = vpop.f32.mrb[0].mxu0
        %v1197 = vadd.f32 %v1100, %v1196
        %v1198 = vpop.f32.mrb[0].mxu0
        %v1199 = vpop.f32.mrb[0].mxu0
        %v1200 = vadd.f32 %v1100, %v1199
        %v1201 = vpop.f32.mrb[0].mxu0
        %1202 = vmatprep.mubr.bf16.mxu0 0
        %1203 = vmatmul.mubr.bf16.gmra.mrb[0].mxu0 %v1127
        %v1204 = vpop.f32.mrb[0].mxu0
        %v1205 = vadd.f32 %v1100, %v1204
        %v1206 = vpop.f32.mrb[0].mxu0
        %v1207 = vpop.f32.mrb[0].mxu0
        %v1208 = vadd.f32 %v1100, %v1207
        %v1209 = vpop.f32.mrb[0].mxu0
        %1210 = vmatprep.mubr.bf16.mxu0 0
        %1211 = vmatmul.mubr.bf16.gmra.mrb[0].mxu0 %v1130
        %v1212 = vpop.f32.mrb[0].mxu0
        %v1213 = vadd.f32 %v1100, %v1212
        %v1214 = vpop.f32.mrb[0].mxu0
        %v1215 = vpop.f32.mrb[0].mxu0
        %v1216 = vadd.f32 %v1100, %v1215
        %v1217 = vpop.f32.mrb[0].mxu0
        %1218 = vmatprep.mubr.bf16.mxu0 0
        %1219 = vmatmul.mubr.bf16.gmra.mrb[0].mxu0 %v1133
        %v1220 = vpop.f32.mrb[0].mxu0
        %v1221 = vadd.f32 %v1100, %v1220
        %v1222 = vpop.f32.mrb[0].mxu0
        %v1223 = vpop.f32.mrb[0].mxu0
        %v1224 = vadd.f32 %v1100, %v1223
        %v1225 = vpop.f32.mrb[0].mxu0
        %1226 = vmatprep.mubr.bf16.mxu0 0
        %1227 = vmatmul.mubr.bf16.gmra.mrb[0].mxu0 %v1136
        %v1228 = vpop.f32.mrb[0].mxu0
        %v1229 = vadd.f32 %v1100, %v1228
        %v1230 = vpop.f32.mrb[0].mxu0
        %v1231 = vpop.f32.mrb[0].mxu0
        %v1232 = vadd.f32 %v1100, %v1231
        %v1233 = vpop.f32.mrb[0].mxu0
        %1234 = vdwg.mxu0
        %v1235 = vld [vmem:[%s567] sm:$0x1]
        %v1236 = vld [vmem:[#allocation9] sm:$0xf]
        %v1237 = vld [vmem:[#allocation9 + $0x4] sm:$0xf]
        %v1238 = vld [vmem:[#allocation9 + $0x8] sm:$0xf]
        %v1239 = vld [vmem:[#allocation9 + $0xc] sm:$0xf]
        %v1240 = vld [vmem:[#allocation10] sm:$0x1]
        %v1241 = vpack.c.bf16 %v1235, %v1235
        %v1246 = vunpack.c.l.b16 %v1236
        %v1247 = vunpack.c.l.b16 %v1237
        %v1248 = vunpack.c.l.b16 %v1238
        %v1249 = vunpack.c.l.b16 %v1239
        %v1250 = vpack.c.b16 %v1247, %v1246
        %v1251 = vpack.c.b16 %v1249, %v1248
        %v1255 = vsel %vm911, %v1241, 0
        %1257 = vmatprep.subr.bf16.mxu0 0
        %1258 = vmatpush1.bf16.msra.mxu0 %v1250
        %1259 = vmatprep.subr.bf16.mxu0 0
        %1260 = vmatpush1.bf16.msra.mxu0 %v1251
        %1261 = vmatprep.subr.bf16.mxu0 0
        %1262 = vmatpush1.bf16.msra.mxu0 0
        %1263 = vmatprep.subr.bf16.mxu0 0
        %1264 = vmatpush1.bf16.msra.mxu0 0
        %1265 = vmatprep.subr.bf16.mxu0 0
        %1266 = vmatpush1.bf16.msra.mxu0 0
        %1267 = vmatprep.subr.bf16.mxu0 0
        %1268 = vmatpush1.bf16.msra.mxu0 0
        %1269 = vmatprep.subr.bf16.mxu0 0
        %1270 = vmatpush1.bf16.msra.mxu0 0
        %1271 = vmatprep.subr.bf16.mxu0 0
        %1272 = vmatpush1.bf16.msra.mxu0 0
        %1273 = vmatprep.subr.bf16.mxu0 0
        %1274 = vmatpush1.bf16.msra.mxu0 0
        %1275 = vmatprep.subr.bf16.mxu0 0
        %1276 = vmatpush1.bf16.msra.mxu0 0
        %1277 = vmatprep.subr.bf16.mxu0 0
        %1278 = vmatpush1.bf16.msra.mxu0 0
        %1279 = vmatprep.subr.bf16.mxu0 0
        %1280 = vmatpush1.bf16.msra.mxu0 0
        %1281 = vmatprep.subr.bf16.mxu0 0
        %1282 = vmatpush1.bf16.msra.mxu0 0
        %1283 = vmatprep.subr.bf16.mxu0 0
        %1284 = vmatpush1.bf16.msra.mxu0 0
        %1285 = vmatprep.subr.bf16.mxu0 0
        %1286 = vmatpush1.bf16.msra.mxu0 0
        %1287 = vmatprep.subr.bf16.mxu0 0
        %1288 = vmatpush1.bf16.msra.mxu0 0
        %1289 = vmatprep.mubr.bf16.mxu0 0
        %1290 = vmatmul.mubr.bf16.gmra.mrb[0].mxu0 %v1255
        %v1291 = vpop.f32.mrb[0].mxu0
        %v1292 = vadd.f32 %v1240, %v1291
        %v1293 = vpop.f32.mrb[0].mxu0
        %v1294 = vpop.f32.mrb[0].mxu0
        %v1295 = vpop.f32.mrb[0].mxu0
        %1296 = vdwg.mxu0
        %vm1297 = vcmp.gt.f32.partialorder %v1292, 0.0
        %v1298 = vmul.f32 %v1292, 0.2
        %v1299 = vsel %vm1297, %v1292, %v1298
        %v1300 = vld [vmem:[%s9] sm:$0xf]
        %v1301 = vld [vmem:[%s9 + $0x4] sm:$0xf]
        %v1302 = vld [vmem:[%s9 + $0x8] sm:$0xf]
        %v1303 = vld [vmem:[%s9 + $0xc] sm:$0xf]
        %v1304 = vld [vmem:[%s9 + $0x10] sm:$0xf]
        %v1305 = vld [vmem:[%s9 + $0x14] sm:$0xf]
        %v1306 = vld [vmem:[%s9 + $0x18] sm:$0xf]
        %v1307 = vld [vmem:[%s9 + $0x1c] sm:$0xf]
        %v1308 = vld [vmem:[%s9 + $0x20] sm:$0xf]
        %v1309 = vld [vmem:[%s9 + $0x24] sm:$0xf]
        %v1310 = vld [vmem:[%s9 + $0x28] sm:$0xf]
        %v1311 = vld [vmem:[%s9 + $0x2c] sm:$0xf]
        %v1312 = vld [vmem:[%s9 + $0x30] sm:$0xf]
        %v1313 = vld [vmem:[%s9 + $0x34] sm:$0xf]
        %v1314 = vld [vmem:[%s9 + $0x38] sm:$0xf]
        %v1315 = vld [vmem:[%s9 + $0x3c] sm:$0xf]
        %s1316 = scalar_lea.vmem [#allocation10], 1
        %v1317 = vld [vmem:[%s1316] sm:$0x1]
        %v1318 = vpack.c.bf16 %v1299, %v1299
        %v1335 = vunpack.c.l.b16 %v1300
        %v1336 = vunpack.c.l.b16 %v1301
        %v1337 = vunpack.c.l.b16 %v1302
        %v1338 = vunpack.c.l.b16 %v1303
        %v1339 = vunpack.c.l.b16 %v1304
        %v1340 = vunpack.c.l.b16 %v1305
        %v1341 = vunpack.c.l.b16 %v1306
        %v1342 = vunpack.c.l.b16 %v1307
        %v1343 = vunpack.c.l.b16 %v1308
        %v1344 = vunpack.c.l.b16 %v1309
        %v1345 = vunpack.c.l.b16 %v1310
        %v1346 = vunpack.c.l.b16 %v1311
        %v1347 = vunpack.c.l.b16 %v1312
        %v1348 = vunpack.c.l.b16 %v1313
        %v1349 = vunpack.c.l.b16 %v1314
        %v1350 = vunpack.c.l.b16 %v1315
        %v1351 = vpack.c.b16 %v1336, %v1335
        %v1352 = vpack.c.b16 %v1338, %v1337
        %v1353 = vpack.c.b16 %v1340, %v1339
        %v1354 = vpack.c.b16 %v1342, %v1341
        %v1355 = vpack.c.b16 %v1344, %v1343
        %v1356 = vpack.c.b16 %v1346, %v1345
        %v1357 = vpack.c.b16 %v1348, %v1347
        %v1358 = vpack.c.b16 %v1350, %v1349
        %1367 = vmatprep.subr.bf16.mxu0 0
        %1368 = vmatpush1.bf16.msra.mxu0 %v1351
        %1369 = vmatprep.subr.bf16.mxu0 0
        %1370 = vmatpush1.bf16.msra.mxu0 %v1352
        %1371 = vmatprep.subr.bf16.mxu0 0
        %1372 = vmatpush1.bf16.msra.mxu0 %v1353
        %1373 = vmatprep.subr.bf16.mxu0 0
        %1374 = vmatpush1.bf16.msra.mxu0 %v1354
        %1375 = vmatprep.subr.bf16.mxu0 0
        %1376 = vmatpush1.bf16.msra.mxu0 %v1355
        %1377 = vmatprep.subr.bf16.mxu0 0
        %1378 = vmatpush1.bf16.msra.mxu0 %v1356
        %1379 = vmatprep.subr.bf16.mxu0 0
        %1380 = vmatpush1.bf16.msra.mxu0 %v1357
        %1381 = vmatprep.subr.bf16.mxu0 0
        %1382 = vmatpush1.bf16.msra.mxu0 %v1358
        %1383 = vmatprep.subr.bf16.mxu0 0
        %1384 = vmatpush1.bf16.msra.mxu0 0
        %1385 = vmatprep.subr.bf16.mxu0 0
        %1386 = vmatpush1.bf16.msra.mxu0 0
        %1387 = vmatprep.subr.bf16.mxu0 0
        %1388 = vmatpush1.bf16.msra.mxu0 0
        %1389 = vmatprep.subr.bf16.mxu0 0
        %1390 = vmatpush1.bf16.msra.mxu0 0
        %1391 = vmatprep.subr.bf16.mxu0 0
        %1392 = vmatpush1.bf16.msra.mxu0 0
        %1393 = vmatprep.subr.bf16.mxu0 0
        %1394 = vmatpush1.bf16.msra.mxu0 0
        %1395 = vmatprep.subr.bf16.mxu0 0
        %1396 = vmatpush1.bf16.msra.mxu0 0
        %1397 = vmatprep.subr.bf16.mxu0 0
        %1398 = vmatpush1.bf16.msra.mxu0 0
        %1399 = vmatprep.mubr.bf16.mxu0 0
        %1400 = vmatmul.mubr.bf16.gmra.mrb[0].mxu0 %v1318
        %v1401 = vpop.f32.mrb[0].mxu0
        %v1402 = vadd.f32 %v1317, %v1401
        %v1403 = vpop.f32.mrb[0].mxu0
        %v1404 = vpop.f32.mrb[0].mxu0
        %v1405 = vpop.f32.mrb[0].mxu0
        %1406 = vdwg.mxu0
        %vm1407 = vcmp.gt.f32.partialorder %v1402, 0.0
        %v1408 = vmul.f32 %v1402, 0.2
        %v1409 = vsel %vm1407, %v1402, %v1408
        %s1410 = scalar_lea.vmem %s9, 64
        %v1411 = vld [vmem:[%s1410] sm:$0xf]
        %v1412 = vld [vmem:[%s1410 + $0x4] sm:$0xf]
        %v1413 = vld [vmem:[%s1410 + $0x8] sm:$0xf]
        %v1414 = vld [vmem:[%s1410 + $0xc] sm:$0xf]
        %v1415 = vld [vmem:[%s1410 + $0x10] sm:$0xf]
        %v1416 = vld [vmem:[%s1410 + $0x14] sm:$0xf]
        %v1417 = vld [vmem:[%s1410 + $0x18] sm:$0xf]
        %v1418 = vld [vmem:[%s1410 + $0x1c] sm:$0xf]
        %v1419 = vld [vmem:[%s1410 + $0x20] sm:$0xf]
        %v1420 = vld [vmem:[%s1410 + $0x24] sm:$0xf]
        %v1421 = vld [vmem:[%s1410 + $0x28] sm:$0xf]
        %v1422 = vld [vmem:[%s1410 + $0x2c] sm:$0xf]
        %v1423 = vld [vmem:[%s1410 + $0x30] sm:$0xf]
        %v1424 = vld [vmem:[%s1410 + $0x34] sm:$0xf]
        %v1425 = vld [vmem:[%s1410 + $0x38] sm:$0xf]
        %v1426 = vld [vmem:[%s1410 + $0x3c] sm:$0xf]
        %s1427 = scalar_lea.vmem [#allocation10], 2
        %v1428 = vld [vmem:[%s1427] sm:$0x1]
        %v1429 = vpack.c.bf16 %v1409, %v1409
        %v1446 = vunpack.c.l.b16 %v1411
        %v1447 = vunpack.c.l.b16 %v1412
        %v1448 = vunpack.c.l.b16 %v1413
        %v1449 = vunpack.c.l.b16 %v1414
        %v1450 = vunpack.c.l.b16 %v1415
        %v1451 = vunpack.c.l.b16 %v1416
        %v1452 = vunpack.c.l.b16 %v1417
        %v1453 = vunpack.c.l.b16 %v1418
        %v1454 = vunpack.c.l.b16 %v1419
        %v1455 = vunpack.c.l.b16 %v1420
        %v1456 = vunpack.c.l.b16 %v1421
        %v1457 = vunpack.c.l.b16 %v1422
        %v1458 = vunpack.c.l.b16 %v1423
        %v1459 = vunpack.c.l.b16 %v1424
        %v1460 = vunpack.c.l.b16 %v1425
        %v1461 = vunpack.c.l.b16 %v1426
        %v1462 = vpack.c.b16 %v1447, %v1446
        %v1463 = vpack.c.b16 %v1449, %v1448
        %v1464 = vpack.c.b16 %v1451, %v1450
        %v1465 = vpack.c.b16 %v1453, %v1452
        %v1466 = vpack.c.b16 %v1455, %v1454
        %v1467 = vpack.c.b16 %v1457, %v1456
        %v1468 = vpack.c.b16 %v1459, %v1458
        %v1469 = vpack.c.b16 %v1461, %v1460
        %1478 = vmatprep.subr.bf16.mxu0 0
        %1479 = vmatpush1.bf16.msra.mxu0 %v1462
        %1480 = vmatprep.subr.bf16.mxu0 0
        %1481 = vmatpush1.bf16.msra.mxu0 %v1463
        %1482 = vmatprep.subr.bf16.mxu0 0
        %1483 = vmatpush1.bf16.msra.mxu0 %v1464
        %1484 = vmatprep.subr.bf16.mxu0 0
        %1485 = vmatpush1.bf16.msra.mxu0 %v1465
        %1486 = vmatprep.subr.bf16.mxu0 0
        %1487 = vmatpush1.bf16.msra.mxu0 %v1466
        %1488 = vmatprep.subr.bf16.mxu0 0
        %1489 = vmatpush1.bf16.msra.mxu0 %v1467
        %1490 = vmatprep.subr.bf16.mxu0 0
        %1491 = vmatpush1.bf16.msra.mxu0 %v1468
        %1492 = vmatprep.subr.bf16.mxu0 0
        %1493 = vmatpush1.bf16.msra.mxu0 %v1469
        %1494 = vmatprep.subr.bf16.mxu0 0
        %1495 = vmatpush1.bf16.msra.mxu0 0
        %1496 = vmatprep.subr.bf16.mxu0 0
        %1497 = vmatpush1.bf16.msra.mxu0 0
        %1498 = vmatprep.subr.bf16.mxu0 0
        %1499 = vmatpush1.bf16.msra.mxu0 0
        %1500 = vmatprep.subr.bf16.mxu0 0
        %1501 = vmatpush1.bf16.msra.mxu0 0
        %1502 = vmatprep.subr.bf16.mxu0 0
        %1503 = vmatpush1.bf16.msra.mxu0 0
        %1504 = vmatprep.subr.bf16.mxu0 0
        %1505 = vmatpush1.bf16.msra.mxu0 0
        %1506 = vmatprep.subr.bf16.mxu0 0
        %1507 = vmatpush1.bf16.msra.mxu0 0
        %1508 = vmatprep.subr.bf16.mxu0 0
        %1509 = vmatpush1.bf16.msra.mxu0 0
        %1510 = vmatprep.mubr.bf16.mxu0 0
        %1511 = vmatmul.mubr.bf16.gmra.mrb[0].mxu0 %v1429
        %v1512 = vpop.f32.mrb[0].mxu0
        %v1513 = vadd.f32 %v1428, %v1512
        %v1514 = vpop.f32.mrb[0].mxu0
        %v1515 = vpop.f32.mrb[0].mxu0
        %v1516 = vpop.f32.mrb[0].mxu0
        %1517 = vdwg.mxu0
        %v1518 = vld [vmem:[%s6] sm:$0xf]
        %v1519 = vld [vmem:[%s6 + $0x4] sm:$0xf]
        %v1520 = vld [vmem:[%s6 + $0x8] sm:$0xf]
        %v1521 = vld [vmem:[%s6 + $0xc] sm:$0xf]
        %v1522 = vld [vmem:[#allocation7] sm:$0x1]
        %v1523 = vpack.c.bf16 %v1176, %v1173
        %v1524 = vpack.c.bf16 %v1184, %v1181
        %v1525 = vpack.c.bf16 %v1192, %v1189
        %v1526 = vpack.c.bf16 %v1200, %v1197
        %v1527 = vpack.c.bf16 %v1208, %v1205
        %v1528 = vpack.c.bf16 %v1216, %v1213
        %v1529 = vpack.c.bf16 %v1224, %v1221
        %v1530 = vpack.c.bf16 %v1232, %v1229
        %v1532 = vlaneseq
        %v1533 = vshrl.u32 %v1532, 7
        %v1534 = vsub.s32 0, %v1533
        %v1535 = vrot.slane %v1522, %v1534
        %v1541 = vunpack.c.l.b16 %v1518
        %v1542 = vunpack.c.l.b16 %v1519
        %v1543 = vunpack.c.l.b16 %v1520
        %v1544 = vunpack.c.l.b16 %v1521
        %v1545 = vpack.c.b16 %v1542, %v1541
        %v1546 = vpack.c.b16 %v1544, %v1543
        %v1550 = vsel %vm911, %v1523, 0
        %v1553 = vsel %vm911, %v1524, 0
        %v1556 = vsel %vm911, %v1525, 0
        %v1559 = vsel %vm911, %v1526, 0
        %v1562 = vsel %vm911, %v1527, 0
        %v1565 = vsel %vm911, %v1528, 0
        %v1568 = vsel %vm911, %v1529, 0
        %v1571 = vsel %vm911, %v1530, 0
        %1573 = vmatprep.subr.bf16.mxu0 0
        %1574 = vmatpush1.bf16.msra.mxu0 %v1545
        %1575 = vmatprep.subr.bf16.mxu0 0
        %1576 = vmatpush1.bf16.msra.mxu0 %v1546
        %1577 = vmatprep.subr.bf16.mxu0 0
        %1578 = vmatpush1.bf16.msra.mxu0 0
        %1579 = vmatprep.subr.bf16.mxu0 0
        %1580 = vmatpush1.bf16.msra.mxu0 0
        %1581 = vmatprep.subr.bf16.mxu0 0
        %1582 = vmatpush1.bf16.msra.mxu0 0
        %1583 = vmatprep.subr.bf16.mxu0 0
        %1584 = vmatpush1.bf16.msra.mxu0 0
        %1585 = vmatprep.subr.bf16.mxu0 0
        %1586 = vmatpush1.bf16.msra.mxu0 0
        %1587 = vmatprep.subr.bf16.mxu0 0
        %1588 = vmatpush1.bf16.msra.mxu0 0
        %1589 = vmatprep.subr.bf16.mxu0 0
        %1590 = vmatpush1.bf16.msra.mxu0 0
        %1591 = vmatprep.subr.bf16.mxu0 0
        %1592 = vmatpush1.bf16.msra.mxu0 0
        %1593 = vmatprep.subr.bf16.mxu0 0
        %1594 = vmatpush1.bf16.msra.mxu0 0
        %1595 = vmatprep.subr.bf16.mxu0 0
        %1596 = vmatpush1.bf16.msra.mxu0 0
        %1597 = vmatprep.subr.bf16.mxu0 0
        %1598 = vmatpush1.bf16.msra.mxu0 0
        %1599 = vmatprep.subr.bf16.mxu0 0
        %1600 = vmatpush1.bf16.msra.mxu0 0
        %1601 = vmatprep.subr.bf16.mxu0 0
        %1602 = vmatpush1.bf16.msra.mxu0 0
        %1603 = vmatprep.subr.bf16.mxu0 0
        %1604 = vmatpush1.bf16.msra.mxu0 0
        %1605 = vmatprep.mubr.bf16.mxu0 0
        %1606 = vmatmul.mubr.bf16.gmra.mrb[0].mxu0 %v1550
        %v1607 = vpop.f32.mrb[0].mxu0
        %v1608 = vadd.f32 %v1535, %v1607
        %v1609 = vpop.f32.mrb[0].mxu0
        %v1610 = vpop.f32.mrb[0].mxu0
        %v1611 = vadd.f32 %v1535, %v1610
        %v1612 = vpop.f32.mrb[0].mxu0
        %1613 = vmatprep.mubr.bf16.mxu0 0
        %1614 = vmatmul.mubr.bf16.gmra.mrb[0].mxu0 %v1553
        %v1615 = vpop.f32.mrb[0].mxu0
        %v1616 = vadd.f32 %v1535, %v1615
        %v1617 = vpop.f32.mrb[0].mxu0
        %v1618 = vpop.f32.mrb[0].mxu0
        %v1619 = vadd.f32 %v1535, %v1618
        %v1620 = vpop.f32.mrb[0].mxu0
        %1621 = vmatprep.mubr.bf16.mxu0 0
        %1622 = vmatmul.mubr.bf16.gmra.mrb[0].mxu0 %v1556
        %v1623 = vpop.f32.mrb[0].mxu0
        %v1624 = vadd.f32 %v1535, %v1623
        %v1625 = vpop.f32.mrb[0].mxu0
        %v1626 = vpop.f32.mrb[0].mxu0
        %v1627 = vadd.f32 %v1535, %v1626
        %v1628 = vpop.f32.mrb[0].mxu0
        %1629 = vmatprep.mubr.bf16.mxu0 0
        %1630 = vmatmul.mubr.bf16.gmra.mrb[0].mxu0 %v1559
        %v1631 = vpop.f32.mrb[0].mxu0
        %v1632 = vadd.f32 %v1535, %v1631
        %v1633 = vpop.f32.mrb[0].mxu0
        %v1634 = vpop.f32.mrb[0].mxu0
        %v1635 = vadd.f32 %v1535, %v1634
        %v1636 = vpop.f32.mrb[0].mxu0
        %1637 = vmatprep.mubr.bf16.mxu0 0
        %1638 = vmatmul.mubr.bf16.gmra.mrb[0].mxu0 %v1562
        %v1639 = vpop.f32.mrb[0].mxu0
        %v1640 = vadd.f32 %v1535, %v1639
        %v1641 = vpop.f32.mrb[0].mxu0
        %v1642 = vpop.f32.mrb[0].mxu0
        %v1643 = vadd.f32 %v1535, %v1642
        %v1644 = vpop.f32.mrb[0].mxu0
        %1645 = vmatprep.mubr.bf16.mxu0 0
        %1646 = vmatmul.mubr.bf16.gmra.mrb[0].mxu0 %v1565
        %v1647 = vpop.f32.mrb[0].mxu0
        %v1648 = vadd.f32 %v1535, %v1647
        %v1649 = vpop.f32.mrb[0].mxu0
        %v1650 = vpop.f32.mrb[0].mxu0
        %v1651 = vadd.f32 %v1535, %v1650
        %v1652 = vpop.f32.mrb[0].mxu0
        %1653 = vmatprep.mubr.bf16.mxu0 0
        %1654 = vmatmul.mubr.bf16.gmra.mrb[0].mxu0 %v1568
        %v1655 = vpop.f32.mrb[0].mxu0
        %v1656 = vadd.f32 %v1535, %v1655
        %v1657 = vpop.f32.mrb[0].mxu0
        %v1658 = vpop.f32.mrb[0].mxu0
        %v1659 = vadd.f32 %v1535, %v1658
        %v1660 = vpop.f32.mrb[0].mxu0
        %1661 = vmatprep.mubr.bf16.mxu0 0
        %1662 = vmatmul.mubr.bf16.gmra.mrb[0].mxu0 %v1571
        %v1663 = vpop.f32.mrb[0].mxu0
        %v1664 = vadd.f32 %v1535, %v1663
        %v1665 = vpop.f32.mrb[0].mxu0
        %v1666 = vpop.f32.mrb[0].mxu0
        %v1667 = vadd.f32 %v1535, %v1666
        %v1668 = vpop.f32.mrb[0].mxu0
        %1669 = vdwg.mxu0
        %vm1670 = vcmp.gt.f32.partialorder %v1608, 0.0
        %vm1671 = vcmp.gt.f32.partialorder %v1611, 0.0
        %vm1672 = vcmp.gt.f32.partialorder %v1616, 0.0
        %vm1673 = vcmp.gt.f32.partialorder %v1619, 0.0
        %vm1674 = vcmp.gt.f32.partialorder %v1624, 0.0
        %vm1675 = vcmp.gt.f32.partialorder %v1627, 0.0
        %vm1676 = vcmp.gt.f32.partialorder %v1632, 0.0
        %vm1677 = vcmp.gt.f32.partialorder %v1635, 0.0
        %vm1678 = vcmp.gt.f32.partialorder %v1640, 0.0
        %vm1679 = vcmp.gt.f32.partialorder %v1643, 0.0
        %vm1680 = vcmp.gt.f32.partialorder %v1648, 0.0
        %vm1681 = vcmp.gt.f32.partialorder %v1651, 0.0
        %vm1682 = vcmp.gt.f32.partialorder %v1656, 0.0
        %vm1683 = vcmp.gt.f32.partialorder %v1659, 0.0
        %vm1684 = vcmp.gt.f32.partialorder %v1664, 0.0
        %vm1685 = vcmp.gt.f32.partialorder %v1667, 0.0
        %v1686 = vmul.f32 %v1608, 0.2
        %v1687 = vmul.f32 %v1611, 0.2
        %v1688 = vmul.f32 %v1616, 0.2
        %v1689 = vmul.f32 %v1619, 0.2
        %v1690 = vmul.f32 %v1624, 0.2
        %v1691 = vmul.f32 %v1627, 0.2
        %v1692 = vmul.f32 %v1632, 0.2
        %v1693 = vmul.f32 %v1635, 0.2
        %v1694 = vmul.f32 %v1640, 0.2
        %v1695 = vmul.f32 %v1643, 0.2
        %v1696 = vmul.f32 %v1648, 0.2
        %v1697 = vmul.f32 %v1651, 0.2
        %v1698 = vmul.f32 %v1656, 0.2
        %v1699 = vmul.f32 %v1659, 0.2
        %v1700 = vmul.f32 %v1664, 0.2
        %v1701 = vmul.f32 %v1667, 0.2
        %v1702 = vsel %vm1670, %v1608, %v1686
        %v1703 = vsel %vm1671, %v1611, %v1687
        %v1704 = vsel %vm1672, %v1616, %v1688
        %v1705 = vsel %vm1673, %v1619, %v1689
        %v1706 = vsel %vm1674, %v1624, %v1690
        %v1707 = vsel %vm1675, %v1627, %v1691
        %v1708 = vsel %vm1676, %v1632, %v1692
        %v1709 = vsel %vm1677, %v1635, %v1693
        %v1710 = vsel %vm1678, %v1640, %v1694
        %v1711 = vsel %vm1679, %v1643, %v1695
        %v1712 = vsel %vm1680, %v1648, %v1696
        %v1713 = vsel %vm1681, %v1651, %v1697
        %v1714 = vsel %vm1682, %v1656, %v1698
        %v1715 = vsel %vm1683, %v1659, %v1699
        %v1716 = vsel %vm1684, %v1664, %v1700
        %v1717 = vsel %vm1685, %v1667, %v1701
        %s1718 = scalar_lea.vmem %s6, 16
        %v1719 = vld [vmem:[%s1718] sm:$0xf]
        %v1720 = vld [vmem:[%s1718 + $0x4] sm:$0xf]
        %v1721 = vld [vmem:[%s1718 + $0x8] sm:$0xf]
        %v1722 = vld [vmem:[%s1718 + $0xc] sm:$0xf]
        %s1723 = scalar_lea.vmem [#allocation7], 1
        %v1724 = vld [vmem:[%s1723] sm:$0x1]
        %v1725 = vpack.c.bf16 %v1703, %v1702
        %v1726 = vpack.c.bf16 %v1705, %v1704
        %v1727 = vpack.c.bf16 %v1707, %v1706
        %v1728 = vpack.c.bf16 %v1709, %v1708
        %v1729 = vpack.c.bf16 %v1711, %v1710
        %v1730 = vpack.c.bf16 %v1713, %v1712
        %v1731 = vpack.c.bf16 %v1715, %v1714
        %v1732 = vpack.c.bf16 %v1717, %v1716
        %v1734 = vlaneseq
        %v1735 = vshrl.u32 %v1734, 7
        %v1736 = vsub.s32 0, %v1735
        %v1737 = vrot.slane %v1724, %v1736
        %v1743 = vunpack.c.l.b16 %v1719
        %v1744 = vunpack.c.l.b16 %v1720
        %v1745 = vunpack.c.l.b16 %v1721
        %v1746 = vunpack.c.l.b16 %v1722
        %v1747 = vpack.c.b16 %v1744, %v1743
        %v1748 = vpack.c.b16 %v1746, %v1745
        %v1752 = vsel %vm911, %v1725, 0
        %v1755 = vsel %vm911, %v1726, 0
        %v1758 = vsel %vm911, %v1727, 0
        %v1761 = vsel %vm911, %v1728, 0
        %v1764 = vsel %vm911, %v1729, 0
        %v1767 = vsel %vm911, %v1730, 0
        %v1770 = vsel %vm911, %v1731, 0
        %v1773 = vsel %vm911, %v1732, 0
        %1775 = vmatprep.subr.bf16.mxu0 0
        %1776 = vmatpush1.bf16.msra.mxu0 %v1747
        %1777 = vmatprep.subr.bf16.mxu0 0
        %1778 = vmatpush1.bf16.msra.mxu0 %v1748
        %1779 = vmatprep.subr.bf16.mxu0 0
        %1780 = vmatpush1.bf16.msra.mxu0 0
        %1781 = vmatprep.subr.bf16.mxu0 0
        %1782 = vmatpush1.bf16.msra.mxu0 0
        %1783 = vmatprep.subr.bf16.mxu0 0
        %1784 = vmatpush1.bf16.msra.mxu0 0
        %1785 = vmatprep.subr.bf16.mxu0 0
        %1786 = vmatpush1.bf16.msra.mxu0 0
        %1787 = vmatprep.subr.bf16.mxu0 0
        %1788 = vmatpush1.bf16.msra.mxu0 0
        %1789 = vmatprep.subr.bf16.mxu0 0
        %1790 = vmatpush1.bf16.msra.mxu0 0
        %1791 = vmatprep.subr.bf16.mxu0 0
        %1792 = vmatpush1.bf16.msra.mxu0 0
        %1793 = vmatprep.subr.bf16.mxu0 0
        %1794 = vmatpush1.bf16.msra.mxu0 0
        %1795 = vmatprep.subr.bf16.mxu0 0
        %1796 = vmatpush1.bf16.msra.mxu0 0
        %1797 = vmatprep.subr.bf16.mxu0 0
        %1798 = vmatpush1.bf16.msra.mxu0 0
        %1799 = vmatprep.subr.bf16.mxu0 0
        %1800 = vmatpush1.bf16.msra.mxu0 0
        %1801 = vmatprep.subr.bf16.mxu0 0
        %1802 = vmatpush1.bf16.msra.mxu0 0
        %1803 = vmatprep.subr.bf16.mxu0 0
        %1804 = vmatpush1.bf16.msra.mxu0 0
        %1805 = vmatprep.subr.bf16.mxu0 0
        %1806 = vmatpush1.bf16.msra.mxu0 0
        %1807 = vmatprep.mubr.bf16.mxu0 0
        %1808 = vmatmul.mubr.bf16.gmra.mrb[0].mxu0 %v1752
        %v1809 = vpop.f32.mrb[0].mxu0
        %v1810 = vadd.f32 %v1737, %v1809
        %v1811 = vpop.f32.mrb[0].mxu0
        %v1812 = vpop.f32.mrb[0].mxu0
        %v1813 = vadd.f32 %v1737, %v1812
        %v1814 = vpop.f32.mrb[0].mxu0
        %1815 = vmatprep.mubr.bf16.mxu0 0
        %1816 = vmatmul.mubr.bf16.gmra.mrb[0].mxu0 %v1755
        %v1817 = vpop.f32.mrb[0].mxu0
        %v1818 = vadd.f32 %v1737, %v1817
        %v1819 = vpop.f32.mrb[0].mxu0
        %v1820 = vpop.f32.mrb[0].mxu0
        %v1821 = vadd.f32 %v1737, %v1820
        %v1822 = vpop.f32.mrb[0].mxu0
        %1823 = vmatprep.mubr.bf16.mxu0 0
        %1824 = vmatmul.mubr.bf16.gmra.mrb[0].mxu0 %v1758
        %v1825 = vpop.f32.mrb[0].mxu0
        %v1826 = vadd.f32 %v1737, %v1825
        %v1827 = vpop.f32.mrb[0].mxu0
        %v1828 = vpop.f32.mrb[0].mxu0
        %v1829 = vadd.f32 %v1737, %v1828
        %v1830 = vpop.f32.mrb[0].mxu0
        %1831 = vmatprep.mubr.bf16.mxu0 0
        %1832 = vmatmul.mubr.bf16.gmra.mrb[0].mxu0 %v1761
        %v1833 = vpop.f32.mrb[0].mxu0
        %v1834 = vadd.f32 %v1737, %v1833
        %v1835 = vpop.f32.mrb[0].mxu0
        %v1836 = vpop.f32.mrb[0].mxu0
        %v1837 = vadd.f32 %v1737, %v1836
        %v1838 = vpop.f32.mrb[0].mxu0
        %1839 = vmatprep.mubr.bf16.mxu0 0
        %1840 = vmatmul.mubr.bf16.gmra.mrb[0].mxu0 %v1764
        %v1841 = vpop.f32.mrb[0].mxu0
        %v1842 = vadd.f32 %v1737, %v1841
        %v1843 = vpop.f32.mrb[0].mxu0
        %v1844 = vpop.f32.mrb[0].mxu0
        %v1845 = vadd.f32 %v1737, %v1844
        %v1846 = vpop.f32.mrb[0].mxu0
        %1847 = vmatprep.mubr.bf16.mxu0 0
        %1848 = vmatmul.mubr.bf16.gmra.mrb[0].mxu0 %v1767
        %v1849 = vpop.f32.mrb[0].mxu0
        %v1850 = vadd.f32 %v1737, %v1849
        %v1851 = vpop.f32.mrb[0].mxu0
        %v1852 = vpop.f32.mrb[0].mxu0
        %v1853 = vadd.f32 %v1737, %v1852
        %v1854 = vpop.f32.mrb[0].mxu0
        %1855 = vmatprep.mubr.bf16.mxu0 0
        %1856 = vmatmul.mubr.bf16.gmra.mrb[0].mxu0 %v1770
        %v1857 = vpop.f32.mrb[0].mxu0
        %v1858 = vadd.f32 %v1737, %v1857
        %v1859 = vpop.f32.mrb[0].mxu0
        %v1860 = vpop.f32.mrb[0].mxu0
        %v1861 = vadd.f32 %v1737, %v1860
        %v1862 = vpop.f32.mrb[0].mxu0
        %1863 = vmatprep.mubr.bf16.mxu0 0
        %1864 = vmatmul.mubr.bf16.gmra.mrb[0].mxu0 %v1773
        %v1865 = vpop.f32.mrb[0].mxu0
        %v1866 = vadd.f32 %v1737, %v1865
        %v1867 = vpop.f32.mrb[0].mxu0
        %v1868 = vpop.f32.mrb[0].mxu0
        %v1869 = vadd.f32 %v1737, %v1868
        %v1870 = vpop.f32.mrb[0].mxu0
        %1871 = vdwg.mxu0
        %vm1872 = vcmp.gt.f32.partialorder %v1810, 0.0
        %vm1873 = vcmp.gt.f32.partialorder %v1813, 0.0
        %vm1874 = vcmp.gt.f32.partialorder %v1818, 0.0
        %vm1875 = vcmp.gt.f32.partialorder %v1821, 0.0
        %vm1876 = vcmp.gt.f32.partialorder %v1826, 0.0
        %vm1877 = vcmp.gt.f32.partialorder %v1829, 0.0
        %vm1878 = vcmp.gt.f32.partialorder %v1834, 0.0
        %vm1879 = vcmp.gt.f32.partialorder %v1837, 0.0
        %vm1880 = vcmp.gt.f32.partialorder %v1842, 0.0
        %vm1881 = vcmp.gt.f32.partialorder %v1845, 0.0
        %vm1882 = vcmp.gt.f32.partialorder %v1850, 0.0
        %vm1883 = vcmp.gt.f32.partialorder %v1853, 0.0
        %vm1884 = vcmp.gt.f32.partialorder %v1858, 0.0
        %vm1885 = vcmp.gt.f32.partialorder %v1861, 0.0
        %vm1886 = vcmp.gt.f32.partialorder %v1866, 0.0
        %vm1887 = vcmp.gt.f32.partialorder %v1869, 0.0
        %v1888 = vmul.f32 %v1810, 0.2
        %v1889 = vmul.f32 %v1813, 0.2
        %v1890 = vmul.f32 %v1818, 0.2
        %v1891 = vmul.f32 %v1821, 0.2
        %v1892 = vmul.f32 %v1826, 0.2
        %v1893 = vmul.f32 %v1829, 0.2
        %v1894 = vmul.f32 %v1834, 0.2
        %v1895 = vmul.f32 %v1837, 0.2
        %v1896 = vmul.f32 %v1842, 0.2
        %v1897 = vmul.f32 %v1845, 0.2
        %v1898 = vmul.f32 %v1850, 0.2
        %v1899 = vmul.f32 %v1853, 0.2
        %v1900 = vmul.f32 %v1858, 0.2
        %v1901 = vmul.f32 %v1861, 0.2
        %v1902 = vmul.f32 %v1866, 0.2
        %v1903 = vmul.f32 %v1869, 0.2
        %v1904 = vsel %vm1872, %v1810, %v1888
        %v1905 = vsel %vm1873, %v1813, %v1889
        %v1906 = vsel %vm1874, %v1818, %v1890
        %v1907 = vsel %vm1875, %v1821, %v1891
        %v1908 = vsel %vm1876, %v1826, %v1892
        %v1909 = vsel %vm1877, %v1829, %v1893
        %v1910 = vsel %vm1878, %v1834, %v1894
        %v1911 = vsel %vm1879, %v1837, %v1895
        %v1912 = vsel %vm1880, %v1842, %v1896
        %v1913 = vsel %vm1881, %v1845, %v1897
        %v1914 = vsel %vm1882, %v1850, %v1898
        %v1915 = vsel %vm1883, %v1853, %v1899
        %v1916 = vsel %vm1884, %v1858, %v1900
        %v1917 = vsel %vm1885, %v1861, %v1901
        %v1918 = vsel %vm1886, %v1866, %v1902
        %v1919 = vsel %vm1887, %v1869, %v1903
        %s1920 = scalar_lea.vmem %s6, 32
        %v1921 = vld [vmem:[%s1920] sm:$0xf]
        %v1922 = vld [vmem:[%s1920 + $0x4] sm:$0xf]
        %v1923 = vld [vmem:[%s1920 + $0x8] sm:$0xf]
        %v1924 = vld [vmem:[%s1920 + $0xc] sm:$0xf]
        %s1925 = scalar_lea.vmem [#allocation7], 2
        %v1926 = vld [vmem:[%s1925] sm:$0x1]
        %v1927 = vpack.c.bf16 %v1905, %v1904
        %v1928 = vpack.c.bf16 %v1907, %v1906
        %v1929 = vpack.c.bf16 %v1909, %v1908
        %v1930 = vpack.c.bf16 %v1911, %v1910
        %v1931 = vpack.c.bf16 %v1913, %v1912
        %v1932 = vpack.c.bf16 %v1915, %v1914
        %v1933 = vpack.c.bf16 %v1917, %v1916
        %v1934 = vpack.c.bf16 %v1919, %v1918
        %v1936 = vlaneseq
        %v1937 = vshrl.u32 %v1936, 7
        %v1938 = vsub.s32 0, %v1937
        %v1939 = vrot.slane %v1926, %v1938
        %v1945 = vunpack.c.l.b16 %v1921
        %v1946 = vunpack.c.l.b16 %v1922
        %v1947 = vunpack.c.l.b16 %v1923
        %v1948 = vunpack.c.l.b16 %v1924
        %v1949 = vpack.c.b16 %v1946, %v1945
        %v1950 = vpack.c.b16 %v1948, %v1947
        %v1954 = vsel %vm911, %v1927, 0
        %v1957 = vsel %vm911, %v1928, 0
        %v1960 = vsel %vm911, %v1929, 0
        %v1963 = vsel %vm911, %v1930, 0
        %v1966 = vsel %vm911, %v1931, 0
        %v1969 = vsel %vm911, %v1932, 0
        %v1972 = vsel %vm911, %v1933, 0
        %v1975 = vsel %vm911, %v1934, 0
        %1977 = vmatprep.subr.bf16.mxu0 0
        %1978 = vmatpush1.bf16.msra.mxu0 %v1949
        %1979 = vmatprep.subr.bf16.mxu0 0
        %1980 = vmatpush1.bf16.msra.mxu0 %v1950
        %1981 = vmatprep.subr.bf16.mxu0 0
        %1982 = vmatpush1.bf16.msra.mxu0 0
        %1983 = vmatprep.subr.bf16.mxu0 0
        %1984 = vmatpush1.bf16.msra.mxu0 0
        %1985 = vmatprep.subr.bf16.mxu0 0
        %1986 = vmatpush1.bf16.msra.mxu0 0
        %1987 = vmatprep.subr.bf16.mxu0 0
        %1988 = vmatpush1.bf16.msra.mxu0 0
        %1989 = vmatprep.subr.bf16.mxu0 0
        %1990 = vmatpush1.bf16.msra.mxu0 0
        %1991 = vmatprep.subr.bf16.mxu0 0
        %1992 = vmatpush1.bf16.msra.mxu0 0
        %1993 = vmatprep.subr.bf16.mxu0 0
        %1994 = vmatpush1.bf16.msra.mxu0 0
        %1995 = vmatprep.subr.bf16.mxu0 0
        %1996 = vmatpush1.bf16.msra.mxu0 0
        %1997 = vmatprep.subr.bf16.mxu0 0
        %1998 = vmatpush1.bf16.msra.mxu0 0
        %1999 = vmatprep.subr.bf16.mxu0 0
        %2000 = vmatpush1.bf16.msra.mxu0 0
        %2001 = vmatprep.subr.bf16.mxu0 0
        %2002 = vmatpush1.bf16.msra.mxu0 0
        %2003 = vmatprep.subr.bf16.mxu0 0
        %2004 = vmatpush1.bf16.msra.mxu0 0
        %2005 = vmatprep.subr.bf16.mxu0 0
        %2006 = vmatpush1.bf16.msra.mxu0 0
        %2007 = vmatprep.subr.bf16.mxu0 0
        %2008 = vmatpush1.bf16.msra.mxu0 0
        %2009 = vmatprep.mubr.bf16.mxu0 0
        %2010 = vmatmul.mubr.bf16.gmra.mrb[0].mxu0 %v1954
        %v2011 = vpop.f32.mrb[0].mxu0
        %v2012 = vadd.f32 %v1939, %v2011
        %v2013 = vpop.f32.mrb[0].mxu0
        %v2014 = vpop.f32.mrb[0].mxu0
        %v2015 = vadd.f32 %v1939, %v2014
        %v2016 = vpop.f32.mrb[0].mxu0
        %2017 = vmatprep.mubr.bf16.mxu0 0
        %2018 = vmatmul.mubr.bf16.gmra.mrb[0].mxu0 %v1957
        %v2019 = vpop.f32.mrb[0].mxu0
        %v2020 = vadd.f32 %v1939, %v2019
        %v2021 = vpop.f32.mrb[0].mxu0
        %v2022 = vpop.f32.mrb[0].mxu0
        %v2023 = vadd.f32 %v1939, %v2022
        %v2024 = vpop.f32.mrb[0].mxu0
        %2025 = vmatprep.mubr.bf16.mxu0 0
        %2026 = vmatmul.mubr.bf16.gmra.mrb[0].mxu0 %v1960
        %v2027 = vpop.f32.mrb[0].mxu0
        %v2028 = vadd.f32 %v1939, %v2027
        %v2029 = vpop.f32.mrb[0].mxu0
        %v2030 = vpop.f32.mrb[0].mxu0
        %v2031 = vadd.f32 %v1939, %v2030
        %v2032 = vpop.f32.mrb[0].mxu0
        %2033 = vmatprep.mubr.bf16.mxu0 0
        %2034 = vmatmul.mubr.bf16.gmra.mrb[0].mxu0 %v1963
        %v2035 = vpop.f32.mrb[0].mxu0
        %v2036 = vadd.f32 %v1939, %v2035
        %v2037 = vpop.f32.mrb[0].mxu0
        %v2038 = vpop.f32.mrb[0].mxu0
        %v2039 = vadd.f32 %v1939, %v2038
        %v2040 = vpop.f32.mrb[0].mxu0
        %2041 = vmatprep.mubr.bf16.mxu0 0
        %2042 = vmatmul.mubr.bf16.gmra.mrb[0].mxu0 %v1966
        %v2043 = vpop.f32.mrb[0].mxu0
        %v2044 = vadd.f32 %v1939, %v2043
        %v2045 = vpop.f32.mrb[0].mxu0
        %v2046 = vpop.f32.mrb[0].mxu0
        %v2047 = vadd.f32 %v1939, %v2046
        %v2048 = vpop.f32.mrb[0].mxu0
        %2049 = vmatprep.mubr.bf16.mxu0 0
        %2050 = vmatmul.mubr.bf16.gmra.mrb[0].mxu0 %v1969
        %v2051 = vpop.f32.mrb[0].mxu0
        %v2052 = vadd.f32 %v1939, %v2051
        %v2053 = vpop.f32.mrb[0].mxu0
        %v2054 = vpop.f32.mrb[0].mxu0
        %v2055 = vadd.f32 %v1939, %v2054
        %v2056 = vpop.f32.mrb[0].mxu0
        %2057 = vmatprep.mubr.bf16.mxu0 0
        %2058 = vmatmul.mubr.bf16.gmra.mrb[0].mxu0 %v1972
        %v2059 = vpop.f32.mrb[0].mxu0
        %v2060 = vadd.f32 %v1939, %v2059
        %v2061 = vpop.f32.mrb[0].mxu0
        %v2062 = vpop.f32.mrb[0].mxu0
        %v2063 = vadd.f32 %v1939, %v2062
        %v2064 = vpop.f32.mrb[0].mxu0
        %2065 = vmatprep.mubr.bf16.mxu0 0
        %2066 = vmatmul.mubr.bf16.gmra.mrb[0].mxu0 %v1975
        %v2067 = vpop.f32.mrb[0].mxu0
        %v2068 = vadd.f32 %v1939, %v2067
        %v2069 = vpop.f32.mrb[0].mxu0
        %v2070 = vpop.f32.mrb[0].mxu0
        %v2071 = vadd.f32 %v1939, %v2070
        %v2072 = vpop.f32.mrb[0].mxu0
        %2073 = vdwg.mxu0
        %v2074 = vxor.u32 %v1513, 2147483648
        %v2075 = vmul.f32 %v2074, 1.442695
        %v2076 = vpow.pop %v2075
        %v2077 = vadd.f32 %v2076, 1.0
        %v2078 = vrcp.pop %v2077
        %v2079 = vmul.f32 1.0, %v2078
        %v2080 = vlaneseq
        %v2081 = vshrl.u32 %v2080, 7
        %v2082 = vsub.s32 0, %v2081
        %v2083 = vrot.slane %v2079, %v2082
        %v2084 = vmul.f32 %v2012, %v2083
        %v2085 = vmul.f32 %v2015, %v2083
        %v2086 = vmul.f32 %v2020, %v2083
        %v2087 = vmul.f32 %v2023, %v2083
        %v2088 = vmul.f32 %v2028, %v2083
        %v2089 = vmul.f32 %v2031, %v2083
        %v2090 = vmul.f32 %v2036, %v2083
        %v2091 = vmul.f32 %v2039, %v2083
        %v2092 = vmul.f32 %v2044, %v2083
        %v2093 = vmul.f32 %v2047, %v2083
        %v2094 = vmul.f32 %v2052, %v2083
        %v2095 = vmul.f32 %v2055, %v2083
        %v2096 = vmul.f32 %v2060, %v2083
        %v2097 = vmul.f32 %v2063, %v2083
        %v2098 = vmul.f32 %v2068, %v2083
        %v2099 = vmul.f32 %v2071, %v2083
        %v2100 = vlaneseq
        %v2101 = vshrl.u32 %v2100, 7
        %v2102 = vsub.s32 0, %v2101
        %v2103 = vrot.slane %v1513, %v2102
        %2105 = vrot.lane.b32.xlu0 %v2103, 96
        %v2106 = vpop.permute.xlu0 %2105
        %v2108 = vadd.f32 %v2084, %v2106
        %v2109 = vadd.f32 %v2085, %v2106
        %v2110 = vadd.f32 %v2086, %v2106
        %v2111 = vadd.f32 %v2087, %v2106
        %v2112 = vadd.f32 %v2088, %v2106
        %v2113 = vadd.f32 %v2089, %v2106
        %v2114 = vadd.f32 %v2090, %v2106
        %v2115 = vadd.f32 %v2091, %v2106
        %v2116 = vadd.f32 %v2092, %v2106
        %v2117 = vadd.f32 %v2093, %v2106
        %v2118 = vadd.f32 %v2094, %v2106
        %v2119 = vadd.f32 %v2095, %v2106
        %v2120 = vadd.f32 %v2096, %v2106
        %v2121 = vadd.f32 %v2097, %v2106
        %v2122 = vadd.f32 %v2098, %v2106
        %v2123 = vadd.f32 %v2099, %v2106
        %s2124 = scalar_lea.vmem %s6, 48
        %v2125 = vld [vmem:[%s2124] sm:$0xf]
        %v2126 = vld [vmem:[%s2124 + $0x4] sm:$0xf]
        %v2127 = vld [vmem:[%s2124 + $0x8] sm:$0xf]
        %v2128 = vld [vmem:[%s2124 + $0xc] sm:$0xf]
        %s2129 = scalar_lea.vmem [#allocation7], 3
        %v2130 = vld [vmem:[%s2129] sm:$0x1]
        %v2131 = vpack.c.bf16 %v2109, %v2108
        %v2132 = vpack.c.bf16 %v2111, %v2110
        %v2133 = vpack.c.bf16 %v2113, %v2112
        %v2134 = vpack.c.bf16 %v2115, %v2114
        %v2135 = vpack.c.bf16 %v2117, %v2116
        %v2136 = vpack.c.bf16 %v2119, %v2118
        %v2137 = vpack.c.bf16 %v2121, %v2120
        %v2138 = vpack.c.bf16 %v2123, %v2122
        %v2140 = vlaneseq
        %v2141 = vshrl.u32 %v2140, 7
        %v2142 = vsub.s32 0, %v2141
        %v2143 = vrot.slane %v2130, %v2142
        %v2149 = vunpack.c.l.b16 %v2125
        %v2150 = vunpack.c.l.b16 %v2126
        %v2151 = vunpack.c.l.b16 %v2127
        %v2152 = vunpack.c.l.b16 %v2128
        %v2153 = vpack.c.b16 %v2150, %v2149
        %v2154 = vpack.c.b16 %v2152, %v2151
        %v2158 = vsel %vm911, %v2131, 0
        %v2161 = vsel %vm911, %v2132, 0
        %v2164 = vsel %vm911, %v2133, 0
        %v2167 = vsel %vm911, %v2134, 0
        %v2170 = vsel %vm911, %v2135, 0
        %v2173 = vsel %vm911, %v2136, 0
        %v2176 = vsel %vm911, %v2137, 0
        %v2179 = vsel %vm911, %v2138, 0
        %2181 = vmatprep.subr.bf16.mxu0 0
        %2182 = vmatpush1.bf16.msra.mxu0 %v2153
        %2183 = vmatprep.subr.bf16.mxu0 0
        %2184 = vmatpush1.bf16.msra.mxu0 %v2154
        %2185 = vmatprep.subr.bf16.mxu0 0
        %2186 = vmatpush1.bf16.msra.mxu0 0
        %2187 = vmatprep.subr.bf16.mxu0 0
        %2188 = vmatpush1.bf16.msra.mxu0 0
        %2189 = vmatprep.subr.bf16.mxu0 0
        %2190 = vmatpush1.bf16.msra.mxu0 0
        %2191 = vmatprep.subr.bf16.mxu0 0
        %2192 = vmatpush1.bf16.msra.mxu0 0
        %2193 = vmatprep.subr.bf16.mxu0 0
        %2194 = vmatpush1.bf16.msra.mxu0 0
        %2195 = vmatprep.subr.bf16.mxu0 0
        %2196 = vmatpush1.bf16.msra.mxu0 0
        %2197 = vmatprep.subr.bf16.mxu0 0
        %2198 = vmatpush1.bf16.msra.mxu0 0
        %2199 = vmatprep.subr.bf16.mxu0 0
        %2200 = vmatpush1.bf16.msra.mxu0 0
        %2201 = vmatprep.subr.bf16.mxu0 0
        %2202 = vmatpush1.bf16.msra.mxu0 0
        %2203 = vmatprep.subr.bf16.mxu0 0
        %2204 = vmatpush1.bf16.msra.mxu0 0
        %2205 = vmatprep.subr.bf16.mxu0 0
        %2206 = vmatpush1.bf16.msra.mxu0 0
        %2207 = vmatprep.subr.bf16.mxu0 0
        %2208 = vmatpush1.bf16.msra.mxu0 0
        %2209 = vmatprep.subr.bf16.mxu0 0
        %2210 = vmatpush1.bf16.msra.mxu0 0
        %2211 = vmatprep.subr.bf16.mxu0 0
        %2212 = vmatpush1.bf16.msra.mxu0 0
        %2213 = vmatprep.mubr.bf16.mxu0 0
        %2214 = vmatmul.mubr.bf16.gmra.mrb[0].mxu0 %v2158
        %v2215 = vpop.f32.mrb[0].mxu0
        %v2216 = vadd.f32 %v2143, %v2215
        %v2217 = vpop.f32.mrb[0].mxu0
        %v2218 = vpop.f32.mrb[0].mxu0
        %v2219 = vadd.f32 %v2143, %v2218
        %v2220 = vpop.f32.mrb[0].mxu0
        %2221 = vmatprep.mubr.bf16.mxu0 0
        %2222 = vmatmul.mubr.bf16.gmra.mrb[0].mxu0 %v2161
        %v2223 = vpop.f32.mrb[0].mxu0
        %v2224 = vadd.f32 %v2143, %v2223
        %v2225 = vpop.f32.mrb[0].mxu0
        %v2226 = vpop.f32.mrb[0].mxu0
        %v2227 = vadd.f32 %v2143, %v2226
        %v2228 = vpop.f32.mrb[0].mxu0
        %2229 = vmatprep.mubr.bf16.mxu0 0
        %2230 = vmatmul.mubr.bf16.gmra.mrb[0].mxu0 %v2164
        %v2231 = vpop.f32.mrb[0].mxu0
        %v2232 = vadd.f32 %v2143, %v2231
        %v2233 = vpop.f32.mrb[0].mxu0
        %v2234 = vpop.f32.mrb[0].mxu0
        %v2235 = vadd.f32 %v2143, %v2234
        %v2236 = vpop.f32.mrb[0].mxu0
        %2237 = vmatprep.mubr.bf16.mxu0 0
        %2238 = vmatmul.mubr.bf16.gmra.mrb[0].mxu0 %v2167
        %v2239 = vpop.f32.mrb[0].mxu0
        %v2240 = vadd.f32 %v2143, %v2239
        %v2241 = vpop.f32.mrb[0].mxu0
        %v2242 = vpop.f32.mrb[0].mxu0
        %v2243 = vadd.f32 %v2143, %v2242
        %v2244 = vpop.f32.mrb[0].mxu0
        %2245 = vmatprep.mubr.bf16.mxu0 0
        %2246 = vmatmul.mubr.bf16.gmra.mrb[0].mxu0 %v2170
        %v2247 = vpop.f32.mrb[0].mxu0
        %v2248 = vadd.f32 %v2143, %v2247
        %v2249 = vpop.f32.mrb[0].mxu0
        %v2250 = vpop.f32.mrb[0].mxu0
        %v2251 = vadd.f32 %v2143, %v2250
        %v2252 = vpop.f32.mrb[0].mxu0
        %2253 = vmatprep.mubr.bf16.mxu0 0
        %2254 = vmatmul.mubr.bf16.gmra.mrb[0].mxu0 %v2173
        %v2255 = vpop.f32.mrb[0].mxu0
        %v2256 = vadd.f32 %v2143, %v2255
        %v2257 = vpop.f32.mrb[0].mxu0
        %v2258 = vpop.f32.mrb[0].mxu0
        %v2259 = vadd.f32 %v2143, %v2258
        %v2260 = vpop.f32.mrb[0].mxu0
        %2261 = vmatprep.mubr.bf16.mxu0 0
        %2262 = vmatmul.mubr.bf16.gmra.mrb[0].mxu0 %v2176
        %v2263 = vpop.f32.mrb[0].mxu0
        %v2264 = vadd.f32 %v2143, %v2263
        %v2265 = vpop.f32.mrb[0].mxu0
        %v2266 = vpop.f32.mrb[0].mxu0
        %v2267 = vadd.f32 %v2143, %v2266
        %v2268 = vpop.f32.mrb[0].mxu0
        %2269 = vmatprep.mubr.bf16.mxu0 0
        %2270 = vmatmul.mubr.bf16.gmra.mrb[0].mxu0 %v2179
        %v2271 = vpop.f32.mrb[0].mxu0
        %v2272 = vadd.f32 %v2143, %v2271
        %v2273 = vpop.f32.mrb[0].mxu0
        %v2274 = vpop.f32.mrb[0].mxu0
        %v2275 = vadd.f32 %v2143, %v2274
        %v2276 = vpop.f32.mrb[0].mxu0
        %2277 = vdwg.mxu0
        %vm2278 = vcmp.gt.f32.partialorder %v2216, 0.0
        %vm2279 = vcmp.gt.f32.partialorder %v2219, 0.0
        %vm2280 = vcmp.gt.f32.partialorder %v2224, 0.0
        %vm2281 = vcmp.gt.f32.partialorder %v2227, 0.0
        %vm2282 = vcmp.gt.f32.partialorder %v2232, 0.0
        %vm2283 = vcmp.gt.f32.partialorder %v2235, 0.0
        %vm2284 = vcmp.gt.f32.partialorder %v2240, 0.0
        %vm2285 = vcmp.gt.f32.partialorder %v2243, 0.0
        %vm2286 = vcmp.gt.f32.partialorder %v2248, 0.0
        %vm2287 = vcmp.gt.f32.partialorder %v2251, 0.0
        %vm2288 = vcmp.gt.f32.partialorder %v2256, 0.0
        %vm2289 = vcmp.gt.f32.partialorder %v2259, 0.0
        %vm2290 = vcmp.gt.f32.partialorder %v2264, 0.0
        %vm2291 = vcmp.gt.f32.partialorder %v2267, 0.0
        %vm2292 = vcmp.gt.f32.partialorder %v2272, 0.0
        %vm2293 = vcmp.gt.f32.partialorder %v2275, 0.0
        %v2294 = vmul.f32 %v2216, 0.2
        %v2295 = vmul.f32 %v2219, 0.2
        %v2296 = vmul.f32 %v2224, 0.2
        %v2297 = vmul.f32 %v2227, 0.2
        %v2298 = vmul.f32 %v2232, 0.2
        %v2299 = vmul.f32 %v2235, 0.2
        %v2300 = vmul.f32 %v2240, 0.2
        %v2301 = vmul.f32 %v2243, 0.2
        %v2302 = vmul.f32 %v2248, 0.2
        %v2303 = vmul.f32 %v2251, 0.2
        %v2304 = vmul.f32 %v2256, 0.2
        %v2305 = vmul.f32 %v2259, 0.2
        %v2306 = vmul.f32 %v2264, 0.2
        %v2307 = vmul.f32 %v2267, 0.2
        %v2308 = vmul.f32 %v2272, 0.2
        %v2309 = vmul.f32 %v2275, 0.2
        %v2310 = vsel %vm2278, %v2216, %v2294
        %v2311 = vsel %vm2279, %v2219, %v2295
        %v2312 = vsel %vm2280, %v2224, %v2296
        %v2313 = vsel %vm2281, %v2227, %v2297
        %v2314 = vsel %vm2282, %v2232, %v2298
        %v2315 = vsel %vm2283, %v2235, %v2299
        %v2316 = vsel %vm2284, %v2240, %v2300
        %v2317 = vsel %vm2285, %v2243, %v2301
        %v2318 = vsel %vm2286, %v2248, %v2302
        %v2319 = vsel %vm2287, %v2251, %v2303
        %v2320 = vsel %vm2288, %v2256, %v2304
        %v2321 = vsel %vm2289, %v2259, %v2305
        %v2322 = vsel %vm2290, %v2264, %v2306
        %v2323 = vsel %vm2291, %v2267, %v2307
        %v2324 = vsel %vm2292, %v2272, %v2308
        %v2325 = vsel %vm2293, %v2275, %v2309
        %s2326 = scalar_lea.vmem %s6, 64
        %v2327 = vld [vmem:[%s2326] sm:$0xf]
        %v2328 = vld [vmem:[%s2326 + $0x4] sm:$0xf]
        %v2329 = vld [vmem:[%s2326 + $0x8] sm:$0xf]
        %v2330 = vld [vmem:[%s2326 + $0xc] sm:$0xf]
        %s2331 = scalar_lea.vmem [#allocation7], 4
        %v2332 = vld [vmem:[%s2331] sm:$0x1]
        %v2333 = vpack.c.bf16 %v2311, %v2310
        %v2334 = vpack.c.bf16 %v2313, %v2312
        %v2335 = vpack.c.bf16 %v2315, %v2314
        %v2336 = vpack.c.bf16 %v2317, %v2316
        %v2337 = vpack.c.bf16 %v2319, %v2318
        %v2338 = vpack.c.bf16 %v2321, %v2320
        %v2339 = vpack.c.bf16 %v2323, %v2322
        %v2340 = vpack.c.bf16 %v2325, %v2324
        %v2342 = vlaneseq
        %v2343 = vshrl.u32 %v2342, 7
        %v2344 = vsub.s32 0, %v2343
        %v2345 = vrot.slane %v2332, %v2344
        %v2351 = vunpack.c.l.b16 %v2327
        %v2352 = vunpack.c.l.b16 %v2328
        %v2353 = vunpack.c.l.b16 %v2329
        %v2354 = vunpack.c.l.b16 %v2330
        %v2355 = vpack.c.b16 %v2352, %v2351
        %v2356 = vpack.c.b16 %v2354, %v2353
        %v2360 = vsel %vm911, %v2333, 0
        %v2363 = vsel %vm911, %v2334, 0
        %v2366 = vsel %vm911, %v2335, 0
        %v2369 = vsel %vm911, %v2336, 0
        %v2372 = vsel %vm911, %v2337, 0
        %v2375 = vsel %vm911, %v2338, 0
        %v2378 = vsel %vm911, %v2339, 0
        %v2381 = vsel %vm911, %v2340, 0
        %2383 = vmatprep.subr.bf16.mxu0 0
        %2384 = vmatpush1.bf16.msra.mxu0 %v2355
        %2385 = vmatprep.subr.bf16.mxu0 0
        %2386 = vmatpush1.bf16.msra.mxu0 %v2356
        %2387 = vmatprep.subr.bf16.mxu0 0
        %2388 = vmatpush1.bf16.msra.mxu0 0
        %2389 = vmatprep.subr.bf16.mxu0 0
        %2390 = vmatpush1.bf16.msra.mxu0 0
        %2391 = vmatprep.subr.bf16.mxu0 0
        %2392 = vmatpush1.bf16.msra.mxu0 0
        %2393 = vmatprep.subr.bf16.mxu0 0
        %2394 = vmatpush1.bf16.msra.mxu0 0
        %2395 = vmatprep.subr.bf16.mxu0 0
        %2396 = vmatpush1.bf16.msra.mxu0 0
        %2397 = vmatprep.subr.bf16.mxu0 0
        %2398 = vmatpush1.bf16.msra.mxu0 0
        %2399 = vmatprep.subr.bf16.mxu0 0
        %2400 = vmatpush1.bf16.msra.mxu0 0
        %2401 = vmatprep.subr.bf16.mxu0 0
        %2402 = vmatpush1.bf16.msra.mxu0 0
        %2403 = vmatprep.subr.bf16.mxu0 0
        %2404 = vmatpush1.bf16.msra.mxu0 0
        %2405 = vmatprep.subr.bf16.mxu0 0
        %2406 = vmatpush1.bf16.msra.mxu0 0
        %2407 = vmatprep.subr.bf16.mxu0 0
        %2408 = vmatpush1.bf16.msra.mxu0 0
        %2409 = vmatprep.subr.bf16.mxu0 0
        %2410 = vmatpush1.bf16.msra.mxu0 0
        %2411 = vmatprep.subr.bf16.mxu0 0
        %2412 = vmatpush1.bf16.msra.mxu0 0
        %2413 = vmatprep.subr.bf16.mxu0 0
        %2414 = vmatpush1.bf16.msra.mxu0 0
        %2415 = vmatprep.mubr.bf16.mxu0 0
        %2416 = vmatmul.mubr.bf16.gmra.mrb[0].mxu0 %v2360
        %v2417 = vpop.f32.mrb[0].mxu0
        %v2418 = vadd.f32 %v2345, %v2417
        %v2419 = vpop.f32.mrb[0].mxu0
        %v2420 = vpop.f32.mrb[0].mxu0
        %v2421 = vadd.f32 %v2345, %v2420
        %v2422 = vpop.f32.mrb[0].mxu0
        %2423 = vmatprep.mubr.bf16.mxu0 0
        %2424 = vmatmul.mubr.bf16.gmra.mrb[0].mxu0 %v2363
        %v2425 = vpop.f32.mrb[0].mxu0
        %v2426 = vadd.f32 %v2345, %v2425
        %v2427 = vpop.f32.mrb[0].mxu0
        %v2428 = vpop.f32.mrb[0].mxu0
        %v2429 = vadd.f32 %v2345, %v2428
        %v2430 = vpop.f32.mrb[0].mxu0
        %2431 = vmatprep.mubr.bf16.mxu0 0
        %2432 = vmatmul.mubr.bf16.gmra.mrb[0].mxu0 %v2366
        %v2433 = vpop.f32.mrb[0].mxu0
        %v2434 = vadd.f32 %v2345, %v2433
        %v2435 = vpop.f32.mrb[0].mxu0
        %v2436 = vpop.f32.mrb[0].mxu0
        %v2437 = vadd.f32 %v2345, %v2436
        %v2438 = vpop.f32.mrb[0].mxu0
        %2439 = vmatprep.mubr.bf16.mxu0 0
        %2440 = vmatmul.mubr.bf16.gmra.mrb[0].mxu0 %v2369
        %v2441 = vpop.f32.mrb[0].mxu0
        %v2442 = vadd.f32 %v2345, %v2441
        %v2443 = vpop.f32.mrb[0].mxu0
        %v2444 = vpop.f32.mrb[0].mxu0
        %v2445 = vadd.f32 %v2345, %v2444
        %v2446 = vpop.f32.mrb[0].mxu0
        %2447 = vmatprep.mubr.bf16.mxu0 0
        %2448 = vmatmul.mubr.bf16.gmra.mrb[0].mxu0 %v2372
        %v2449 = vpop.f32.mrb[0].mxu0
        %v2450 = vadd.f32 %v2345, %v2449
        %v2451 = vpop.f32.mrb[0].mxu0
        %v2452 = vpop.f32.mrb[0].mxu0
        %v2453 = vadd.f32 %v2345, %v2452
        %v2454 = vpop.f32.mrb[0].mxu0
        %2455 = vmatprep.mubr.bf16.mxu0 0
        %2456 = vmatmul.mubr.bf16.gmra.mrb[0].mxu0 %v2375
        %v2457 = vpop.f32.mrb[0].mxu0
        %v2458 = vadd.f32 %v2345, %v2457
        %v2459 = vpop.f32.mrb[0].mxu0
        %v2460 = vpop.f32.mrb[0].mxu0
        %v2461 = vadd.f32 %v2345, %v2460
        %v2462 = vpop.f32.mrb[0].mxu0
        %2463 = vmatprep.mubr.bf16.mxu0 0
        %2464 = vmatmul.mubr.bf16.gmra.mrb[0].mxu0 %v2378
        %v2465 = vpop.f32.mrb[0].mxu0
        %v2466 = vadd.f32 %v2345, %v2465
        %v2467 = vpop.f32.mrb[0].mxu0
        %v2468 = vpop.f32.mrb[0].mxu0
        %v2469 = vadd.f32 %v2345, %v2468
        %v2470 = vpop.f32.mrb[0].mxu0
        %2471 = vmatprep.mubr.bf16.mxu0 0
        %2472 = vmatmul.mubr.bf16.gmra.mrb[0].mxu0 %v2381
        %v2473 = vpop.f32.mrb[0].mxu0
        %v2474 = vadd.f32 %v2345, %v2473
        %v2475 = vpop.f32.mrb[0].mxu0
        %v2476 = vpop.f32.mrb[0].mxu0
        %v2477 = vadd.f32 %v2345, %v2476
        %v2478 = vpop.f32.mrb[0].mxu0
        %2479 = vdwg.mxu0
        %vm2480 = vcmp.gt.f32.partialorder %v2418, 0.0
        %vm2481 = vcmp.gt.f32.partialorder %v2421, 0.0
        %vm2482 = vcmp.gt.f32.partialorder %v2426, 0.0
        %vm2483 = vcmp.gt.f32.partialorder %v2429, 0.0
        %vm2484 = vcmp.gt.f32.partialorder %v2434, 0.0
        %vm2485 = vcmp.gt.f32.partialorder %v2437, 0.0
        %vm2486 = vcmp.gt.f32.partialorder %v2442, 0.0
        %vm2487 = vcmp.gt.f32.partialorder %v2445, 0.0
        %vm2488 = vcmp.gt.f32.partialorder %v2450, 0.0
        %vm2489 = vcmp.gt.f32.partialorder %v2453, 0.0
        %vm2490 = vcmp.gt.f32.partialorder %v2458, 0.0
        %vm2491 = vcmp.gt.f32.partialorder %v2461, 0.0
        %vm2492 = vcmp.gt.f32.partialorder %v2466, 0.0
        %vm2493 = vcmp.gt.f32.partialorder %v2469, 0.0
        %vm2494 = vcmp.gt.f32.partialorder %v2474, 0.0
        %vm2495 = vcmp.gt.f32.partialorder %v2477, 0.0
        %v2496 = vmul.f32 %v2418, 0.2
        %v2497 = vmul.f32 %v2421, 0.2
        %v2498 = vmul.f32 %v2426, 0.2
        %v2499 = vmul.f32 %v2429, 0.2
        %v2500 = vmul.f32 %v2434, 0.2
        %v2501 = vmul.f32 %v2437, 0.2
        %v2502 = vmul.f32 %v2442, 0.2
        %v2503 = vmul.f32 %v2445, 0.2
        %v2504 = vmul.f32 %v2450, 0.2
        %v2505 = vmul.f32 %v2453, 0.2
        %v2506 = vmul.f32 %v2458, 0.2
        %v2507 = vmul.f32 %v2461, 0.2
        %v2508 = vmul.f32 %v2466, 0.2
        %v2509 = vmul.f32 %v2469, 0.2
        %v2510 = vmul.f32 %v2474, 0.2
        %v2511 = vmul.f32 %v2477, 0.2
        %v2512 = vsel %vm2480, %v2418, %v2496
        %v2513 = vsel %vm2481, %v2421, %v2497
        %v2514 = vsel %vm2482, %v2426, %v2498
        %v2515 = vsel %vm2483, %v2429, %v2499
        %v2516 = vsel %vm2484, %v2434, %v2500
        %v2517 = vsel %vm2485, %v2437, %v2501
        %v2518 = vsel %vm2486, %v2442, %v2502
        %v2519 = vsel %vm2487, %v2445, %v2503
        %v2520 = vsel %vm2488, %v2450, %v2504
        %v2521 = vsel %vm2489, %v2453, %v2505
        %v2522 = vsel %vm2490, %v2458, %v2506
        %v2523 = vsel %vm2491, %v2461, %v2507
        %v2524 = vsel %vm2492, %v2466, %v2508
        %v2525 = vsel %vm2493, %v2469, %v2509
        %v2526 = vsel %vm2494, %v2474, %v2510
        %v2527 = vsel %vm2495, %v2477, %v2511
        %s2528 = scalar_lea.vmem %s6, 80
        %v2529 = vld [vmem:[%s2528] sm:$0xf]
        %v2530 = vld [vmem:[%s2528 + $0x4] sm:$0xf]
        %v2531 = vld [vmem:[%s2528 + $0x8] sm:$0xf]
        %v2532 = vld [vmem:[%s2528 + $0xc] sm:$0xf]
        %s2533 = scalar_lea.vmem [#allocation7], 5
        %v2534 = vld [vmem:[%s2533] sm:$0x1]
        %v2535 = vpack.c.bf16 %v2513, %v2512
        %v2536 = vpack.c.bf16 %v2515, %v2514
        %v2537 = vpack.c.bf16 %v2517, %v2516
        %v2538 = vpack.c.bf16 %v2519, %v2518
        %v2539 = vpack.c.bf16 %v2521, %v2520
        %v2540 = vpack.c.bf16 %v2523, %v2522
        %v2541 = vpack.c.bf16 %v2525, %v2524
        %v2542 = vpack.c.bf16 %v2527, %v2526
        %v2544 = vlaneseq
        %v2545 = vshrl.u32 %v2544, 7
        %v2546 = vsub.s32 0, %v2545
        %v2547 = vrot.slane %v2534, %v2546
        %v2553 = vunpack.c.l.b16 %v2529
        %v2554 = vunpack.c.l.b16 %v2530
        %v2555 = vunpack.c.l.b16 %v2531
        %v2556 = vunpack.c.l.b16 %v2532
        %v2557 = vpack.c.b16 %v2554, %v2553
        %v2558 = vpack.c.b16 %v2556, %v2555
        %v2562 = vsel %vm911, %v2535, 0
        %v2565 = vsel %vm911, %v2536, 0
        %v2568 = vsel %vm911, %v2537, 0
        %v2571 = vsel %vm911, %v2538, 0
        %v2574 = vsel %vm911, %v2539, 0
        %v2577 = vsel %vm911, %v2540, 0
        %v2580 = vsel %vm911, %v2541, 0
        %v2583 = vsel %vm911, %v2542, 0
        %2585 = vmatprep.subr.bf16.mxu0 0
        %2586 = vmatpush1.bf16.msra.mxu0 %v2557
        %2587 = vmatprep.subr.bf16.mxu0 0
        %2588 = vmatpush1.bf16.msra.mxu0 %v2558
        %2589 = vmatprep.subr.bf16.mxu0 0
        %2590 = vmatpush1.bf16.msra.mxu0 0
        %2591 = vmatprep.subr.bf16.mxu0 0
        %2592 = vmatpush1.bf16.msra.mxu0 0
        %2593 = vmatprep.subr.bf16.mxu0 0
        %2594 = vmatpush1.bf16.msra.mxu0 0
        %2595 = vmatprep.subr.bf16.mxu0 0
        %2596 = vmatpush1.bf16.msra.mxu0 0
        %2597 = vmatprep.subr.bf16.mxu0 0
        %2598 = vmatpush1.bf16.msra.mxu0 0
        %2599 = vmatprep.subr.bf16.mxu0 0
        %2600 = vmatpush1.bf16.msra.mxu0 0
        %2601 = vmatprep.subr.bf16.mxu0 0
        %2602 = vmatpush1.bf16.msra.mxu0 0
        %2603 = vmatprep.subr.bf16.mxu0 0
        %2604 = vmatpush1.bf16.msra.mxu0 0
        %2605 = vmatprep.subr.bf16.mxu0 0
        %2606 = vmatpush1.bf16.msra.mxu0 0
        %2607 = vmatprep.subr.bf16.mxu0 0
        %2608 = vmatpush1.bf16.msra.mxu0 0
        %2609 = vmatprep.subr.bf16.mxu0 0
        %2610 = vmatpush1.bf16.msra.mxu0 0
        %2611 = vmatprep.subr.bf16.mxu0 0
        %2612 = vmatpush1.bf16.msra.mxu0 0
        %2613 = vmatprep.subr.bf16.mxu0 0
        %2614 = vmatpush1.bf16.msra.mxu0 0
        %2615 = vmatprep.subr.bf16.mxu0 0
        %2616 = vmatpush1.bf16.msra.mxu0 0
        %2617 = vmatprep.mubr.bf16.mxu0 0
        %2618 = vmatmul.mubr.bf16.gmra.mrb[0].mxu0 %v2562
        %v2619 = vpop.f32.mrb[0].mxu0
        %v2620 = vadd.f32 %v2547, %v2619
        %v2621 = vpop.f32.mrb[0].mxu0
        %v2622 = vpop.f32.mrb[0].mxu0
        %v2623 = vadd.f32 %v2547, %v2622
        %v2624 = vpop.f32.mrb[0].mxu0
        %2625 = vmatprep.mubr.bf16.mxu0 0
        %2626 = vmatmul.mubr.bf16.gmra.mrb[0].mxu0 %v2565
        %v2627 = vpop.f32.mrb[0].mxu0
        %v2628 = vadd.f32 %v2547, %v2627
        %v2629 = vpop.f32.mrb[0].mxu0
        %v2630 = vpop.f32.mrb[0].mxu0
        %v2631 = vadd.f32 %v2547, %v2630
        %v2632 = vpop.f32.mrb[0].mxu0
        %2633 = vmatprep.mubr.bf16.mxu0 0
        %2634 = vmatmul.mubr.bf16.gmra.mrb[0].mxu0 %v2568
        %v2635 = vpop.f32.mrb[0].mxu0
        %v2636 = vadd.f32 %v2547, %v2635
        %v2637 = vpop.f32.mrb[0].mxu0
        %v2638 = vpop.f32.mrb[0].mxu0
        %v2639 = vadd.f32 %v2547, %v2638
        %v2640 = vpop.f32.mrb[0].mxu0
        %2641 = vmatprep.mubr.bf16.mxu0 0
        %2642 = vmatmul.mubr.bf16.gmra.mrb[0].mxu0 %v2571
        %v2643 = vpop.f32.mrb[0].mxu0
        %v2644 = vadd.f32 %v2547, %v2643
        %v2645 = vpop.f32.mrb[0].mxu0
        %v2646 = vpop.f32.mrb[0].mxu0
        %v2647 = vadd.f32 %v2547, %v2646
        %v2648 = vpop.f32.mrb[0].mxu0
        %2649 = vmatprep.mubr.bf16.mxu0 0
        %2650 = vmatmul.mubr.bf16.gmra.mrb[0].mxu0 %v2574
        %v2651 = vpop.f32.mrb[0].mxu0
        %v2652 = vadd.f32 %v2547, %v2651
        %v2653 = vpop.f32.mrb[0].mxu0
        %v2654 = vpop.f32.mrb[0].mxu0
        %v2655 = vadd.f32 %v2547, %v2654
        %v2656 = vpop.f32.mrb[0].mxu0
        %2657 = vmatprep.mubr.bf16.mxu0 0
        %2658 = vmatmul.mubr.bf16.gmra.mrb[0].mxu0 %v2577
        %v2659 = vpop.f32.mrb[0].mxu0
        %v2660 = vadd.f32 %v2547, %v2659
        %v2661 = vpop.f32.mrb[0].mxu0
        %v2662 = vpop.f32.mrb[0].mxu0
        %v2663 = vadd.f32 %v2547, %v2662
        %v2664 = vpop.f32.mrb[0].mxu0
        %2665 = vmatprep.mubr.bf16.mxu0 0
        %2666 = vmatmul.mubr.bf16.gmra.mrb[0].mxu0 %v2580
        %v2667 = vpop.f32.mrb[0].mxu0
        %v2668 = vadd.f32 %v2547, %v2667
        %v2669 = vpop.f32.mrb[0].mxu0
        %v2670 = vpop.f32.mrb[0].mxu0
        %v2671 = vadd.f32 %v2547, %v2670
        %v2672 = vpop.f32.mrb[0].mxu0
        %2673 = vmatprep.mubr.bf16.mxu0 0
        %2674 = vmatmul.mubr.bf16.gmra.mrb[0].mxu0 %v2583
        %v2675 = vpop.f32.mrb[0].mxu0
        %v2676 = vadd.f32 %v2547, %v2675
        %v2677 = vpop.f32.mrb[0].mxu0
        %v2678 = vpop.f32.mrb[0].mxu0
        %v2679 = vadd.f32 %v2547, %v2678
        %v2680 = vpop.f32.mrb[0].mxu0
        %2681 = vdwg.mxu0
        %2683 = vrot.lane.b32.xlu0 %v2083, 64
        %v2684 = vpop.permute.xlu0 %2683
        %v2686 = vmul.f32 %v2620, %v2684
        %v2687 = vmul.f32 %v2623, %v2684
        %v2688 = vmul.f32 %v2628, %v2684
        %v2689 = vmul.f32 %v2631, %v2684
        %v2690 = vmul.f32 %v2636, %v2684
        %v2691 = vmul.f32 %v2639, %v2684
        %v2692 = vmul.f32 %v2644, %v2684
        %v2693 = vmul.f32 %v2647, %v2684
        %v2694 = vmul.f32 %v2652, %v2684
        %v2695 = vmul.f32 %v2655, %v2684
        %v2696 = vmul.f32 %v2660, %v2684
        %v2697 = vmul.f32 %v2663, %v2684
        %v2698 = vmul.f32 %v2668, %v2684
        %v2699 = vmul.f32 %v2671, %v2684
        %v2700 = vmul.f32 %v2676, %v2684
        %v2701 = vmul.f32 %v2679, %v2684
        %2702 = vrot.lane.b32.xlu0 %v2103, 32
        %v2703 = vpop.permute.xlu0 %2702
        %v2705 = vadd.f32 %v2686, %v2703
        %v2706 = vadd.f32 %v2687, %v2703
        %v2707 = vadd.f32 %v2688, %v2703
        %v2708 = vadd.f32 %v2689, %v2703
        %v2709 = vadd.f32 %v2690, %v2703
        %v2710 = vadd.f32 %v2691, %v2703
        %v2711 = vadd.f32 %v2692, %v2703
        %v2712 = vadd.f32 %v2693, %v2703
        %v2713 = vadd.f32 %v2694, %v2703
        %v2714 = vadd.f32 %v2695, %v2703
        %v2715 = vadd.f32 %v2696, %v2703
        %v2716 = vadd.f32 %v2697, %v2703
        %v2717 = vadd.f32 %v2698, %v2703
        %v2718 = vadd.f32 %v2699, %v2703
        %v2719 = vadd.f32 %v2700, %v2703
        %v2720 = vadd.f32 %v2701, %v2703
        %v2721 = vld [vmem:[#allocation12] sm:$0xf]
        %v2722 = vld [vmem:[#allocation12 + $0x4] sm:$0xf]
        %v2723 = vld [vmem:[#allocation12 + $0x8] sm:$0xf]
        %v2724 = vld [vmem:[#allocation12 + $0xc] sm:$0xf]
        %v2725 = vld [vmem:[#allocation15] sm:$0x1]
        %v2726 = vpack.c.bf16 %v2706, %v2705
        %v2727 = vpack.c.bf16 %v2708, %v2707
        %v2728 = vpack.c.bf16 %v2710, %v2709
        %v2729 = vpack.c.bf16 %v2712, %v2711
        %v2730 = vpack.c.bf16 %v2714, %v2713
        %v2731 = vpack.c.bf16 %v2716, %v2715
        %v2732 = vpack.c.bf16 %v2718, %v2717
        %v2733 = vpack.c.bf16 %v2720, %v2719
        %v2735 = vlaneseq
        %v2736 = vshrl.u32 %v2735, 7
        %v2737 = vsub.s32 0, %v2736
        %v2738 = vrot.slane %v2725, %v2737
        %v2744 = vunpack.c.l.b16 %v2721
        %v2745 = vunpack.c.l.b16 %v2722
        %v2746 = vunpack.c.l.b16 %v2723
        %v2747 = vunpack.c.l.b16 %v2724
        %v2748 = vpack.c.b16 %v2745, %v2744
        %v2749 = vpack.c.b16 %v2747, %v2746
        %v2753 = vsel %vm911, %v2726, 0
        %v2756 = vsel %vm911, %v2727, 0
        %v2759 = vsel %vm911, %v2728, 0
        %v2762 = vsel %vm911, %v2729, 0
        %v2765 = vsel %vm911, %v2730, 0
        %v2768 = vsel %vm911, %v2731, 0
        %v2771 = vsel %vm911, %v2732, 0
        %v2774 = vsel %vm911, %v2733, 0
        %2776 = vmatprep.subr.bf16.mxu0 0
        %2777 = vmatpush1.bf16.msra.mxu0 %v2748
        %2778 = vmatprep.subr.bf16.mxu0 0
        %2779 = vmatpush1.bf16.msra.mxu0 %v2749
        %2780 = vmatprep.subr.bf16.mxu0 0
        %2781 = vmatpush1.bf16.msra.mxu0 0
        %2782 = vmatprep.subr.bf16.mxu0 0
        %2783 = vmatpush1.bf16.msra.mxu0 0
        %2784 = vmatprep.subr.bf16.mxu0 0
        %2785 = vmatpush1.bf16.msra.mxu0 0
        %2786 = vmatprep.subr.bf16.mxu0 0
        %2787 = vmatpush1.bf16.msra.mxu0 0
        %2788 = vmatprep.subr.bf16.mxu0 0
        %2789 = vmatpush1.bf16.msra.mxu0 0
        %2790 = vmatprep.subr.bf16.mxu0 0
        %2791 = vmatpush1.bf16.msra.mxu0 0
        %2792 = vmatprep.subr.bf16.mxu0 0
        %2793 = vmatpush1.bf16.msra.mxu0 0
        %2794 = vmatprep.subr.bf16.mxu0 0
        %2795 = vmatpush1.bf16.msra.mxu0 0
        %2796 = vmatprep.subr.bf16.mxu0 0
        %2797 = vmatpush1.bf16.msra.mxu0 0
        %2798 = vmatprep.subr.bf16.mxu0 0
        %2799 = vmatpush1.bf16.msra.mxu0 0
        %2800 = vmatprep.subr.bf16.mxu0 0
        %2801 = vmatpush1.bf16.msra.mxu0 0
        %2802 = vmatprep.subr.bf16.mxu0 0
        %2803 = vmatpush1.bf16.msra.mxu0 0
        %2804 = vmatprep.subr.bf16.mxu0 0
        %2805 = vmatpush1.bf16.msra.mxu0 0
        %2806 = vmatprep.subr.bf16.mxu0 0
        %2807 = vmatpush1.bf16.msra.mxu0 0
        %2808 = vmatprep.mubr.bf16.mxu0 0
        %2809 = vmatmul.mubr.bf16.gmra.mrb[0].mxu0 %v2753
        %v2810 = vpop.f32.mrb[0].mxu0
        %v2811 = vadd.f32 %v2738, %v2810
        %v2812 = vpop.f32.mrb[0].mxu0
        %v2813 = vpop.f32.mrb[0].mxu0
        %v2814 = vadd.f32 %v2738, %v2813
        %v2815 = vpop.f32.mrb[0].mxu0
        %2816 = vmatprep.mubr.bf16.mxu0 0
        %2817 = vmatmul.mubr.bf16.gmra.mrb[0].mxu0 %v2756
        %v2818 = vpop.f32.mrb[0].mxu0
        %v2819 = vadd.f32 %v2738, %v2818
        %v2820 = vpop.f32.mrb[0].mxu0
        %v2821 = vpop.f32.mrb[0].mxu0
        %v2822 = vadd.f32 %v2738, %v2821
        %v2823 = vpop.f32.mrb[0].mxu0
        %2824 = vmatprep.mubr.bf16.mxu0 0
        %2825 = vmatmul.mubr.bf16.gmra.mrb[0].mxu0 %v2759
        %v2826 = vpop.f32.mrb[0].mxu0
        %v2827 = vadd.f32 %v2738, %v2826
        %v2828 = vpop.f32.mrb[0].mxu0
        %v2829 = vpop.f32.mrb[0].mxu0
        %v2830 = vadd.f32 %v2738, %v2829
        %v2831 = vpop.f32.mrb[0].mxu0
        %2832 = vmatprep.mubr.bf16.mxu0 0
        %2833 = vmatmul.mubr.bf16.gmra.mrb[0].mxu0 %v2762
        %v2834 = vpop.f32.mrb[0].mxu0
        %v2835 = vadd.f32 %v2738, %v2834
        %v2836 = vpop.f32.mrb[0].mxu0
        %v2837 = vpop.f32.mrb[0].mxu0
        %v2838 = vadd.f32 %v2738, %v2837
        %v2839 = vpop.f32.mrb[0].mxu0
        %2840 = vmatprep.mubr.bf16.mxu0 0
        %2841 = vmatmul.mubr.bf16.gmra.mrb[0].mxu0 %v2765
        %v2842 = vpop.f32.mrb[0].mxu0
        %v2843 = vadd.f32 %v2738, %v2842
        %v2844 = vpop.f32.mrb[0].mxu0
        %v2845 = vpop.f32.mrb[0].mxu0
        %v2846 = vadd.f32 %v2738, %v2845
        %v2847 = vpop.f32.mrb[0].mxu0
        %2848 = vmatprep.mubr.bf16.mxu0 0
        %2849 = vmatmul.mubr.bf16.gmra.mrb[0].mxu0 %v2768
        %v2850 = vpop.f32.mrb[0].mxu0
        %v2851 = vadd.f32 %v2738, %v2850
        %v2852 = vpop.f32.mrb[0].mxu0
        %v2853 = vpop.f32.mrb[0].mxu0
        %v2854 = vadd.f32 %v2738, %v2853
        %v2855 = vpop.f32.mrb[0].mxu0
        %2856 = vmatprep.mubr.bf16.mxu0 0
        %2857 = vmatmul.mubr.bf16.gmra.mrb[0].mxu0 %v2771
        %v2858 = vpop.f32.mrb[0].mxu0
        %v2859 = vadd.f32 %v2738, %v2858
        %v2860 = vpop.f32.mrb[0].mxu0
        %v2861 = vpop.f32.mrb[0].mxu0
        %v2862 = vadd.f32 %v2738, %v2861
        %v2863 = vpop.f32.mrb[0].mxu0
        %2864 = vmatprep.mubr.bf16.mxu0 0
        %2865 = vmatmul.mubr.bf16.gmra.mrb[0].mxu0 %v2774
        %v2866 = vpop.f32.mrb[0].mxu0
        %v2867 = vadd.f32 %v2738, %v2866
        %v2868 = vpop.f32.mrb[0].mxu0
        %v2869 = vpop.f32.mrb[0].mxu0
        %v2870 = vadd.f32 %v2738, %v2869
        %v2871 = vpop.f32.mrb[0].mxu0
        %2872 = vdwg.mxu0
        %vm2873 = vcmp.gt.f32.partialorder %v2811, 0.0
        %vm2874 = vcmp.gt.f32.partialorder %v2814, 0.0
        %vm2875 = vcmp.gt.f32.partialorder %v2819, 0.0
        %vm2876 = vcmp.gt.f32.partialorder %v2822, 0.0
        %vm2877 = vcmp.gt.f32.partialorder %v2827, 0.0
        %vm2878 = vcmp.gt.f32.partialorder %v2830, 0.0
        %vm2879 = vcmp.gt.f32.partialorder %v2835, 0.0
        %vm2880 = vcmp.gt.f32.partialorder %v2838, 0.0
        %vm2881 = vcmp.gt.f32.partialorder %v2843, 0.0
        %vm2882 = vcmp.gt.f32.partialorder %v2846, 0.0
        %vm2883 = vcmp.gt.f32.partialorder %v2851, 0.0
        %vm2884 = vcmp.gt.f32.partialorder %v2854, 0.0
        %vm2885 = vcmp.gt.f32.partialorder %v2859, 0.0
        %vm2886 = vcmp.gt.f32.partialorder %v2862, 0.0
        %vm2887 = vcmp.gt.f32.partialorder %v2867, 0.0
        %vm2888 = vcmp.gt.f32.partialorder %v2870, 0.0
        %v2889 = vmul.f32 %v2811, 0.2
        %v2890 = vmul.f32 %v2814, 0.2
        %v2891 = vmul.f32 %v2819, 0.2
        %v2892 = vmul.f32 %v2822, 0.2
        %v2893 = vmul.f32 %v2827, 0.2
        %v2894 = vmul.f32 %v2830, 0.2
        %v2895 = vmul.f32 %v2835, 0.2
        %v2896 = vmul.f32 %v2838, 0.2
        %v2897 = vmul.f32 %v2843, 0.2
        %v2898 = vmul.f32 %v2846, 0.2
        %v2899 = vmul.f32 %v2851, 0.2
        %v2900 = vmul.f32 %v2854, 0.2
        %v2901 = vmul.f32 %v2859, 0.2
        %v2902 = vmul.f32 %v2862, 0.2
        %v2903 = vmul.f32 %v2867, 0.2
        %v2904 = vmul.f32 %v2870, 0.2
        %v2905 = vsel %vm2873, %v2811, %v2889
        %v2906 = vsel %vm2874, %v2814, %v2890
        %v2907 = vsel %vm2875, %v2819, %v2891
        %v2908 = vsel %vm2876, %v2822, %v2892
        %v2909 = vsel %vm2877, %v2827, %v2893
        %v2910 = vsel %vm2878, %v2830, %v2894
        %v2911 = vsel %vm2879, %v2835, %v2895
        %v2912 = vsel %vm2880, %v2838, %v2896
        %v2913 = vsel %vm2881, %v2843, %v2897
        %v2914 = vsel %vm2882, %v2846, %v2898
        %v2915 = vsel %vm2883, %v2851, %v2899
        %v2916 = vsel %vm2884, %v2854, %v2900
        %v2917 = vsel %vm2885, %v2859, %v2901
        %v2918 = vsel %vm2886, %v2862, %v2902
        %v2919 = vsel %vm2887, %v2867, %v2903
        %v2920 = vsel %vm2888, %v2870, %v2904
        %v2921 = vld [vmem:[#allocation13] sm:$0xf]
        %v2922 = vld [vmem:[#allocation13 + $0x4] sm:$0xf]
        %v2923 = vld [vmem:[#allocation13 + $0x8] sm:$0xf]
        %v2924 = vld [vmem:[#allocation13 + $0xc] sm:$0xf]
        %v2925 = vld [vmem:[#allocation13 + $0x10] sm:$0xf]
        %v2926 = vld [vmem:[#allocation13 + $0x14] sm:$0xf]
        %v2927 = vld [vmem:[#allocation13 + $0x18] sm:$0xf]
        %v2928 = vld [vmem:[#allocation13 + $0x1c] sm:$0xf]
        %s2929 = scalar_lea.vmem [#allocation15], 1
        %v2930 = vld [vmem:[%s2929] sm:$0x1]
        %v2931 = vpack.c.bf16 %v2906, %v2905
        %v2932 = vpack.c.bf16 %v2908, %v2907
        %v2933 = vpack.c.bf16 %v2910, %v2909
        %v2934 = vpack.c.bf16 %v2912, %v2911
        %v2935 = vpack.c.bf16 %v2914, %v2913
        %v2936 = vpack.c.bf16 %v2916, %v2915
        %v2937 = vpack.c.bf16 %v2918, %v2917
        %v2938 = vpack.c.bf16 %v2920, %v2919
        %v2940 = vlaneseq
        %v2941 = vshrl.u32 %v2940, 7
        %v2942 = vsub.s32 0, %v2941
        %v2943 = vrot.slane %v2930, %v2942
        %v2953 = vunpack.c.l.b16 %v2921
        %v2954 = vunpack.c.l.b16 %v2922
        %v2955 = vunpack.c.l.b16 %v2923
        %v2956 = vunpack.c.l.b16 %v2924
        %v2957 = vunpack.c.l.b16 %v2925
        %v2958 = vunpack.c.l.b16 %v2926
        %v2959 = vunpack.c.l.b16 %v2927
        %v2960 = vunpack.c.l.b16 %v2928
        %v2961 = vpack.c.b16 %v2954, %v2953
        %v2962 = vpack.c.b16 %v2956, %v2955
        %v2963 = vpack.c.b16 %v2958, %v2957
        %v2964 = vpack.c.b16 %v2960, %v2959
        %vm2969 = vcmask 523264
        %v2971 = vsel %vm2969, %v2931, 0
        %v2974 = vsel %vm2969, %v2932, 0
        %v2977 = vsel %vm2969, %v2933, 0
        %v2980 = vsel %vm2969, %v2934, 0
        %v2983 = vsel %vm2969, %v2935, 0
        %v2986 = vsel %vm2969, %v2936, 0
        %v2989 = vsel %vm2969, %v2937, 0
        %v2992 = vsel %vm2969, %v2938, 0
        %2994 = vmatprep.subr.bf16.mxu0 0
        %2995 = vmatpush1.bf16.msra.mxu0 %v2961
        %2996 = vmatprep.subr.bf16.mxu0 0
        %2997 = vmatpush1.bf16.msra.mxu0 %v2962
        %2998 = vmatprep.subr.bf16.mxu0 0
        %2999 = vmatpush1.bf16.msra.mxu0 %v2963
        %3000 = vmatprep.subr.bf16.mxu0 0
        %3001 = vmatpush1.bf16.msra.mxu0 %v2964
        %3002 = vmatprep.subr.bf16.mxu0 0
        %3003 = vmatpush1.bf16.msra.mxu0 0
        %3004 = vmatprep.subr.bf16.mxu0 0
        %3005 = vmatpush1.bf16.msra.mxu0 0
        %3006 = vmatprep.subr.bf16.mxu0 0
        %3007 = vmatpush1.bf16.msra.mxu0 0
        %3008 = vmatprep.subr.bf16.mxu0 0
        %3009 = vmatpush1.bf16.msra.mxu0 0
        %3010 = vmatprep.subr.bf16.mxu0 0
        %3011 = vmatpush1.bf16.msra.mxu0 0
        %3012 = vmatprep.subr.bf16.mxu0 0
        %3013 = vmatpush1.bf16.msra.mxu0 0
        %3014 = vmatprep.subr.bf16.mxu0 0
        %3015 = vmatpush1.bf16.msra.mxu0 0
        %3016 = vmatprep.subr.bf16.mxu0 0
        %3017 = vmatpush1.bf16.msra.mxu0 0
        %3018 = vmatprep.subr.bf16.mxu0 0
        %3019 = vmatpush1.bf16.msra.mxu0 0
        %3020 = vmatprep.subr.bf16.mxu0 0
        %3021 = vmatpush1.bf16.msra.mxu0 0
        %3022 = vmatprep.subr.bf16.mxu0 0
        %3023 = vmatpush1.bf16.msra.mxu0 0
        %3024 = vmatprep.subr.bf16.mxu0 0
        %3025 = vmatpush1.bf16.msra.mxu0 0
        %3026 = vmatprep.mubr.bf16.mxu0 0
        %3027 = vmatmul.mubr.bf16.gmra.mrb[0].mxu0 %v2971
        %v3028 = vpop.f32.mrb[0].mxu0
        %v3029 = vadd.f32 %v2943, %v3028
        %v3030 = vpop.f32.mrb[0].mxu0
        %v3031 = vpop.f32.mrb[0].mxu0
        %v3032 = vadd.f32 %v2943, %v3031
        %v3033 = vpop.f32.mrb[0].mxu0
        %3034 = vmatprep.mubr.bf16.mxu0 0
        %3035 = vmatmul.mubr.bf16.gmra.mrb[0].mxu0 %v2974
        %v3036 = vpop.f32.mrb[0].mxu0
        %v3037 = vadd.f32 %v2943, %v3036
        %v3038 = vpop.f32.mrb[0].mxu0
        %v3039 = vpop.f32.mrb[0].mxu0
        %v3040 = vadd.f32 %v2943, %v3039
        %v3041 = vpop.f32.mrb[0].mxu0
        %3042 = vmatprep.mubr.bf16.mxu0 0
        %3043 = vmatmul.mubr.bf16.gmra.mrb[0].mxu0 %v2977
        %v3044 = vpop.f32.mrb[0].mxu0
        %v3045 = vadd.f32 %v2943, %v3044
        %v3046 = vpop.f32.mrb[0].mxu0
        %v3047 = vpop.f32.mrb[0].mxu0
        %v3048 = vadd.f32 %v2943, %v3047
        %v3049 = vpop.f32.mrb[0].mxu0
        %3050 = vmatprep.mubr.bf16.mxu0 0
        %3051 = vmatmul.mubr.bf16.gmra.mrb[0].mxu0 %v2980
        %v3052 = vpop.f32.mrb[0].mxu0
        %v3053 = vadd.f32 %v2943, %v3052
        %v3054 = vpop.f32.mrb[0].mxu0
        %v3055 = vpop.f32.mrb[0].mxu0
        %v3056 = vadd.f32 %v2943, %v3055
        %v3057 = vpop.f32.mrb[0].mxu0
        %3058 = vmatprep.mubr.bf16.mxu0 0
        %3059 = vmatmul.mubr.bf16.gmra.mrb[0].mxu0 %v2983
        %v3060 = vpop.f32.mrb[0].mxu0
        %v3061 = vadd.f32 %v2943, %v3060
        %v3062 = vpop.f32.mrb[0].mxu0
        %v3063 = vpop.f32.mrb[0].mxu0
        %v3064 = vadd.f32 %v2943, %v3063
        %v3065 = vpop.f32.mrb[0].mxu0
        %3066 = vmatprep.mubr.bf16.mxu0 0
        %3067 = vmatmul.mubr.bf16.gmra.mrb[0].mxu0 %v2986
        %v3068 = vpop.f32.mrb[0].mxu0
        %v3069 = vadd.f32 %v2943, %v3068
        %v3070 = vpop.f32.mrb[0].mxu0
        %v3071 = vpop.f32.mrb[0].mxu0
        %v3072 = vadd.f32 %v2943, %v3071
        %v3073 = vpop.f32.mrb[0].mxu0
        %3074 = vmatprep.mubr.bf16.mxu0 0
        %3075 = vmatmul.mubr.bf16.gmra.mrb[0].mxu0 %v2989
        %v3076 = vpop.f32.mrb[0].mxu0
        %v3077 = vadd.f32 %v2943, %v3076
        %v3078 = vpop.f32.mrb[0].mxu0
        %v3079 = vpop.f32.mrb[0].mxu0
        %v3080 = vadd.f32 %v2943, %v3079
        %v3081 = vpop.f32.mrb[0].mxu0
        %3082 = vmatprep.mubr.bf16.mxu0 0
        %3083 = vmatmul.mubr.bf16.gmra.mrb[0].mxu0 %v2992
        %v3084 = vpop.f32.mrb[0].mxu0
        %v3085 = vadd.f32 %v2943, %v3084
        %v3086 = vpop.f32.mrb[0].mxu0
        %v3087 = vpop.f32.mrb[0].mxu0
        %v3088 = vadd.f32 %v2943, %v3087
        %v3089 = vpop.f32.mrb[0].mxu0
        %3090 = vdwg.mxu0
        %vm3091 = vcmp.gt.f32.partialorder %v3029, 0.0
        %vm3092 = vcmp.gt.f32.partialorder %v3032, 0.0
        %vm3093 = vcmp.gt.f32.partialorder %v3037, 0.0
        %vm3094 = vcmp.gt.f32.partialorder %v3040, 0.0
        %vm3095 = vcmp.gt.f32.partialorder %v3045, 0.0
        %vm3096 = vcmp.gt.f32.partialorder %v3048, 0.0
        %vm3097 = vcmp.gt.f32.partialorder %v3053, 0.0
        %vm3098 = vcmp.gt.f32.partialorder %v3056, 0.0
        %vm3099 = vcmp.gt.f32.partialorder %v3061, 0.0
        %vm3100 = vcmp.gt.f32.partialorder %v3064, 0.0
        %vm3101 = vcmp.gt.f32.partialorder %v3069, 0.0
        %vm3102 = vcmp.gt.f32.partialorder %v3072, 0.0
        %vm3103 = vcmp.gt.f32.partialorder %v3077, 0.0
        %vm3104 = vcmp.gt.f32.partialorder %v3080, 0.0
        %vm3105 = vcmp.gt.f32.partialorder %v3085, 0.0
        %vm3106 = vcmp.gt.f32.partialorder %v3088, 0.0
        %v3107 = vmul.f32 %v3029, 0.2
        %v3108 = vmul.f32 %v3032, 0.2
        %v3109 = vmul.f32 %v3037, 0.2
        %v3110 = vmul.f32 %v3040, 0.2
        %v3111 = vmul.f32 %v3045, 0.2
        %v3112 = vmul.f32 %v3048, 0.2
        %v3113 = vmul.f32 %v3053, 0.2
        %v3114 = vmul.f32 %v3056, 0.2
        %v3115 = vmul.f32 %v3061, 0.2
        %v3116 = vmul.f32 %v3064, 0.2
        %v3117 = vmul.f32 %v3069, 0.2
        %v3118 = vmul.f32 %v3072, 0.2
        %v3119 = vmul.f32 %v3077, 0.2
        %v3120 = vmul.f32 %v3080, 0.2
        %v3121 = vmul.f32 %v3085, 0.2
        %v3122 = vmul.f32 %v3088, 0.2
        %v3123 = vsel %vm3091, %v3029, %v3107
        %v3124 = vsel %vm3092, %v3032, %v3108
        %v3125 = vsel %vm3093, %v3037, %v3109
        %v3126 = vsel %vm3094, %v3040, %v3110
        %v3127 = vsel %vm3095, %v3045, %v3111
        %v3128 = vsel %vm3096, %v3048, %v3112
        %v3129 = vsel %vm3097, %v3053, %v3113
        %v3130 = vsel %vm3098, %v3056, %v3114
        %v3131 = vsel %vm3099, %v3061, %v3115
        %v3132 = vsel %vm3100, %v3064, %v3116
        %v3133 = vsel %vm3101, %v3069, %v3117
        %v3134 = vsel %vm3102, %v3072, %v3118
        %v3135 = vsel %vm3103, %v3077, %v3119
        %v3136 = vsel %vm3104, %v3080, %v3120
        %v3137 = vsel %vm3105, %v3085, %v3121
        %v3138 = vsel %vm3106, %v3088, %v3122
        %s3139 = scalar_lea.vmem [#allocation13], 32
        %v3140 = vld [vmem:[%s3139] sm:$0xf]
        %v3141 = vld [vmem:[%s3139 + $0x4] sm:$0xf]
        %v3142 = vld [vmem:[%s3139 + $0x8] sm:$0xf]
        %v3143 = vld [vmem:[%s3139 + $0xc] sm:$0xf]
        %v3144 = vld [vmem:[%s3139 + $0x10] sm:$0xf]
        %v3145 = vld [vmem:[%s3139 + $0x14] sm:$0xf]
        %v3146 = vld [vmem:[%s3139 + $0x18] sm:$0xf]
        %v3147 = vld [vmem:[%s3139 + $0x1c] sm:$0xf]
        %s3148 = scalar_lea.vmem [#allocation15], 2
        %v3149 = vld [vmem:[%s3148] sm:$0x1]
        %v3150 = vpack.c.bf16 %v3124, %v3123
        %v3151 = vpack.c.bf16 %v3126, %v3125
        %v3152 = vpack.c.bf16 %v3128, %v3127
        %v3153 = vpack.c.bf16 %v3130, %v3129
        %v3154 = vpack.c.bf16 %v3132, %v3131
        %v3155 = vpack.c.bf16 %v3134, %v3133
        %v3156 = vpack.c.bf16 %v3136, %v3135
        %v3157 = vpack.c.bf16 %v3138, %v3137
        %v3159 = vlaneseq
        %v3160 = vshrl.u32 %v3159, 7
        %v3161 = vsub.s32 0, %v3160
        %v3162 = vrot.slane %v3149, %v3161
        %v3172 = vunpack.c.l.b16 %v3140
        %v3173 = vunpack.c.l.b16 %v3141
        %v3174 = vunpack.c.l.b16 %v3142
        %v3175 = vunpack.c.l.b16 %v3143
        %v3176 = vunpack.c.l.b16 %v3144
        %v3177 = vunpack.c.l.b16 %v3145
        %v3178 = vunpack.c.l.b16 %v3146
        %v3179 = vunpack.c.l.b16 %v3147
        %v3180 = vpack.c.b16 %v3173, %v3172
        %v3181 = vpack.c.b16 %v3175, %v3174
        %v3182 = vpack.c.b16 %v3177, %v3176
        %v3183 = vpack.c.b16 %v3179, %v3178
        %v3189 = vsel %vm2969, %v3150, 0
        %v3192 = vsel %vm2969, %v3151, 0
        %v3195 = vsel %vm2969, %v3152, 0
        %v3198 = vsel %vm2969, %v3153, 0
        %v3201 = vsel %vm2969, %v3154, 0
        %v3204 = vsel %vm2969, %v3155, 0
        %v3207 = vsel %vm2969, %v3156, 0
        %v3210 = vsel %vm2969, %v3157, 0
        %3212 = vmatprep.subr.bf16.mxu0 0
        %3213 = vmatpush1.bf16.msra.mxu0 %v3180
        %3214 = vmatprep.subr.bf16.mxu0 0
        %3215 = vmatpush1.bf16.msra.mxu0 %v3181
        %3216 = vmatprep.subr.bf16.mxu0 0
        %3217 = vmatpush1.bf16.msra.mxu0 %v3182
        %3218 = vmatprep.subr.bf16.mxu0 0
        %3219 = vmatpush1.bf16.msra.mxu0 %v3183
        %3220 = vmatprep.subr.bf16.mxu0 0
        %3221 = vmatpush1.bf16.msra.mxu0 0
        %3222 = vmatprep.subr.bf16.mxu0 0
        %3223 = vmatpush1.bf16.msra.mxu0 0
        %3224 = vmatprep.subr.bf16.mxu0 0
        %3225 = vmatpush1.bf16.msra.mxu0 0
        %3226 = vmatprep.subr.bf16.mxu0 0
        %3227 = vmatpush1.bf16.msra.mxu0 0
        %3228 = vmatprep.subr.bf16.mxu0 0
        %3229 = vmatpush1.bf16.msra.mxu0 0
        %3230 = vmatprep.subr.bf16.mxu0 0
        %3231 = vmatpush1.bf16.msra.mxu0 0
        %3232 = vmatprep.subr.bf16.mxu0 0
        %3233 = vmatpush1.bf16.msra.mxu0 0
        %3234 = vmatprep.subr.bf16.mxu0 0
        %3235 = vmatpush1.bf16.msra.mxu0 0
        %3236 = vmatprep.subr.bf16.mxu0 0
        %3237 = vmatpush1.bf16.msra.mxu0 0
        %3238 = vmatprep.subr.bf16.mxu0 0
        %3239 = vmatpush1.bf16.msra.mxu0 0
        %3240 = vmatprep.subr.bf16.mxu0 0
        %3241 = vmatpush1.bf16.msra.mxu0 0
        %3242 = vmatprep.subr.bf16.mxu0 0
        %3243 = vmatpush1.bf16.msra.mxu0 0
        %3244 = vmatprep.mubr.bf16.mxu0 0
        %3245 = vmatmul.mubr.bf16.gmra.mrb[0].mxu0 %v3189
        %v3246 = vpop.f32.mrb[0].mxu0
        %v3247 = vadd.f32 %v3162, %v3246
        %v3248 = vpop.f32.mrb[0].mxu0
        %v3249 = vpop.f32.mrb[0].mxu0
        %v3250 = vadd.f32 %v3162, %v3249
        %v3251 = vpop.f32.mrb[0].mxu0
        %3252 = vmatprep.mubr.bf16.mxu0 0
        %3253 = vmatmul.mubr.bf16.gmra.mrb[0].mxu0 %v3192
        %v3254 = vpop.f32.mrb[0].mxu0
        %v3255 = vadd.f32 %v3162, %v3254
        %v3256 = vpop.f32.mrb[0].mxu0
        %v3257 = vpop.f32.mrb[0].mxu0
        %v3258 = vadd.f32 %v3162, %v3257
        %v3259 = vpop.f32.mrb[0].mxu0
        %3260 = vmatprep.mubr.bf16.mxu0 0
        %3261 = vmatmul.mubr.bf16.gmra.mrb[0].mxu0 %v3195
        %v3262 = vpop.f32.mrb[0].mxu0
        %v3263 = vadd.f32 %v3162, %v3262
        %v3264 = vpop.f32.mrb[0].mxu0
        %v3265 = vpop.f32.mrb[0].mxu0
        %v3266 = vadd.f32 %v3162, %v3265
        %v3267 = vpop.f32.mrb[0].mxu0
        %3268 = vmatprep.mubr.bf16.mxu0 0
        %3269 = vmatmul.mubr.bf16.gmra.mrb[0].mxu0 %v3198
        %v3270 = vpop.f32.mrb[0].mxu0
        %v3271 = vadd.f32 %v3162, %v3270
        %v3272 = vpop.f32.mrb[0].mxu0
        %v3273 = vpop.f32.mrb[0].mxu0
        %v3274 = vadd.f32 %v3162, %v3273
        %v3275 = vpop.f32.mrb[0].mxu0
        %3276 = vmatprep.mubr.bf16.mxu0 0
        %3277 = vmatmul.mubr.bf16.gmra.mrb[0].mxu0 %v3201
        %v3278 = vpop.f32.mrb[0].mxu0
        %v3279 = vadd.f32 %v3162, %v3278
        %v3280 = vpop.f32.mrb[0].mxu0
        %v3281 = vpop.f32.mrb[0].mxu0
        %v3282 = vadd.f32 %v3162, %v3281
        %v3283 = vpop.f32.mrb[0].mxu0
        %3284 = vmatprep.mubr.bf16.mxu0 0
        %3285 = vmatmul.mubr.bf16.gmra.mrb[0].mxu0 %v3204
        %v3286 = vpop.f32.mrb[0].mxu0
        %v3287 = vadd.f32 %v3162, %v3286
        %v3288 = vpop.f32.mrb[0].mxu0
        %v3289 = vpop.f32.mrb[0].mxu0
        %v3290 = vadd.f32 %v3162, %v3289
        %v3291 = vpop.f32.mrb[0].mxu0
        %3292 = vmatprep.mubr.bf16.mxu0 0
        %3293 = vmatmul.mubr.bf16.gmra.mrb[0].mxu0 %v3207
        %v3294 = vpop.f32.mrb[0].mxu0
        %v3295 = vadd.f32 %v3162, %v3294
        %v3296 = vpop.f32.mrb[0].mxu0
        %v3297 = vpop.f32.mrb[0].mxu0
        %v3298 = vadd.f32 %v3162, %v3297
        %v3299 = vpop.f32.mrb[0].mxu0
        %3300 = vmatprep.mubr.bf16.mxu0 0
        %3301 = vmatmul.mubr.bf16.gmra.mrb[0].mxu0 %v3210
        %v3302 = vpop.f32.mrb[0].mxu0
        %v3303 = vadd.f32 %v3162, %v3302
        %v3304 = vpop.f32.mrb[0].mxu0
        %v3305 = vpop.f32.mrb[0].mxu0
        %v3306 = vadd.f32 %v3162, %v3305
        %v3307 = vpop.f32.mrb[0].mxu0
        %3308 = vdwg.mxu0
        %vm3309 = vcmp.gt.f32.partialorder %v3247, 0.0
        %vm3310 = vcmp.gt.f32.partialorder %v3250, 0.0
        %vm3311 = vcmp.gt.f32.partialorder %v3255, 0.0
        %vm3312 = vcmp.gt.f32.partialorder %v3258, 0.0
        %vm3313 = vcmp.gt.f32.partialorder %v3263, 0.0
        %vm3314 = vcmp.gt.f32.partialorder %v3266, 0.0
        %vm3315 = vcmp.gt.f32.partialorder %v3271, 0.0
        %vm3316 = vcmp.gt.f32.partialorder %v3274, 0.0
        %vm3317 = vcmp.gt.f32.partialorder %v3279, 0.0
        %vm3318 = vcmp.gt.f32.partialorder %v3282, 0.0
        %vm3319 = vcmp.gt.f32.partialorder %v3287, 0.0
        %vm3320 = vcmp.gt.f32.partialorder %v3290, 0.0
        %vm3321 = vcmp.gt.f32.partialorder %v3295, 0.0
        %vm3322 = vcmp.gt.f32.partialorder %v3298, 0.0
        %vm3323 = vcmp.gt.f32.partialorder %v3303, 0.0
        %vm3324 = vcmp.gt.f32.partialorder %v3306, 0.0
        %v3325 = vmul.f32 %v3247, 0.2
        %v3326 = vmul.f32 %v3250, 0.2
        %v3327 = vmul.f32 %v3255, 0.2
        %v3328 = vmul.f32 %v3258, 0.2
        %v3329 = vmul.f32 %v3263, 0.2
        %v3330 = vmul.f32 %v3266, 0.2
        %v3331 = vmul.f32 %v3271, 0.2
        %v3332 = vmul.f32 %v3274, 0.2
        %v3333 = vmul.f32 %v3279, 0.2
        %v3334 = vmul.f32 %v3282, 0.2
        %v3335 = vmul.f32 %v3287, 0.2
        %v3336 = vmul.f32 %v3290, 0.2
        %v3337 = vmul.f32 %v3295, 0.2
        %v3338 = vmul.f32 %v3298, 0.2
        %v3339 = vmul.f32 %v3303, 0.2
        %v3340 = vmul.f32 %v3306, 0.2
        %v3341 = vsel %vm3309, %v3247, %v3325
        %v3342 = vsel %vm3310, %v3250, %v3326
        %v3343 = vsel %vm3311, %v3255, %v3327
        %v3344 = vsel %vm3312, %v3258, %v3328
        %v3345 = vsel %vm3313, %v3263, %v3329
        %v3346 = vsel %vm3314, %v3266, %v3330
        %v3347 = vsel %vm3315, %v3271, %v3331
        %v3348 = vsel %vm3316, %v3274, %v3332
        %v3349 = vsel %vm3317, %v3279, %v3333
        %v3350 = vsel %vm3318, %v3282, %v3334
        %v3351 = vsel %vm3319, %v3287, %v3335
        %v3352 = vsel %vm3320, %v3290, %v3336
        %v3353 = vsel %vm3321, %v3295, %v3337
        %v3354 = vsel %vm3322, %v3298, %v3338
        %v3355 = vsel %vm3323, %v3303, %v3339
        %v3356 = vsel %vm3324, %v3306, %v3340
        %v3357 = vld [vmem:[%s14] sm:$0xf]
        %v3358 = vld [vmem:[%s14 + $0x4] sm:$0xf]
        %v3359 = vld [vmem:[%s14 + $0x8] sm:$0xf]
        %v3360 = vld [vmem:[%s14 + $0xc] sm:$0xf]
        %v3361 = vld [vmem:[%s14 + $0x10] sm:$0xf]
        %v3362 = vld [vmem:[%s14 + $0x14] sm:$0xf]
        %v3363 = vld [vmem:[%s14 + $0x18] sm:$0xf]
        %v3364 = vld [vmem:[%s14 + $0x1c] sm:$0xf]
        %v3365 = vld [vmem:[%s15] sm:$0x1]
        %v3366 = vpack.c.bf16 %v3342, %v3341
        %v3367 = vpack.c.bf16 %v3344, %v3343
        %v3368 = vpack.c.bf16 %v3346, %v3345
        %v3369 = vpack.c.bf16 %v3348, %v3347
        %v3370 = vpack.c.bf16 %v3350, %v3349
        %v3371 = vpack.c.bf16 %v3352, %v3351
        %v3372 = vpack.c.bf16 %v3354, %v3353
        %v3373 = vpack.c.bf16 %v3356, %v3355
        %v3375 = vlaneseq
        %v3376 = vshrl.u32 %v3375, 7
        %v3377 = vsub.s32 0, %v3376
        %v3378 = vrot.slane %v3365, %v3377
        %v3388 = vunpack.c.l.b16 %v3357
        %v3389 = vunpack.c.l.b16 %v3358
        %v3390 = vunpack.c.l.b16 %v3359
        %v3391 = vunpack.c.l.b16 %v3360
        %v3392 = vunpack.c.l.b16 %v3361
        %v3393 = vunpack.c.l.b16 %v3362
        %v3394 = vunpack.c.l.b16 %v3363
        %v3395 = vunpack.c.l.b16 %v3364
        %v3396 = vpack.c.b16 %v3389, %v3388
        %v3397 = vpack.c.b16 %v3391, %v3390
        %v3398 = vpack.c.b16 %v3393, %v3392
        %v3399 = vpack.c.b16 %v3395, %v3394
        %v3405 = vsel %vm2969, %v3366, 0
        %v3408 = vsel %vm2969, %v3367, 0
        %v3411 = vsel %vm2969, %v3368, 0
        %v3414 = vsel %vm2969, %v3369, 0
        %v3417 = vsel %vm2969, %v3370, 0
        %v3420 = vsel %vm2969, %v3371, 0
        %v3423 = vsel %vm2969, %v3372, 0
        %v3426 = vsel %vm2969, %v3373, 0
        %3428 = vmatprep.subr.bf16.mxu0 0
        %3429 = vmatpush1.bf16.msra.mxu0 %v3396
        %3430 = vmatprep.subr.bf16.mxu0 0
        %3431 = vmatpush1.bf16.msra.mxu0 %v3397
        %3432 = vmatprep.subr.bf16.mxu0 0
        %3433 = vmatpush1.bf16.msra.mxu0 %v3398
        %3434 = vmatprep.subr.bf16.mxu0 0
        %3435 = vmatpush1.bf16.msra.mxu0 %v3399
        %3436 = vmatprep.subr.bf16.mxu0 0
        %3437 = vmatpush1.bf16.msra.mxu0 0
        %3438 = vmatprep.subr.bf16.mxu0 0
        %3439 = vmatpush1.bf16.msra.mxu0 0
        %3440 = vmatprep.subr.bf16.mxu0 0
        %3441 = vmatpush1.bf16.msra.mxu0 0
        %3442 = vmatprep.subr.bf16.mxu0 0
        %3443 = vmatpush1.bf16.msra.mxu0 0
        %3444 = vmatprep.subr.bf16.mxu0 0
        %3445 = vmatpush1.bf16.msra.mxu0 0
        %3446 = vmatprep.subr.bf16.mxu0 0
        %3447 = vmatpush1.bf16.msra.mxu0 0
        %3448 = vmatprep.subr.bf16.mxu0 0
        %3449 = vmatpush1.bf16.msra.mxu0 0
        %3450 = vmatprep.subr.bf16.mxu0 0
        %3451 = vmatpush1.bf16.msra.mxu0 0
        %3452 = vmatprep.subr.bf16.mxu0 0
        %3453 = vmatpush1.bf16.msra.mxu0 0
        %3454 = vmatprep.subr.bf16.mxu0 0
        %3455 = vmatpush1.bf16.msra.mxu0 0
        %3456 = vmatprep.subr.bf16.mxu0 0
        %3457 = vmatpush1.bf16.msra.mxu0 0
        %3458 = vmatprep.subr.bf16.mxu0 0
        %3459 = vmatpush1.bf16.msra.mxu0 0
        %3460 = vmatprep.mubr.bf16.mxu0 0
        %3461 = vmatmul.mubr.bf16.gmra.mrb[0].mxu0 %v3405
        %v3462 = vpop.f32.mrb[0].mxu0
        %v3463 = vadd.f32 %v3378, %v3462
        %v3464 = vpop.f32.mrb[0].mxu0
        %v3465 = vpop.f32.mrb[0].mxu0
        %v3466 = vadd.f32 %v3378, %v3465
        %v3467 = vpop.f32.mrb[0].mxu0
        %3468 = vmatprep.mubr.bf16.mxu0 0
        %3469 = vmatmul.mubr.bf16.gmra.mrb[0].mxu0 %v3408
        %v3470 = vpop.f32.mrb[0].mxu0
        %v3471 = vadd.f32 %v3378, %v3470
        %v3472 = vpop.f32.mrb[0].mxu0
        %v3473 = vpop.f32.mrb[0].mxu0
        %v3474 = vadd.f32 %v3378, %v3473
        %v3475 = vpop.f32.mrb[0].mxu0
        %3476 = vmatprep.mubr.bf16.mxu0 0
        %3477 = vmatmul.mubr.bf16.gmra.mrb[0].mxu0 %v3411
        %v3478 = vpop.f32.mrb[0].mxu0
        %v3479 = vadd.f32 %v3378, %v3478
        %v3480 = vpop.f32.mrb[0].mxu0
        %v3481 = vpop.f32.mrb[0].mxu0
        %v3482 = vadd.f32 %v3378, %v3481
        %v3483 = vpop.f32.mrb[0].mxu0
        %3484 = vmatprep.mubr.bf16.mxu0 0
        %3485 = vmatmul.mubr.bf16.gmra.mrb[0].mxu0 %v3414
        %v3486 = vpop.f32.mrb[0].mxu0
        %v3487 = vadd.f32 %v3378, %v3486
        %v3488 = vpop.f32.mrb[0].mxu0
        %v3489 = vpop.f32.mrb[0].mxu0
        %v3490 = vadd.f32 %v3378, %v3489
        %v3491 = vpop.f32.mrb[0].mxu0
        %3492 = vmatprep.mubr.bf16.mxu0 0
        %3493 = vmatmul.mubr.bf16.gmra.mrb[0].mxu0 %v3417
        %v3494 = vpop.f32.mrb[0].mxu0
        %v3495 = vadd.f32 %v3378, %v3494
        %v3496 = vpop.f32.mrb[0].mxu0
        %v3497 = vpop.f32.mrb[0].mxu0
        %v3498 = vadd.f32 %v3378, %v3497
        %v3499 = vpop.f32.mrb[0].mxu0
        %3500 = vmatprep.mubr.bf16.mxu0 0
        %3501 = vmatmul.mubr.bf16.gmra.mrb[0].mxu0 %v3420
        %v3502 = vpop.f32.mrb[0].mxu0
        %v3503 = vadd.f32 %v3378, %v3502
        %v3504 = vpop.f32.mrb[0].mxu0
        %v3505 = vpop.f32.mrb[0].mxu0
        %v3506 = vadd.f32 %v3378, %v3505
        %v3507 = vpop.f32.mrb[0].mxu0
        %3508 = vmatprep.mubr.bf16.mxu0 0
        %3509 = vmatmul.mubr.bf16.gmra.mrb[0].mxu0 %v3423
        %v3510 = vpop.f32.mrb[0].mxu0
        %v3511 = vadd.f32 %v3378, %v3510
        %v3512 = vpop.f32.mrb[0].mxu0
        %v3513 = vpop.f32.mrb[0].mxu0
        %v3514 = vadd.f32 %v3378, %v3513
        %v3515 = vpop.f32.mrb[0].mxu0
        %3516 = vmatprep.mubr.bf16.mxu0 0
        %3517 = vmatmul.mubr.bf16.gmra.mrb[0].mxu0 %v3426
        %v3518 = vpop.f32.mrb[0].mxu0
        %v3519 = vadd.f32 %v3378, %v3518
        %v3520 = vpop.f32.mrb[0].mxu0
        %v3521 = vpop.f32.mrb[0].mxu0
        %v3522 = vadd.f32 %v3378, %v3521
        %v3523 = vpop.f32.mrb[0].mxu0
        %3524 = vdwg.mxu0
        %3525 = vst [vmem:[%s651] sm:$0xff] %v3463
        %3526 = vst [vmem:[%s651 + $0x8] sm:$0xff] %v3466
        %3527 = vst [vmem:[%s651 + $0x10] sm:$0xff] %v3471
        %3528 = vst [vmem:[%s651 + $0x18] sm:$0xff] %v3474
        %3529 = vst [vmem:[%s651 + $0x20] sm:$0xff] %v3479
        %3530 = vst [vmem:[%s651 + $0x28] sm:$0xff] %v3482
        %3531 = vst [vmem:[%s651 + $0x30] sm:$0xff] %v3487
        %3532 = vst [vmem:[%s651 + $0x38] sm:$0xff] %v3490
        %3533 = vst [vmem:[%s651 + $0x40] sm:$0xff] %v3495
        %3534 = vst [vmem:[%s651 + $0x48] sm:$0xff] %v3498
        %3535 = vst [vmem:[%s651 + $0x50] sm:$0xff] %v3503
        %3536 = vst [vmem:[%s651 + $0x58] sm:$0xff] %v3506
        %3537 = vst [vmem:[%s651 + $0x60] sm:$0xff] %v3511
        %3538 = vst [vmem:[%s651 + $0x68] sm:$0xff] %v3514
        %3539 = vst [vmem:[%s651 + $0x70] sm:$0xff] %v3519
        %3540 = vst [vmem:[%s651 + $0x78] sm:$0xff] %v3522
        %p3541 = scmp.lt.s32.totalorder %s34, 1
        %s3542 = scalar_select %p3541, %s34, 1
        %s3543 = smul.addr %s3542, 16
        %s3544 = smul.addr %s3543, 8
        %s3545 = scalar_lea.vmem %s16, %s3544
        // Predicated region
        $region121: #{modulated_stack.1} parent=83 // pred_check
          %p3546 = pneg %p393
        $region122: #{modulated_stack.1} parent=83 // pred_check_branch
          %3548 = sbr.rel (%p3546) target = $region124
        $region123: #{modulated_stack.1} parent=83 // pred_region
          _
        $region124: #{modulated_stack.1} parent=83 // pred_fallthru
          _
      $region84: #{modulated_stack.1} parent=5 // pred_fallthru
        _
      %p3549 = scmp.le.s32.totalorder 2, %s29
      // Predicated region
      $region125: #{modulated_stack.1} parent=5 // pred_check
        %p3550 = pneg %p3549
      $region126: #{modulated_stack.1} parent=5 // pred_check_branch
        %3552 = sbr.rel (%p3550) target = $region128
      $region127: #{modulated_stack.1} parent=5 // pred_region
        %s3553 = ssub.s32 %s29, 2
        // Predicated region
        $region129: #{modulated_stack.1} parent=127 // pred_check
          %p3554 = pneg %p399
        $region130: #{modulated_stack.1} parent=127 // pred_check_branch
          %3556 = sbr.rel (%p3554) target = $region132
        $region131: #{modulated_stack.1} parent=127 // pred_region
          %p3557 = scmp.lt.s32.totalorder %s35, 1
          %s3558 = scalar_select %p3557, %s35, 1
          %s3559 = smul.addr %s3558, 16
          %s3560 = smul.addr %s3559, 8
          %s3561 = scalar_lea.vmem %s16, %s3560
        $region132: #{modulated_stack.1} parent=127 // pred_fallthru
          _
      $region128: #{modulated_stack.1} parent=5 // pred_fallthru
        _
    $region6: #{modulated_stack.1} parent=1 // loop_footer
      %s33 = sadd.s32 1, %s29
    $region7: #{modulated_stack.1} parent=1 // loop_footer_branch
      %28 = sbr.rel target = $region3
    $region8: #{modulated_stack.1} parent=1 // loop_exit
      _
    %3562 = vsyncpa [#allocation3], 1
    %s3563 = scalar_lea.sflag [#allocation3], 1
    %3564 = vsyncpa %s3563, 1
    %3565 = vsyncpa [#allocation5], 1
    %3566 = vsyncpa [#allocation8], 1
    %3567 = vsyncpa [#allocation11], 1
    %3568 = vsyncpa [#allocation14], 1

</llo_original>
